<compile_context>
chip_gen: v6e
topology: v6e:2x2x1
jax: 0.10.0
libtpu: 0.0.40
codegen_flags: <defaults>
</compile_context>

<pallas_src>
import math

import jax
import jax.numpy as jnp
from jax.experimental import pallas as pl
from jax.experimental.pallas import tpu as pltpu

# Logical (PyTorch) dims.
INPUT_DIM = 784   # 28 * 28
H_DIM = 400
Z_DIM = 20

# Lane-padded dims used by the kernel (multiples of 128 -> unmasked tiles).
IN_PAD = 896      # 7 * 128
H_PAD = 512       # 4 * 128
Z_PAD = 128       # packed encoder head: [mu(20) | log_var(20) | zeros(88)]


def _round_up(n, m):
    return ((n + m - 1) // m) * m


# ---------------------------------------------------------------------------
# Kernel
# ---------------------------------------------------------------------------
def vae_kernel(x_ref, eps_ref,
               w1_ref, b1_ref,
               w23_ref, b23_ref,
               w4_ref, b4_ref,
               w5_ref, b5_ref,
               xhat_ref, muvar_ref):
    x = x_ref[...]                                                       # (bm, IN_PAD) bf16

    # ---- encode: fc1 -> ReLU -> fused (fc2 | fc3) head -------------------
    h = jnp.dot(x, w1_ref[...], preferred_element_type=jnp.float32) + b1_ref[...]
    h = jnp.maximum(h, 0.0).astype(jnp.bfloat16)                         # (bm, H_PAD)

    # One lane-dense MXU pass for both mu and log_var:
    #   lanes [0, Z) = mu, lanes [Z, 2Z) = log_var, rest = 0 (zero-padded weights)
    muvar = (jnp.dot(h, w23_ref[...], preferred_element_type=jnp.float32)
             + b23_ref[...])                                             # (bm, Z_PAD) f32
    muvar_ref[...] = muvar                                               # lane-dense store

    # ---- reparameterization, lane-split form ------------------------------
    # eps was pre-shifted into lanes [Z, 2Z) by the wrapper, i.e. the same
    # lanes where log_var lives, so sigma*eps needs no cross-lane movement:
    #   lanes [0, Z)   : mu
    #   lanes [Z, 2Z)  : exp(0.5*log_var) * eps
    #   lanes >= 2Z    : 0
    # w4 has its rows duplicated into rows [Z, 2Z), making the decoder matmul
    # compute (mu + sigma*eps) @ w4 exactly.
    lane = jax.lax.broadcasted_iota(jnp.int32, muvar.shape, 1)
    sig_eps = jnp.exp(0.5 * muvar) * eps_ref[...].astype(jnp.float32)
    z_split = jnp.where(lane < Z_DIM, muvar, sig_eps).astype(jnp.bfloat16)   # (bm, Z_PAD)

    # ---- decode: fc4 -> ReLU -> fc5 -> sigmoid ----------------------------
    h2 = (jnp.dot(z_split, w4_ref[...], preferred_element_type=jnp.float32)
          + b4_ref[...])
    h2 = jnp.maximum(h2, 0.0).astype(jnp.bfloat16)                       # (bm, H_PAD)
    logits = (jnp.dot(h2, w5_ref[...], preferred_element_type=jnp.float32)
              + b5_ref[...])                                             # (bm, IN_PAD)
    xhat_ref[...] = jax.nn.sigmoid(logits).astype(jnp.bfloat16)          # bf16 store (HBM bytes)


# ---------------------------------------------------------------------------
# Parameter construction / packing
# ---------------------------------------------------------------------------
def _linear_params(key, in_dim, out_dim):
    """PyTorch-style uniform(-1/sqrt(fan_in), 1/sqrt(fan_in)) init, stored (in, out)."""
    kw, kb = jax.random.split(key)
    bound = 1.0 / math.sqrt(in_dim)
    w = jax.random.uniform(kw, (in_dim, out_dim), jnp.float32, -bound, bound)
    b = jax.random.uniform(kb, (out_dim,), jnp.float32, -bound, bound)
    return w, b


def init_vae_params(key):
    k1, k2, k3, k4, k5 = jax.random.split(key, 5)
    return {
        "fc1": _linear_params(k1, INPUT_DIM, H_DIM),
        "fc2": _linear_params(k2, H_DIM, Z_DIM),
        "fc3": _linear_params(k3, H_DIM, Z_DIM),
        "fc4": _linear_params(k4, Z_DIM, H_DIM),
        "fc5": _linear_params(k5, H_DIM, INPUT_DIM),
    }


def pack_vae_params(params):
    """Zero-pad / fuse / cast natural (in, out) f32 params into the kernel layout."""
    w1, b1 = params["fc1"]
    w2, b2 = params["fc2"]
    w3, b3 = params["fc3"]
    w4, b4 = params["fc4"]
    w5, b5 = params["fc5"]

    def pad_w(w, rows, cols):
        return jnp.zeros((rows, cols), jnp.float32).at[:w.shape[0], :w.shape[1]].set(w)

    def pad_b(b, cols):
        return jnp.zeros((1, cols), jnp.float32).at[0, :b.shape[0]].set(b)

    w1p = pad_w(w1, IN_PAD, H_PAD).astype(jnp.bfloat16)     # (896, 512)
    b1p = pad_b(b1, H_PAD)                                  # (1, 512) f32

    # Fused encoder head: columns [0,Z)=fc2 (mu), [Z,2Z)=fc3 (log_var), rest zero.
    w23 = jnp.zeros((H_PAD, Z_PAD), jnp.float32)
    w23 = w23.at[:H_DIM, :Z_DIM].set(w2).at[:H_DIM, Z_DIM:2 * Z_DIM].set(w3)
    w23 = w23.astype(jnp.bfloat16)                          # (512, 128)
    b23 = jnp.zeros((1, Z_PAD), jnp.float32)
    b23 = b23.at[0, :Z_DIM].set(b2).at[0, Z_DIM:2 * Z_DIM].set(b3)

    # Decoder weight, K padded to 128 lanes, with the 20 real rows DUPLICATED
    # into rows [Z, 2Z) so the lane-split z = (mu | sigma*eps | 0) contracts to
    # exactly (mu + sigma*eps) @ w4.
    w4d = jnp.zeros((Z_PAD, H_PAD), jnp.float32)
    w4d = w4d.at[:Z_DIM, :H_DIM].set(w4).at[Z_DIM:2 * Z_DIM, :H_DIM].set(w4)
    w4d = w4d.astype(jnp.bfloat16)                          # (128, 512)
    b4p = pad_b(b4, H_PAD)

    w5p = pad_w(w5, H_PAD, IN_PAD).astype(jnp.bfloat16)     # (512, 896)
    b5p = pad_b(b5, IN_PAD)

    return (w1p, b1p, w23, b23, w4d, b4p, w5p, b5p)


# ---------------------------------------------------------------------------
# Forward wrapper
# ---------------------------------------------------------------------------
def _choose_bm(batch, block_b):
    """Batch tile: <= block_b, >= 16 rows, and capped at half the padded batch
    so the 1-D grid has >= 2 steps whenever possible (v7x megacore)."""
    b16 = _round_up(max(batch, 1), 16)
    half = _round_up((b16 + 1) // 2, 16)
    return max(16, min(block_b, half))


def vae_forward(packed_params, x, eps, *, block_b=1024):
    """x: (B, 1, 28, 28) float; eps: (B, Z_DIM) standard-normal sample."""
    w1, b1, w23, b23, w4, b4, w5, b5 = packed_params

    B = x.shape[0]
    bm = _choose_bm(B, block_b)
    b_pad = _round_up(B, bm)
    grid = (b_pad // bm,)

    # Single-pass pad: cast x straight to bf16, features 784 -> IN_PAD,
    # batch -> b_pad.  eps is padded to a full 128-lane bf16 tile and
    # pre-shifted into lanes [Z, 2Z) (under log_var) for the lane-split reparam.
    x2d = x.reshape(B, INPUT_DIM).astype(jnp.bfloat16)
    x_pad = jnp.zeros((b_pad, IN_PAD), jnp.bfloat16).at[:B, :INPUT_DIM].set(x2d)
    eps_pad = (jnp.zeros((b_pad, Z_PAD), jnp.bfloat16)
               .at[:B, Z_DIM:2 * Z_DIM].set(eps.astype(jnp.bfloat16)))

    weight_bytes = sum(int(a.size) * a.dtype.itemsize
                       for a in (w1, b1, w23, b23, w4, b4, w5, b5))
    io_bytes = (int(x_pad.size) * 2 + int(eps_pad.size) * 2
                + b_pad * IN_PAD * 2 + b_pad * Z_PAD * 4)
    cost = pl.CostEstimate(
        flops=2 * b_pad * (IN_PAD * H_PAD + H_PAD * Z_PAD
                           + Z_PAD * H_PAD + H_PAD * IN_PAD),
        transcendentals=b_pad * (Z_PAD + IN_PAD),   # exp (reparam) + sigmoid
        bytes_accessed=weight_bytes + io_bytes,
    )

    xhat_pad, muvar = pl.pallas_call(
        vae_kernel,
        out_shape=(
            jax.ShapeDtypeStruct((b_pad, IN_PAD), jnp.bfloat16),
            jax.ShapeDtypeStruct((b_pad, Z_PAD), jnp.float32),
        ),
        grid_spec=pltpu.PrefetchScalarGridSpec(
            num_scalar_prefetch=0,
            grid=grid,
            in_specs=[
                pl.BlockSpec((bm, IN_PAD), lambda i: (i, 0)),      # x tile   (streamed)
                pl.BlockSpec((bm, Z_PAD), lambda i: (i, 0)),       # eps tile (streamed, lane-dense)
                pl.BlockSpec((IN_PAD, H_PAD), lambda i: (0, 0)),   # w1  (VMEM-resident)
                pl.BlockSpec((1, H_PAD), lambda i: (0, 0)),        # b1
                pl.BlockSpec((H_PAD, Z_PAD), lambda i: (0, 0)),    # w2||w3 fused
                pl.BlockSpec((1, Z_PAD), lambda i: (0, 0)),        # b2||b3 fused
                pl.BlockSpec((Z_PAD, H_PAD), lambda i: (0, 0)),    # w4 (rows duplicated)
                pl.BlockSpec((1, H_PAD), lambda i: (0, 0)),        # b4
                pl.BlockSpec((H_PAD, IN_PAD), lambda i: (0, 0)),   # w5
                pl.BlockSpec((1, IN_PAD), lambda i: (0, 0)),       # b5
            ],
            out_specs=[
                pl.BlockSpec((bm, IN_PAD), lambda i: (i, 0)),      # x_hat (bf16, lane-padded)
                pl.BlockSpec((bm, Z_PAD), lambda i: (i, 0)),       # [mu | log_var | 0]
            ],
        ),
        compiler_params=pltpu.CompilerParams(
            dimension_semantics=("parallel",),        # megacore batch-shard on v7x
            vmem_limit_bytes=32 * 1024 * 1024,        # ~13 MiB used at bm=1024
        ),
        cost_estimate=cost,
    )(x_pad, eps_pad, w1, b1, w23, b23, w4, b4, w5, b5)

    # Strip padding and restore the PyTorch output layout.  (If the downstream
    # loss can consume the padded (B, 896)/(B, 128) layouts directly, these
    # slices can be dropped to save one more HBM round-trip.)
    x_hat = xhat_pad[:B, :INPUT_DIM].reshape(B, 1, 28, 28)
    mu = muvar[:B, :Z_DIM]
    log_var = muvar[:B, Z_DIM:2 * Z_DIM]
    return x_hat, mu, log_var


# ---------------------------------------------------------------------------
# Pure-JAX reference (same bf16-quantized weights) for a correctness check
# ---------------------------------------------------------------------------
def vae_reference(params, x, eps):
    def q(w):  # match kernel's bf16 weight quantization
        return w.astype(jnp.bfloat16).astype(jnp.float32)

    w1, b1 = params["fc1"]; w2, b2 = params["fc2"]; w3, b3 = params["fc3"]
    w4, b4 = params["fc4"]; w5, b5 = params["fc5"]
    B = x.shape[0]
    xf = x.reshape(B, INPUT_DIM).astype(jnp.float32)
    h = jnp.maximum(xf @ q(w1) + b1, 0.0)
    mu = h @ q(w2) + b2
    log_var = h @ q(w3) + b3
    z = mu + jnp.exp(0.5 * log_var) * eps.astype(jnp.float32)
    h2 = jnp.maximum(z @ q(w4) + b4, 0.0)
    x_hat = jax.nn.sigmoid(h2 @ q(w5) + b5).reshape(B, 1, 28, 28)
    return x_hat, mu, log_var


if __name__ == "__main__":
    key = jax.random.PRNGKey(0)
    k_params, k_x, k_eps = jax.random.split(key, 3)

    params = init_vae_params(k_params)
    packed = pack_vae_params(params)

    batch = 2
    x = jax.random.uniform(k_x, (batch, 1, 28, 28), jnp.float32)   # fake MNIST batch
    # eps is the randn_like(sigma) draw of the reparameterization step,
    # generated deterministically outside the kernel.
    eps = jax.random.normal(k_eps, (batch, Z_DIM), jnp.float32)

    x_hat, mu, log_var = vae_forward(packed, x, eps)
    jax.block_until_ready((x_hat, mu, log_var))

    assert x_hat.shape == (batch, 1, 28, 28)
    assert mu.shape == (batch, Z_DIM)
    assert log_var.shape == (batch, Z_DIM)
    assert bool(jnp.all(jnp.isfinite(x_hat.astype(jnp.float32))))

    # Tolerance check against the pure-JAX reference (bf16 MXU path => ~1e-3).
    xr, mr, lr = vae_reference(params, x, eps)
    assert bool(jnp.allclose(mu, mr, atol=2e-2)), "mu mismatch"
    assert bool(jnp.allclose(log_var, lr, atol=2e-2)), "log_var mismatch"
    assert bool(jnp.allclose(x_hat.astype(jnp.float32), xr, atol=3e-2)), "x_hat mismatch"

    print("KERNEL_OK")
</pallas_src>

<mosaic_0001>
module attributes {stable_mosaic.version = 11 : i64} {
  func.func @vae_kernel(%arg0: i32, %arg1: memref<16x896xbf16, #tpu.memory_space<vmem>>, %arg2: memref<16x128xbf16, #tpu.memory_space<vmem>>, %arg3: memref<896x512xbf16, #tpu.memory_space<vmem>>, %arg4: memref<1x512xf32, #tpu.memory_space<vmem>>, %arg5: memref<512x128xbf16, #tpu.memory_space<vmem>>, %arg6: memref<1x128xf32, #tpu.memory_space<vmem>>, %arg7: memref<128x512xbf16, #tpu.memory_space<vmem>>, %arg8: memref<1x512xf32, #tpu.memory_space<vmem>>, %arg9: memref<512x896xbf16, #tpu.memory_space<vmem>>, %arg10: memref<1x896xf32, #tpu.memory_space<vmem>>, %arg11: memref<16x896xbf16, #tpu.memory_space<vmem>>, %arg12: memref<16x128xf32, #tpu.memory_space<vmem>>) attributes {dimension_semantics = [#tpu.dimension_semantics<parallel>], iteration_bounds = array<i64: 1>, scalar_prefetch = 0 : i64, scratch_operands = 0 : i64, tpu.core_type = #tpu.core_type<tc>, window_params = [{transform_indices = @transform_0, window_bounds = array<i64: 16, 896>}, {transform_indices = @transform_1, window_bounds = array<i64: 16, 128>}, {pipeline_mode = #tpu.pipeline_mode<synchronous>, transform_indices = @transform_2, window_bounds = array<i64: 896, 512>}, {pipeline_mode = #tpu.pipeline_mode<synchronous>, transform_indices = @transform_3, window_bounds = array<i64: 1, 512>}, {pipeline_mode = #tpu.pipeline_mode<synchronous>, transform_indices = @transform_4, window_bounds = array<i64: 512, 128>}, {pipeline_mode = #tpu.pipeline_mode<synchronous>, transform_indices = @transform_5, window_bounds = array<i64: 1, 128>}, {pipeline_mode = #tpu.pipeline_mode<synchronous>, transform_indices = @transform_6, window_bounds = array<i64: 128, 512>}, {pipeline_mode = #tpu.pipeline_mode<synchronous>, transform_indices = @transform_7, window_bounds = array<i64: 1, 512>}, {pipeline_mode = #tpu.pipeline_mode<synchronous>, transform_indices = @transform_8, window_bounds = array<i64: 512, 896>}, {pipeline_mode = #tpu.pipeline_mode<synchronous>, transform_indices = @transform_9, window_bounds = array<i64: 1, 896>}, {transform_indices = @transform_10, window_bounds = array<i64: 16, 896>}, {transform_indices = @transform_11, window_bounds = array<i64: 16, 128>}]} {
    %c0 = arith.constant 0 : index
    %c0_0 = arith.constant 0 : index
    %0 = vector.load %arg1[%c0, %c0_0] : memref<16x896xbf16, #tpu.memory_space<vmem>>, vector<16x896xbf16>
    %c0_1 = arith.constant 0 : index
    %c0_2 = arith.constant 0 : index
    %1 = vector.load %arg3[%c0_1, %c0_2] : memref<896x512xbf16, #tpu.memory_space<vmem>>, vector<896x512xbf16>
    %cst = arith.constant dense<0.000000e+00> : vector<16x512xf32>
    %2 = tpu.matmul %0, %1, %cst {dimension_numbers = #tpu.dot_dimension_numbers<[1], [0], [0], [1], [0, 0, 1, 1], [], []>} : vector<16x896xbf16>, vector<896x512xbf16>, vector<16x512xf32> -> vector<16x512xf32>
    %c0_3 = arith.constant 0 : index
    %c0_4 = arith.constant 0 : index
    %3 = vector.load %arg4[%c0_3, %c0_4] : memref<1x512xf32, #tpu.memory_space<vmem>>, vector<1x512xf32>
    %4 = vector.broadcast %3 : vector<1x512xf32> to vector<16x512xf32>
    %5 = arith.addf %2, %4 : vector<16x512xf32>
    %cst_5 = arith.constant 0.000000e+00 : f32
    %6 = vector.broadcast %cst_5 : f32 to vector<16x512xf32>
    %7 = arith.maximumf %5, %6 : vector<16x512xf32>
    %8 = arith.truncf %7 : vector<16x512xf32> to vector<16x512xbf16>
    %c0_6 = arith.constant 0 : index
    %c0_7 = arith.constant 0 : index
    %9 = vector.load %arg5[%c0_6, %c0_7] : memref<512x128xbf16, #tpu.memory_space<vmem>>, vector<512x128xbf16>
    %cst_8 = arith.constant dense<0.000000e+00> : vector<16x128xf32>
    %10 = tpu.matmul %8, %9, %cst_8 {dimension_numbers = #tpu.dot_dimension_numbers<[1], [0], [0], [1], [0, 0, 1, 1], [], []>} : vector<16x512xbf16>, vector<512x128xbf16>, vector<16x128xf32> -> vector<16x128xf32>
    %c0_9 = arith.constant 0 : index
    %c0_10 = arith.constant 0 : index
    %11 = vector.load %arg6[%c0_9, %c0_10] : memref<1x128xf32, #tpu.memory_space<vmem>>, vector<1x128xf32>
    %12 = vector.broadcast %11 : vector<1x128xf32> to vector<16x128xf32>
    %13 = arith.addf %10, %12 : vector<16x128xf32>
    %c0_11 = arith.constant 0 : index
    %c0_12 = arith.constant 0 : index
    %14 = vector.load %arg12[%c0_11, %c0_12] : memref<16x128xf32, #tpu.memory_space<vmem>>, vector<16x128xf32>
    tpu.vector_store %arg12[%c0_11, %c0_12], %13 {strides = array<i32>} : memref<16x128xf32, #tpu.memory_space<vmem>>, vector<16x128xf32>,
    %15 = tpu.iota {dimensions = array<i32: 1>} : vector<16x128xi32>
    %cst_13 = arith.constant 5.000000e-01 : f32
    %16 = vector.broadcast %cst_13 : f32 to vector<16x128xf32>
    %17 = arith.mulf %16, %13 : vector<16x128xf32>
    %18 = math.exp %17 : vector<16x128xf32>
    %c0_14 = arith.constant 0 : index
    %c0_15 = arith.constant 0 : index
    %19 = vector.load %arg2[%c0_14, %c0_15] : memref<16x128xbf16, #tpu.memory_space<vmem>>, vector<16x128xbf16>
    %20 = arith.extf %19 : vector<16x128xbf16> to vector<16x128xf32>
    %21 = arith.mulf %18, %20 : vector<16x128xf32>
    %c20_i32 = arith.constant 20 : i32
    %22 = vector.broadcast %c20_i32 : i32 to vector<16x128xi32>
    %23 = arith.cmpi slt, %15, %22 : vector<16x128xi32>
    %24 = arith.select %23, %13, %21 : vector<16x128xi1>, vector<16x128xf32>
    %25 = arith.truncf %24 : vector<16x128xf32> to vector<16x128xbf16>
    %c0_16 = arith.constant 0 : index
    %c0_17 = arith.constant 0 : index
    %26 = vector.load %arg7[%c0_16, %c0_17] : memref<128x512xbf16, #tpu.memory_space<vmem>>, vector<128x512xbf16>
    %cst_18 = arith.constant dense<0.000000e+00> : vector<16x512xf32>
    %27 = tpu.matmul %25, %26, %cst_18 {dimension_numbers = #tpu.dot_dimension_numbers<[1], [0], [0], [1], [0, 0, 1, 1], [], []>} : vector<16x128xbf16>, vector<128x512xbf16>, vector<16x512xf32> -> vector<16x512xf32>
    %c0_19 = arith.constant 0 : index
    %c0_20 = arith.constant 0 : index
    %28 = vector.load %arg8[%c0_19, %c0_20] : memref<1x512xf32, #tpu.memory_space<vmem>>, vector<1x512xf32>
    %29 = vector.broadcast %28 : vector<1x512xf32> to vector<16x512xf32>
    %30 = arith.addf %27, %29 : vector<16x512xf32>
    %cst_21 = arith.constant 0.000000e+00 : f32
    %31 = vector.broadcast %cst_21 : f32 to vector<16x512xf32>
    %32 = arith.maximumf %30, %31 : vector<16x512xf32>
    %33 = arith.truncf %32 : vector<16x512xf32> to vector<16x512xbf16>
    %c0_22 = arith.constant 0 : index
    %c0_23 = arith.constant 0 : index
    %34 = vector.load %arg9[%c0_22, %c0_23] : memref<512x896xbf16, #tpu.memory_space<vmem>>, vector<512x896xbf16>
    %cst_24 = arith.constant dense<0.000000e+00> : vector<16x896xf32>
    %35 = tpu.matmul %33, %34, %cst_24 {dimension_numbers = #tpu.dot_dimension_numbers<[1], [0], [0], [1], [0, 0, 1, 1], [], []>} : vector<16x512xbf16>, vector<512x896xbf16>, vector<16x896xf32> -> vector<16x896xf32>
    %c0_25 = arith.constant 0 : index
    %c0_26 = arith.constant 0 : index
    %36 = vector.load %arg10[%c0_25, %c0_26] : memref<1x896xf32, #tpu.memory_space<vmem>>, vector<1x896xf32>
    %37 = vector.broadcast %36 : vector<1x896xf32> to vector<16x896xf32>
    %38 = arith.addf %35, %37 : vector<16x896xf32>
    %39 = arith.negf %38 : vector<16x896xf32>
    %40 = math.exp %39 : vector<16x896xf32>
    %cst_27 = arith.constant 1.000000e+00 : f32
    %41 = vector.broadcast %cst_27 : f32 to vector<16x896xf32>
    %42 = arith.addf %41, %40 : vector<16x896xf32>
    %43 = arith.divf %41, %42 : vector<16x896xf32>
    %44 = arith.truncf %43 : vector<16x896xf32> to vector<16x896xbf16>
    %c0_28 = arith.constant 0 : index
    %c0_29 = arith.constant 0 : index
    %45 = vector.load %arg11[%c0_28, %c0_29] : memref<16x896xbf16, #tpu.memory_space<vmem>>, vector<16x896xbf16>
    tpu.vector_store %arg11[%c0_28, %c0_29], %44 {strides = array<i32>} : memref<16x896xbf16, #tpu.memory_space<vmem>>, vector<16x896xbf16>,
    return
  }
  func.func @transform_0(%arg0: i32) -> (i32, i32) {
    %c0_i32 = arith.constant 0 : i32
    %c0_i32_0 = arith.constant 0 : i32
    return %arg0, %c0_i32 : i32, i32
  }
  func.func @transform_1(%arg0: i32) -> (i32, i32) {
    %c0_i32 = arith.constant 0 : i32
    %c0_i32_0 = arith.constant 0 : i32
    return %arg0, %c0_i32 : i32, i32
  }
  func.func @transform_2(%arg0: i32) -> (i32, i32) {
    %c0_i32 = arith.constant 0 : i32
    %c0_i32_0 = arith.constant 0 : i32
    %c0_i32_1 = arith.constant 0 : i32
    return %c0_i32, %c0_i32_0 : i32, i32
  }
  func.func @transform_3(%arg0: i32) -> (i32, i32) {
    %c0_i32 = arith.constant 0 : i32
    %c0_i32_0 = arith.constant 0 : i32
    %c0_i32_1 = arith.constant 0 : i32
    return %c0_i32, %c0_i32_0 : i32, i32
  }
  func.func @transform_4(%arg0: i32) -> (i32, i32) {
    %c0_i32 = arith.constant 0 : i32
    %c0_i32_0 = arith.constant 0 : i32
    %c0_i32_1 = arith.constant 0 : i32
    return %c0_i32, %c0_i32_0 : i32, i32
  }
  func.func @transform_5(%arg0: i32) -> (i32, i32) {
    %c0_i32 = arith.constant 0 : i32
    %c0_i32_0 = arith.constant 0 : i32
    %c0_i32_1 = arith.constant 0 : i32
    return %c0_i32, %c0_i32_0 : i32, i32
  }
  func.func @transform_6(%arg0: i32) -> (i32, i32) {
    %c0_i32 = arith.constant 0 : i32
    %c0_i32_0 = arith.constant 0 : i32
    %c0_i32_1 = arith.constant 0 : i32
    return %c0_i32, %c0_i32_0 : i32, i32
  }
  func.func @transform_7(%arg0: i32) -> (i32, i32) {
    %c0_i32 = arith.constant 0 : i32
    %c0_i32_0 = arith.constant 0 : i32
    %c0_i32_1 = arith.constant 0 : i32
    return %c0_i32, %c0_i32_0 : i32, i32
  }
  func.func @transform_8(%arg0: i32) -> (i32, i32) {
    %c0_i32 = arith.constant 0 : i32
    %c0_i32_0 = arith.constant 0 : i32
    %c0_i32_1 = arith.constant 0 : i32
    return %c0_i32, %c0_i32_0 : i32, i32
  }
  func.func @transform_9(%arg0: i32) -> (i32, i32) {
    %c0_i32 = arith.constant 0 : i32
    %c0_i32_0 = arith.constant 0 : i32
    %c0_i32_1 = arith.constant 0 : i32
    return %c0_i32, %c0_i32_0 : i32, i32
  }
  func.func @transform_10(%arg0: i32) -> (i32, i32) {
    %c0_i32 = arith.constant 0 : i32
    %c0_i32_0 = arith.constant 0 : i32
    return %arg0, %c0_i32 : i32, i32
  }
  func.func @transform_11(%arg0: i32) -> (i32, i32) {
    %c0_i32 = arith.constant 0 : i32
    %c0_i32_0 = arith.constant 0 : i32
    return %arg0, %c0_i32 : i32, i32
  }
}

</mosaic_0001>

<llo_original>
// kernel: tpu_custom_call.1
$region0: #{tpu_custom_call.1}
  #allocation0 [shape = 'u32[]', space=smem, size = 0x4, offset = 0x4, fixed_abs, tag = 'smem constant byte address 0x4 - core index']
  #allocation1 [shape = 'u32[144,128]{1,0:T(1,128)}', space=vmem, size = 0x12000, scoped, tag = 'internal scratch']
  %s0 = inlined_call_operand.hbm [shape: bf16[16,896], index: 0, kind: input, shape index: {}]
  %s1 = inlined_call_operand.hbm [shape: bf16[16,128], index: 1, kind: input, shape index: {}]
  %s2 = inlined_call_operand.hbm [shape: bf16[896,512], index: 2, kind: input, shape index: {}]
  %s3 = inlined_call_operand.vmem [shape: f32[1,512], index: 3, kind: input, shape index: {}]
  %s4 = inlined_call_operand.hbm [shape: bf16[512,128], index: 4, kind: input, shape index: {}]
  %s5 = inlined_call_operand.vmem [shape: f32[1,128], index: 5, kind: input, shape index: {}]
  %s6 = inlined_call_operand.hbm [shape: bf16[128,512], index: 6, kind: input, shape index: {}]
  %s7 = inlined_call_operand.hbm [shape: f32[1,512], index: 7, kind: input, shape index: {}]
  %s8 = inlined_call_operand.hbm [shape: bf16[512,896], index: 8, kind: input, shape index: {}]
  %s9 = inlined_call_operand.vmem [shape: f32[1,896], index: 9, kind: input, shape index: {}]
  %s10 = inlined_call_operand.hbm [shape: bf16[16,896], index: 10, kind: output, shape index: {0}]
  %s11 = inlined_call_operand.hbm [shape: f32[16,128], index: 11, kind: output, shape index: {1}]
  %12 = xla_tuple %s10, %s11
  %s13 = sld [smem:[#allocation0]]
  $region86: #{tpu_custom_call.1} parent=0
    _
  %s15 = ssub.s32 1, %s13
  %s16 = scalar_select 0, %s15, %s13
  $region1: #{tpu_custom_call.1} parent=0
    #allocation2 [shape = 'u8[28672]{0}', space=vmem, size = 0x7000, scoped, tag = 'input window, operand 0, single buffered']
    #allocation3 [shape = 's32[1]{0}', space=sflag, size = 0x4, scoped, tag = 'scoped memory for tpu_custom_call.1']
    #allocation4 [shape = 's32[1]{0}', space=sflag, size = 0x4, scoped, tag = 'scoped memory for tpu_custom_call.1']
    #allocation5 [shape = 'u8[4096]{0}', space=vmem, size = 0x1000, scoped, tag = 'input window, operand 1, single buffered']
    #allocation6 [shape = 's32[1]{0}', space=sflag, size = 0x4, scoped, tag = 'scoped memory for tpu_custom_call.1']
    #allocation7 [shape = 'u8[917504]{0}', space=vmem, size = 0xe0000, scoped, tag = 'input window, operand 2, single buffered']
    #allocation8 [shape = 'u8[131072]{0}', space=vmem, size = 0x20000, scoped, tag = 'input window, operand 4, single buffered']
    #allocation9 [shape = 's32[1]{0}', space=sflag, size = 0x4, scoped, tag = 'scoped memory for tpu_custom_call.1']
    #allocation10 [shape = 'u8[131072]{0}', space=vmem, size = 0x20000, scoped, tag = 'input window, operand 6, single buffered']
    #allocation11 [shape = 'u8[2048]{0}', space=vmem, size = 0x800, scoped, tag = 'input window, operand 7, single buffered']
    #allocation12 [shape = 's32[1]{0}', space=sflag, size = 0x4, scoped, tag = 'scoped memory for tpu_custom_call.1']
    #allocation13 [shape = 'u8[917504]{0}', space=vmem, size = 0xe0000, scoped, tag = 'input window, operand 8, single buffered']
    #allocation14 [shape = 'u8[28672]{0}', space=vmem, size = 0x7000, scoped, tag = 'output window, operand 0, single buffered']
    #allocation15 [shape = 'u8[8192]{0}', space=vmem, size = 0x2000, scoped, tag = 'output window, operand 1, single buffered']
    #allocation16 [shape = 's32[1]{0}', space=sflag, size = 0x4, scoped, tag = 'scoped memory for tpu_custom_call.1']
    %17 = vsyncpa [#allocation3], 0
    %18 = vsyncpa [#allocation6], 0
    %19 = vsyncpa [#allocation9], 0
    %20 = vsyncpa [#allocation12], 0
    %21 = vsyncpa [#allocation4], 0
    %22 = vsyncpa [#allocation16], 0
    // Predicated region
    $region2: #{tpu_custom_call.1} parent=1 // pred_check
      _
    $region3: #{tpu_custom_call.1} parent=1 // pred_check_branch
      %24 = sbr.rel (0) target = $region5
    $region4: #{tpu_custom_call.1} parent=1 // pred_region
      %s26 = ssub.s32 896, 896
      %27 = vsyncadd [#allocation3], %s26
      %s28 = sshll.u32 [#allocation2], 4
      %s29 = int_to_ptr.vmem [resolvable:$true] %s28
      %34 = dma.hbm_to_vmem [thread:$0]  %s0, 896, %s29, [#allocation3], 448, 448, 28
    $region5: #{tpu_custom_call.1} parent=1 // pred_fallthru
      _
    // Predicated region
    $region6: #{tpu_custom_call.1} parent=1 // pred_check
      _
    $region7: #{tpu_custom_call.1} parent=1 // pred_check_branch
      %36 = sbr.rel (0) target = $region9
    $region8: #{tpu_custom_call.1} parent=1 // pred_region
      %s38 = ssub.s32 128, 128
      %39 = vsyncadd [#allocation6], %s38
      %s40 = sshll.u32 [#allocation5], 4
      %s41 = int_to_ptr.vmem [resolvable:$true] %s40
      %46 = dma.hbm_to_vmem [thread:$0]  %s1, 128, %s41, [#allocation6], 64, 64, 4
    $region9: #{tpu_custom_call.1} parent=1 // pred_fallthru
      _
    // Predicated region
    $region10: #{tpu_custom_call.1} parent=1 // pred_check
      _
    $region11: #{tpu_custom_call.1} parent=1 // pred_check_branch
      %48 = sbr.rel (0) target = $region13
    $region12: #{tpu_custom_call.1} parent=1 // pred_region
      %s50 = ssub.s32 28672, 28672
      %51 = vsyncadd [#allocation6], %s50
      %s52 = sshll.u32 [#allocation7], 4
      %s53 = int_to_ptr.vmem [resolvable:$true] %s52
      %58 = dma.hbm_to_vmem [thread:$0]  %s2, 28672, %s53, [#allocation6], 256, 256, 16
    $region13: #{tpu_custom_call.1} parent=1 // pred_fallthru
      _
    // Predicated region
    $region14: #{tpu_custom_call.1} parent=1 // pred_check
      _
    $region15: #{tpu_custom_call.1} parent=1 // pred_check_branch
      %60 = sbr.rel (0) target = $region17
    $region16: #{tpu_custom_call.1} parent=1 // pred_region
      _
    $region17: #{tpu_custom_call.1} parent=1 // pred_fallthru
      _
    // Predicated region
    $region18: #{tpu_custom_call.1} parent=1 // pred_check
      _
    $region19: #{tpu_custom_call.1} parent=1 // pred_check_branch
      %62 = sbr.rel (0) target = $region21
    $region20: #{tpu_custom_call.1} parent=1 // pred_region
      %s64 = ssub.s32 4096, 4096
      %65 = vsyncadd [#allocation9], %s64
      %s66 = sshll.u32 [#allocation8], 4
      %s67 = int_to_ptr.vmem [resolvable:$true] %s66
      %72 = dma.hbm_to_vmem [thread:$0]  %s4, 4096, %s67, [#allocation9], 64, 64, 4
    $region21: #{tpu_custom_call.1} parent=1 // pred_fallthru
      _
    // Predicated region
    $region22: #{tpu_custom_call.1} parent=1 // pred_check
      _
    $region23: #{tpu_custom_call.1} parent=1 // pred_check_branch
      %74 = sbr.rel (0) target = $region25
    $region24: #{tpu_custom_call.1} parent=1 // pred_region
      _
    $region25: #{tpu_custom_call.1} parent=1 // pred_fallthru
      _
    // Predicated region
    $region26: #{tpu_custom_call.1} parent=1 // pred_check
      _
    $region27: #{tpu_custom_call.1} parent=1 // pred_check_branch
      %76 = sbr.rel (0) target = $region29
    $region28: #{tpu_custom_call.1} parent=1 // pred_region
      %s78 = ssub.s32 4096, 4096
      %79 = vsyncadd [#allocation9], %s78
      %s80 = sshll.u32 [#allocation10], 4
      %s81 = int_to_ptr.vmem [resolvable:$true] %s80
      %86 = dma.hbm_to_vmem [thread:$0]  %s6, 4096, %s81, [#allocation9], 256, 256, 16
    $region29: #{tpu_custom_call.1} parent=1 // pred_fallthru
      _
    // Predicated region
    $region30: #{tpu_custom_call.1} parent=1 // pred_check
      _
    $region31: #{tpu_custom_call.1} parent=1 // pred_check_branch
      %88 = sbr.rel (0) target = $region33
    $region32: #{tpu_custom_call.1} parent=1 // pred_region
      %s90 = ssub.s32 64, 64
      %91 = vsyncadd [#allocation12], %s90
      %s93 = sshll.u32 [#allocation11], 4
      %s94 = int_to_ptr.vmem [resolvable:$true] %s93
      %96 = dma.hbm_to_vmem [thread:$0]  %s7, 64, %s94, [#allocation12]
    $region33: #{tpu_custom_call.1} parent=1 // pred_fallthru
      _
    // Predicated region
    $region34: #{tpu_custom_call.1} parent=1 // pred_check
      _
    $region35: #{tpu_custom_call.1} parent=1 // pred_check_branch
      %98 = sbr.rel (0) target = $region37
    $region36: #{tpu_custom_call.1} parent=1 // pred_region
      %s100 = ssub.s32 28672, 28672
      %101 = vsyncadd [#allocation12], %s100
      %s102 = sshll.u32 [#allocation13], 4
      %s103 = int_to_ptr.vmem [resolvable:$true] %s102
      %108 = dma.hbm_to_vmem [thread:$0]  %s8, 28672, %s103, [#allocation12], 448, 448, 28
    $region37: #{tpu_custom_call.1} parent=1 // pred_fallthru
      _
    // Predicated region
    $region38: #{tpu_custom_call.1} parent=1 // pred_check
      _
    $region39: #{tpu_custom_call.1} parent=1 // pred_check_branch
      %110 = sbr.rel (0) target = $region41
    $region40: #{tpu_custom_call.1} parent=1 // pred_region
      _
    $region41: #{tpu_custom_call.1} parent=1 // pred_fallthru
      _
    // Predicated region
    $region42: #{tpu_custom_call.1} parent=1 // pred_check
      _
    $region43: #{tpu_custom_call.1} parent=1 // pred_check_branch
      %112 = sbr.rel (0) target = $region45
    $region44: #{tpu_custom_call.1} parent=1 // pred_region
      %113 = dma.done [#allocation3], 896
    $region45: #{tpu_custom_call.1} parent=1 // pred_fallthru
      _
    // Predicated region
    $region46: #{tpu_custom_call.1} parent=1 // pred_check
      _
    $region47: #{tpu_custom_call.1} parent=1 // pred_check_branch
      %115 = sbr.rel (0) target = $region49
    $region48: #{tpu_custom_call.1} parent=1 // pred_region
      %116 = dma.done [#allocation6], 128
    $region49: #{tpu_custom_call.1} parent=1 // pred_fallthru
      _
    // Predicated region
    $region50: #{tpu_custom_call.1} parent=1 // pred_check
      _
    $region51: #{tpu_custom_call.1} parent=1 // pred_check_branch
      %118 = sbr.rel (0) target = $region53
    $region52: #{tpu_custom_call.1} parent=1 // pred_region
      %119 = dma.done [#allocation6], 28672
    $region53: #{tpu_custom_call.1} parent=1 // pred_fallthru
      _
    // Predicated region
    $region54: #{tpu_custom_call.1} parent=1 // pred_check
      _
    $region55: #{tpu_custom_call.1} parent=1 // pred_check_branch
      %121 = sbr.rel (0) target = $region57
    $region56: #{tpu_custom_call.1} parent=1 // pred_region
      %122 = dma.done [#allocation9], 4096
    $region57: #{tpu_custom_call.1} parent=1 // pred_fallthru
      _
    // Predicated region
    $region58: #{tpu_custom_call.1} parent=1 // pred_check
      _
    $region59: #{tpu_custom_call.1} parent=1 // pred_check_branch
      %124 = sbr.rel (0) target = $region61
    $region60: #{tpu_custom_call.1} parent=1 // pred_region
      %125 = dma.done [#allocation9], 4096
    $region61: #{tpu_custom_call.1} parent=1 // pred_fallthru
      _
    // Predicated region
    $region62: #{tpu_custom_call.1} parent=1 // pred_check
      _
    $region63: #{tpu_custom_call.1} parent=1 // pred_check_branch
      %127 = sbr.rel (0) target = $region65
    $region64: #{tpu_custom_call.1} parent=1 // pred_region
      %128 = dma.done [#allocation12], 64
    $region65: #{tpu_custom_call.1} parent=1 // pred_fallthru
      _
    // Predicated region
    $region66: #{tpu_custom_call.1} parent=1 // pred_check
      _
    $region67: #{tpu_custom_call.1} parent=1 // pred_check_branch
      %130 = sbr.rel (0) target = $region69
    $region68: #{tpu_custom_call.1} parent=1 // pred_region
      %131 = dma.done [#allocation12], 28672
    $region69: #{tpu_custom_call.1} parent=1 // pred_fallthru
      _
    %v133 = vld [vmem:[#allocation2] sm:$0xff]
    %v134 = vld [vmem:[#allocation2 + $0x8] sm:$0xff]
    %v135 = vld [vmem:[#allocation2 + $0x10] sm:$0xff]
    %v136 = vld [vmem:[#allocation2 + $0x18] sm:$0xf]
    %v137 = vld [vmem:[#allocation2 + $0x1c] sm:$0xff]
    %v138 = vld [vmem:[#allocation2 + $0x24] sm:$0xff]
    %v139 = vld [vmem:[#allocation2 + $0x2c] sm:$0xff]
    %v140 = vld [vmem:[#allocation2 + $0x34] sm:$0xf]
    %v141 = vld [vmem:[#allocation7] sm:$0xff]
    %v142 = vld [vmem:[#allocation7 + $0x8] sm:$0xff]
    %v143 = vld [vmem:[#allocation7 + $0x10] sm:$0xff]
    %v144 = vld [vmem:[#allocation7 + $0x18] sm:$0xff]
    %v145 = vld [vmem:[#allocation7 + $0x20] sm:$0xff]
    %v146 = vld [vmem:[#allocation7 + $0x28] sm:$0xff]
    %v147 = vld [vmem:[#allocation7 + $0x30] sm:$0xff]
    %v148 = vld [vmem:[#allocation7 + $0x38] sm:$0xff]
    %v149 = vld [vmem:[#allocation7 + $0x40] sm:$0xff]
    %v150 = vld [vmem:[#allocation7 + $0x48] sm:$0xff]
    %v151 = vld [vmem:[#allocation7 + $0x50] sm:$0xff]
    %v152 = vld [vmem:[#allocation7 + $0x58] sm:$0xff]
    %v153 = vld [vmem:[#allocation7 + $0x60] sm:$0xff]
    %v154 = vld [vmem:[#allocation7 + $0x68] sm:$0xff]
    %v155 = vld [vmem:[#allocation7 + $0x70] sm:$0xff]
    %v156 = vld [vmem:[#allocation7 + $0x78] sm:$0xff]
    %v157 = vld [vmem:[#allocation7 + $0x80] sm:$0xff]
    %v158 = vld [vmem:[#allocation7 + $0x88] sm:$0xff]
    %v159 = vld [vmem:[#allocation7 + $0x90] sm:$0xff]
    %v160 = vld [vmem:[#allocation7 + $0x98] sm:$0xff]
    %v161 = vld [vmem:[#allocation7 + $0xa0] sm:$0xff]
    %v162 = vld [vmem:[#allocation7 + $0xa8] sm:$0xff]
    %v163 = vld [vmem:[#allocation7 + $0xb0] sm:$0xff]
    %v164 = vld [vmem:[#allocation7 + $0xb8] sm:$0xff]
    %v165 = vld [vmem:[#allocation7 + $0xc0] sm:$0xff]
    %v166 = vld [vmem:[#allocation7 + $0xc8] sm:$0xff]
    %v167 = vld [vmem:[#allocation7 + $0xd0] sm:$0xff]
    %v168 = vld [vmem:[#allocation7 + $0xd8] sm:$0xff]
    %v169 = vld [vmem:[#allocation7 + $0xe0] sm:$0xff]
    %v170 = vld [vmem:[#allocation7 + $0xe8] sm:$0xff]
    %v171 = vld [vmem:[#allocation7 + $0xf0] sm:$0xff]
    %v172 = vld [vmem:[#allocation7 + $0xf8] sm:$0xff]
    %v173 = vld [vmem:[#allocation7 + $0x100] sm:$0xff]
    %v174 = vld [vmem:[#allocation7 + $0x108] sm:$0xff]
    %v175 = vld [vmem:[#allocation7 + $0x110] sm:$0xff]
    %v176 = vld [vmem:[#allocation7 + $0x118] sm:$0xff]
    %v177 = vld [vmem:[#allocation7 + $0x120] sm:$0xff]
    %v178 = vld [vmem:[#allocation7 + $0x128] sm:$0xff]
    %v179 = vld [vmem:[#allocation7 + $0x130] sm:$0xff]
    %v180 = vld [vmem:[#allocation7 + $0x138] sm:$0xff]
    %v181 = vld [vmem:[#allocation7 + $0x140] sm:$0xff]
    %v182 = vld [vmem:[#allocation7 + $0x148] sm:$0xff]
    %v183 = vld [vmem:[#allocation7 + $0x150] sm:$0xff]
    %v184 = vld [vmem:[#allocation7 + $0x158] sm:$0xff]
    %v185 = vld [vmem:[#allocation7 + $0x160] sm:$0xff]
    %v186 = vld [vmem:[#allocation7 + $0x168] sm:$0xff]
    %v187 = vld [vmem:[#allocation7 + $0x170] sm:$0xff]
    %v188 = vld [vmem:[#allocation7 + $0x178] sm:$0xff]
    %v189 = vld [vmem:[#allocation7 + $0x180] sm:$0xff]
    %v190 = vld [vmem:[#allocation7 + $0x188] sm:$0xff]
    %v191 = vld [vmem:[#allocation7 + $0x190] sm:$0xff]
    %v192 = vld [vmem:[#allocation7 + $0x198] sm:$0xff]
    %v193 = vld [vmem:[#allocation7 + $0x1a0] sm:$0xff]
    %v194 = vld [vmem:[#allocation7 + $0x1a8] sm:$0xff]
    %v195 = vld [vmem:[#allocation7 + $0x1b0] sm:$0xff]
    %v196 = vld [vmem:[#allocation7 + $0x1b8] sm:$0xff]
    %v197 = vld [vmem:[#allocation7 + $0x1c0] sm:$0xff]
    %v198 = vld [vmem:[#allocation7 + $0x1c8] sm:$0xff]
    %v199 = vld [vmem:[#allocation7 + $0x1d0] sm:$0xff]
    %v200 = vld [vmem:[#allocation7 + $0x1d8] sm:$0xff]
    %v201 = vld [vmem:[#allocation7 + $0x1e0] sm:$0xff]
    %v202 = vld [vmem:[#allocation7 + $0x1e8] sm:$0xff]
    %v203 = vld [vmem:[#allocation7 + $0x1f0] sm:$0xff]
    %v204 = vld [vmem:[#allocation7 + $0x1f8] sm:$0xff]
    %v205 = vld [vmem:[#allocation7 + $0x200] sm:$0xff]
    %v206 = vld [vmem:[#allocation7 + $0x208] sm:$0xff]
    %v207 = vld [vmem:[#allocation7 + $0x210] sm:$0xff]
    %v208 = vld [vmem:[#allocation7 + $0x218] sm:$0xff]
    %v209 = vld [vmem:[#allocation7 + $0x220] sm:$0xff]
    %v210 = vld [vmem:[#allocation7 + $0x228] sm:$0xff]
    %v211 = vld [vmem:[#allocation7 + $0x230] sm:$0xff]
    %v212 = vld [vmem:[#allocation7 + $0x238] sm:$0xff]
    %v213 = vld [vmem:[#allocation7 + $0x240] sm:$0xff]
    %v214 = vld [vmem:[#allocation7 + $0x248] sm:$0xff]
    %v215 = vld [vmem:[#allocation7 + $0x250] sm:$0xff]
    %v216 = vld [vmem:[#allocation7 + $0x258] sm:$0xff]
    %v217 = vld [vmem:[#allocation7 + $0x260] sm:$0xff]
    %v218 = vld [vmem:[#allocation7 + $0x268] sm:$0xff]
    %v219 = vld [vmem:[#allocation7 + $0x270] sm:$0xff]
    %v220 = vld [vmem:[#allocation7 + $0x278] sm:$0xff]
    %v221 = vld [vmem:[#allocation7 + $0x280] sm:$0xff]
    %v222 = vld [vmem:[#allocation7 + $0x288] sm:$0xff]
    %v223 = vld [vmem:[#allocation7 + $0x290] sm:$0xff]
    %v224 = vld [vmem:[#allocation7 + $0x298] sm:$0xff]
    %v225 = vld [vmem:[#allocation7 + $0x2a0] sm:$0xff]
    %v226 = vld [vmem:[#allocation7 + $0x2a8] sm:$0xff]
    %v227 = vld [vmem:[#allocation7 + $0x2b0] sm:$0xff]
    %v228 = vld [vmem:[#allocation7 + $0x2b8] sm:$0xff]
    %v229 = vld [vmem:[#allocation7 + $0x2c0] sm:$0xff]
    %v230 = vld [vmem:[#allocation7 + $0x2c8] sm:$0xff]
    %v231 = vld [vmem:[#allocation7 + $0x2d0] sm:$0xff]
    %v232 = vld [vmem:[#allocation7 + $0x2d8] sm:$0xff]
    %v233 = vld [vmem:[#allocation7 + $0x2e0] sm:$0xff]
    %v234 = vld [vmem:[#allocation7 + $0x2e8] sm:$0xff]
    %v235 = vld [vmem:[#allocation7 + $0x2f0] sm:$0xff]
    %v236 = vld [vmem:[#allocation7 + $0x2f8] sm:$0xff]
    %v237 = vld [vmem:[#allocation7 + $0x300] sm:$0xff]
    %v238 = vld [vmem:[#allocation7 + $0x308] sm:$0xff]
    %v239 = vld [vmem:[#allocation7 + $0x310] sm:$0xff]
    %v240 = vld [vmem:[#allocation7 + $0x318] sm:$0xff]
    %v241 = vld [vmem:[#allocation7 + $0x320] sm:$0xff]
    %v242 = vld [vmem:[#allocation7 + $0x328] sm:$0xff]
    %v243 = vld [vmem:[#allocation7 + $0x330] sm:$0xff]
    %v244 = vld [vmem:[#allocation7 + $0x338] sm:$0xff]
    %v245 = vld [vmem:[#allocation7 + $0x340] sm:$0xff]
    %v246 = vld [vmem:[#allocation7 + $0x348] sm:$0xff]
    %v247 = vld [vmem:[#allocation7 + $0x350] sm:$0xff]
    %v248 = vld [vmem:[#allocation7 + $0x358] sm:$0xff]
    %v249 = vld [vmem:[#allocation7 + $0x360] sm:$0xff]
    %v250 = vld [vmem:[#allocation7 + $0x368] sm:$0xff]
    %v251 = vld [vmem:[#allocation7 + $0x370] sm:$0xff]
    %v252 = vld [vmem:[#allocation7 + $0x378] sm:$0xff]
    %v253 = vld [vmem:[#allocation7 + $0x380] sm:$0xff]
    %v254 = vld [vmem:[#allocation7 + $0x388] sm:$0xff]
    %v255 = vld [vmem:[#allocation7 + $0x390] sm:$0xff]
    %v256 = vld [vmem:[#allocation7 + $0x398] sm:$0xff]
    %v257 = vld [vmem:[#allocation7 + $0x3a0] sm:$0xff]
    %v258 = vld [vmem:[#allocation7 + $0x3a8] sm:$0xff]
    %v259 = vld [vmem:[#allocation7 + $0x3b0] sm:$0xff]
    %v260 = vld [vmem:[#allocation7 + $0x3b8] sm:$0xff]
    %v261 = vld [vmem:[#allocation7 + $0x3c0] sm:$0xff]
    %v262 = vld [vmem:[#allocation7 + $0x3c8] sm:$0xff]
    %v263 = vld [vmem:[#allocation7 + $0x3d0] sm:$0xff]
    %v264 = vld [vmem:[#allocation7 + $0x3d8] sm:$0xff]
    %v265 = vld [vmem:[#allocation7 + $0x3e0] sm:$0xff]
    %v266 = vld [vmem:[#allocation7 + $0x3e8] sm:$0xff]
    %v267 = vld [vmem:[#allocation7 + $0x3f0] sm:$0xff]
    %v268 = vld [vmem:[#allocation7 + $0x3f8] sm:$0xff]
    %v269 = vld [vmem:[#allocation7 + $0x400] sm:$0xff]
    %v270 = vld [vmem:[#allocation7 + $0x408] sm:$0xff]
    %v271 = vld [vmem:[#allocation7 + $0x410] sm:$0xff]
    %v272 = vld [vmem:[#allocation7 + $0x418] sm:$0xff]
    %v273 = vld [vmem:[#allocation7 + $0x420] sm:$0xff]
    %v274 = vld [vmem:[#allocation7 + $0x428] sm:$0xff]
    %v275 = vld [vmem:[#allocation7 + $0x430] sm:$0xff]
    %v276 = vld [vmem:[#allocation7 + $0x438] sm:$0xff]
    %v277 = vld [vmem:[#allocation7 + $0x440] sm:$0xff]
    %v278 = vld [vmem:[#allocation7 + $0x448] sm:$0xff]
    %v279 = vld [vmem:[#allocation7 + $0x450] sm:$0xff]
    %v280 = vld [vmem:[#allocation7 + $0x458] sm:$0xff]
    %v281 = vld [vmem:[#allocation7 + $0x460] sm:$0xff]
    %v282 = vld [vmem:[#allocation7 + $0x468] sm:$0xff]
    %v283 = vld [vmem:[#allocation7 + $0x470] sm:$0xff]
    %v284 = vld [vmem:[#allocation7 + $0x478] sm:$0xff]
    %v285 = vld [vmem:[#allocation7 + $0x480] sm:$0xff]
    %v286 = vld [vmem:[#allocation7 + $0x488] sm:$0xff]
    %v287 = vld [vmem:[#allocation7 + $0x490] sm:$0xff]
    %v288 = vld [vmem:[#allocation7 + $0x498] sm:$0xff]
    %v289 = vld [vmem:[#allocation7 + $0x4a0] sm:$0xff]
    %v290 = vld [vmem:[#allocation7 + $0x4a8] sm:$0xff]
    %v291 = vld [vmem:[#allocation7 + $0x4b0] sm:$0xff]
    %v292 = vld [vmem:[#allocation7 + $0x4b8] sm:$0xff]
    %v293 = vld [vmem:[#allocation7 + $0x4c0] sm:$0xff]
    %v294 = vld [vmem:[#allocation7 + $0x4c8] sm:$0xff]
    %v295 = vld [vmem:[#allocation7 + $0x4d0] sm:$0xff]
    %v296 = vld [vmem:[#allocation7 + $0x4d8] sm:$0xff]
    %v297 = vld [vmem:[#allocation7 + $0x4e0] sm:$0xff]
    %v298 = vld [vmem:[#allocation7 + $0x4e8] sm:$0xff]
    %v299 = vld [vmem:[#allocation7 + $0x4f0] sm:$0xff]
    %v300 = vld [vmem:[#allocation7 + $0x4f8] sm:$0xff]
    %v301 = vld [vmem:[#allocation7 + $0x500] sm:$0xff]
    %v302 = vld [vmem:[#allocation7 + $0x508] sm:$0xff]
    %v303 = vld [vmem:[#allocation7 + $0x510] sm:$0xff]
    %v304 = vld [vmem:[#allocation7 + $0x518] sm:$0xff]
    %v305 = vld [vmem:[#allocation7 + $0x520] sm:$0xff]
    %v306 = vld [vmem:[#allocation7 + $0x528] sm:$0xff]
    %v307 = vld [vmem:[#allocation7 + $0x530] sm:$0xff]
    %v308 = vld [vmem:[#allocation7 + $0x538] sm:$0xff]
    %v309 = vld [vmem:[#allocation7 + $0x540] sm:$0xff]
    %v310 = vld [vmem:[#allocation7 + $0x548] sm:$0xff]
    %v311 = vld [vmem:[#allocation7 + $0x550] sm:$0xff]
    %v312 = vld [vmem:[#allocation7 + $0x558] sm:$0xff]
    %v313 = vld [vmem:[#allocation7 + $0x560] sm:$0xff]
    %v314 = vld [vmem:[#allocation7 + $0x568] sm:$0xff]
    %v315 = vld [vmem:[#allocation7 + $0x570] sm:$0xff]
    %v316 = vld [vmem:[#allocation7 + $0x578] sm:$0xff]
    %v317 = vld [vmem:[#allocation7 + $0x580] sm:$0xff]
    %v318 = vld [vmem:[#allocation7 + $0x588] sm:$0xff]
    %v319 = vld [vmem:[#allocation7 + $0x590] sm:$0xff]
    %v320 = vld [vmem:[#allocation7 + $0x598] sm:$0xff]
    %v321 = vld [vmem:[#allocation7 + $0x5a0] sm:$0xff]
    %v322 = vld [vmem:[#allocation7 + $0x5a8] sm:$0xff]
    %v323 = vld [vmem:[#allocation7 + $0x5b0] sm:$0xff]
    %v324 = vld [vmem:[#allocation7 + $0x5b8] sm:$0xff]
    %v325 = vld [vmem:[#allocation7 + $0x5c0] sm:$0xff]
    %v326 = vld [vmem:[#allocation7 + $0x5c8] sm:$0xff]
    %v327 = vld [vmem:[#allocation7 + $0x5d0] sm:$0xff]
    %v328 = vld [vmem:[#allocation7 + $0x5d8] sm:$0xff]
    %v329 = vld [vmem:[#allocation7 + $0x5e0] sm:$0xff]
    %v330 = vld [vmem:[#allocation7 + $0x5e8] sm:$0xff]
    %v331 = vld [vmem:[#allocation7 + $0x5f0] sm:$0xff]
    %v332 = vld [vmem:[#allocation7 + $0x5f8] sm:$0xff]
    %v333 = vld [vmem:[#allocation7 + $0x600] sm:$0xff]
    %v334 = vld [vmem:[#allocation7 + $0x608] sm:$0xff]
    %v335 = vld [vmem:[#allocation7 + $0x610] sm:$0xff]
    %v336 = vld [vmem:[#allocation7 + $0x618] sm:$0xff]
    %v337 = vld [vmem:[#allocation7 + $0x620] sm:$0xff]
    %v338 = vld [vmem:[#allocation7 + $0x628] sm:$0xff]
    %v339 = vld [vmem:[#allocation7 + $0x630] sm:$0xff]
    %v340 = vld [vmem:[#allocation7 + $0x638] sm:$0xff]
    %v341 = vld [vmem:[#allocation7 + $0x640] sm:$0xff]
    %v342 = vld [vmem:[#allocation7 + $0x648] sm:$0xff]
    %v343 = vld [vmem:[#allocation7 + $0x650] sm:$0xff]
    %v344 = vld [vmem:[#allocation7 + $0x658] sm:$0xff]
    %v345 = vld [vmem:[#allocation7 + $0x660] sm:$0xff]
    %v346 = vld [vmem:[#allocation7 + $0x668] sm:$0xff]
    %v347 = vld [vmem:[#allocation7 + $0x670] sm:$0xff]
    %v348 = vld [vmem:[#allocation7 + $0x678] sm:$0xff]
    %v349 = vld [vmem:[#allocation7 + $0x680] sm:$0xff]
    %v350 = vld [vmem:[#allocation7 + $0x688] sm:$0xff]
    %v351 = vld [vmem:[#allocation7 + $0x690] sm:$0xff]
    %v352 = vld [vmem:[#allocation7 + $0x698] sm:$0xff]
    %v353 = vld [vmem:[#allocation7 + $0x6a0] sm:$0xff]
    %v354 = vld [vmem:[#allocation7 + $0x6a8] sm:$0xff]
    %v355 = vld [vmem:[#allocation7 + $0x6b0] sm:$0xff]
    %v356 = vld [vmem:[#allocation7 + $0x6b8] sm:$0xff]
    %v357 = vld [vmem:[#allocation7 + $0x6c0] sm:$0xff]
    %v358 = vld [vmem:[#allocation7 + $0x6c8] sm:$0xff]
    %v359 = vld [vmem:[#allocation7 + $0x6d0] sm:$0xff]
    %v360 = vld [vmem:[#allocation7 + $0x6d8] sm:$0xff]
    %v361 = vld [vmem:[#allocation7 + $0x6e0] sm:$0xff]
    %v362 = vld [vmem:[#allocation7 + $0x6e8] sm:$0xff]
    %v363 = vld [vmem:[#allocation7 + $0x6f0] sm:$0xff]
    %v364 = vld [vmem:[#allocation7 + $0x6f8] sm:$0xff]
    %v365 = vld [vmem:[%s3] sm:$0xf]
    %v367 = vlaneseq
    %v368 = vshrl.u32 %v367, 7
    %v369 = vsub.s32 0, %v368
    %v370 = vrot.slane %v365, %v369
    %v371 = vlaneseq
    %v372 = vshrl.u32 %v371, 7
    %v373 = vsub.s32 1, %v372
    %v374 = vrot.slane %v365, %v373
    %v375 = vlaneseq
    %v376 = vshrl.u32 %v375, 7
    %v377 = vsub.s32 2, %v376
    %v378 = vrot.slane %v365, %v377
    %v379 = vlaneseq
    %v380 = vshrl.u32 %v379, 7
    %v381 = vsub.s32 3, %v380
    %v382 = vrot.slane %v365, %v381
    %v395 = vunpack.c.l.b16 %v133
    %v396 = vunpack.c.h.b16 %v133
    %v397 = vunpack.c.l.b16 %v134
    %v398 = vunpack.c.h.b16 %v134
    %v399 = vunpack.c.l.b16 %v135
    %v400 = vunpack.c.h.b16 %v135
    %v401 = vunpack.c.l.b16 %v136
    %v402 = vunpack.c.l.b16 %v137
    %v403 = vunpack.c.h.b16 %v137
    %v404 = vunpack.c.l.b16 %v138
    %v405 = vunpack.c.h.b16 %v138
    %v406 = vunpack.c.l.b16 %v139
    %v407 = vunpack.c.h.b16 %v139
    %v408 = vunpack.c.l.b16 %v140
    %v409 = vpack.c.b16 %v402, %v395
    %v410 = vpack.c.b16 %v403, %v396
    %v411 = vpack.c.b16 %v404, %v397
    %v412 = vpack.c.b16 %v405, %v398
    %v413 = vpack.c.b16 %v406, %v399
    %v414 = vpack.c.b16 %v407, %v400
    %v415 = vpack.c.b16 %v408, %v401
    %v647 = vunpack.c.l.b16 %v141
    %v648 = vunpack.c.h.b16 %v141
    %v649 = vunpack.c.l.b16 %v142
    %v650 = vunpack.c.h.b16 %v142
    %v651 = vunpack.c.l.b16 %v143
    %v652 = vunpack.c.h.b16 %v143
    %v653 = vunpack.c.l.b16 %v144
    %v654 = vunpack.c.h.b16 %v144
    %v655 = vunpack.c.l.b16 %v145
    %v656 = vunpack.c.h.b16 %v145
    %v657 = vunpack.c.l.b16 %v146
    %v658 = vunpack.c.h.b16 %v146
    %v659 = vunpack.c.l.b16 %v147
    %v660 = vunpack.c.h.b16 %v147
    %v661 = vunpack.c.l.b16 %v148
    %v662 = vunpack.c.h.b16 %v148
    %v663 = vunpack.c.l.b16 %v149
    %v664 = vunpack.c.h.b16 %v149
    %v665 = vunpack.c.l.b16 %v150
    %v666 = vunpack.c.h.b16 %v150
    %v667 = vunpack.c.l.b16 %v151
    %v668 = vunpack.c.h.b16 %v151
    %v669 = vunpack.c.l.b16 %v152
    %v670 = vunpack.c.h.b16 %v152
    %v671 = vunpack.c.l.b16 %v153
    %v672 = vunpack.c.h.b16 %v153
    %v673 = vunpack.c.l.b16 %v154
    %v674 = vunpack.c.h.b16 %v154
    %v675 = vunpack.c.l.b16 %v155
    %v676 = vunpack.c.h.b16 %v155
    %v677 = vunpack.c.l.b16 %v156
    %v678 = vunpack.c.h.b16 %v156
    %v679 = vunpack.c.l.b16 %v157
    %v680 = vunpack.c.h.b16 %v157
    %v681 = vunpack.c.l.b16 %v158
    %v682 = vunpack.c.h.b16 %v158
    %v683 = vunpack.c.l.b16 %v159
    %v684 = vunpack.c.h.b16 %v159
    %v685 = vunpack.c.l.b16 %v160
    %v686 = vunpack.c.h.b16 %v160
    %v687 = vunpack.c.l.b16 %v161
    %v688 = vunpack.c.h.b16 %v161
    %v689 = vunpack.c.l.b16 %v162
    %v690 = vunpack.c.h.b16 %v162
    %v691 = vunpack.c.l.b16 %v163
    %v692 = vunpack.c.h.b16 %v163
    %v693 = vunpack.c.l.b16 %v164
    %v694 = vunpack.c.h.b16 %v164
    %v695 = vunpack.c.l.b16 %v165
    %v696 = vunpack.c.h.b16 %v165
    %v697 = vunpack.c.l.b16 %v166
    %v698 = vunpack.c.h.b16 %v166
    %v699 = vunpack.c.l.b16 %v167
    %v700 = vunpack.c.h.b16 %v167
    %v701 = vunpack.c.l.b16 %v168
    %v702 = vunpack.c.h.b16 %v168
    %v703 = vunpack.c.l.b16 %v169
    %v704 = vunpack.c.h.b16 %v169
    %v705 = vunpack.c.l.b16 %v170
    %v706 = vunpack.c.h.b16 %v170
    %v707 = vunpack.c.l.b16 %v171
    %v708 = vunpack.c.h.b16 %v171
    %v709 = vunpack.c.l.b16 %v172
    %v710 = vunpack.c.h.b16 %v172
    %v711 = vunpack.c.l.b16 %v173
    %v712 = vunpack.c.h.b16 %v173
    %v713 = vunpack.c.l.b16 %v174
    %v714 = vunpack.c.h.b16 %v174
    %v715 = vunpack.c.l.b16 %v175
    %v716 = vunpack.c.h.b16 %v175
    %v717 = vunpack.c.l.b16 %v176
    %v718 = vunpack.c.h.b16 %v176
    %v719 = vunpack.c.l.b16 %v177
    %v720 = vunpack.c.h.b16 %v177
    %v721 = vunpack.c.l.b16 %v178
    %v722 = vunpack.c.h.b16 %v178
    %v723 = vunpack.c.l.b16 %v179
    %v724 = vunpack.c.h.b16 %v179
    %v725 = vunpack.c.l.b16 %v180
    %v726 = vunpack.c.h.b16 %v180
    %v727 = vunpack.c.l.b16 %v181
    %v728 = vunpack.c.h.b16 %v181
    %v729 = vunpack.c.l.b16 %v182
    %v730 = vunpack.c.h.b16 %v182
    %v731 = vunpack.c.l.b16 %v183
    %v732 = vunpack.c.h.b16 %v183
    %v733 = vunpack.c.l.b16 %v184
    %v734 = vunpack.c.h.b16 %v184
    %v735 = vunpack.c.l.b16 %v185
    %v736 = vunpack.c.h.b16 %v185
    %v737 = vunpack.c.l.b16 %v186
    %v738 = vunpack.c.h.b16 %v186
    %v739 = vunpack.c.l.b16 %v187
    %v740 = vunpack.c.h.b16 %v187
    %v741 = vunpack.c.l.b16 %v188
    %v742 = vunpack.c.h.b16 %v188
    %v743 = vunpack.c.l.b16 %v189
    %v744 = vunpack.c.h.b16 %v189
    %v745 = vunpack.c.l.b16 %v190
    %v746 = vunpack.c.h.b16 %v190
    %v747 = vunpack.c.l.b16 %v191
    %v748 = vunpack.c.h.b16 %v191
    %v749 = vunpack.c.l.b16 %v192
    %v750 = vunpack.c.h.b16 %v192
    %v751 = vunpack.c.l.b16 %v193
    %v752 = vunpack.c.h.b16 %v193
    %v753 = vunpack.c.l.b16 %v194
    %v754 = vunpack.c.h.b16 %v194
    %v755 = vunpack.c.l.b16 %v195
    %v756 = vunpack.c.h.b16 %v195
    %v757 = vunpack.c.l.b16 %v196
    %v758 = vunpack.c.h.b16 %v196
    %v759 = vunpack.c.l.b16 %v197
    %v760 = vunpack.c.h.b16 %v197
    %v761 = vunpack.c.l.b16 %v198
    %v762 = vunpack.c.h.b16 %v198
    %v763 = vunpack.c.l.b16 %v199
    %v764 = vunpack.c.h.b16 %v199
    %v765 = vunpack.c.l.b16 %v200
    %v766 = vunpack.c.h.b16 %v200
    %v767 = vunpack.c.l.b16 %v201
    %v768 = vunpack.c.h.b16 %v201
    %v769 = vunpack.c.l.b16 %v202
    %v770 = vunpack.c.h.b16 %v202
    %v771 = vunpack.c.l.b16 %v203
    %v772 = vunpack.c.h.b16 %v203
    %v773 = vunpack.c.l.b16 %v204
    %v774 = vunpack.c.h.b16 %v204
    %v775 = vunpack.c.l.b16 %v205
    %v776 = vunpack.c.h.b16 %v205
    %v777 = vunpack.c.l.b16 %v206
    %v778 = vunpack.c.h.b16 %v206
    %v779 = vunpack.c.l.b16 %v207
    %v780 = vunpack.c.h.b16 %v207
    %v781 = vunpack.c.l.b16 %v208
    %v782 = vunpack.c.h.b16 %v208
    %v783 = vunpack.c.l.b16 %v209
    %v784 = vunpack.c.h.b16 %v209
    %v785 = vunpack.c.l.b16 %v210
    %v786 = vunpack.c.h.b16 %v210
    %v787 = vunpack.c.l.b16 %v211
    %v788 = vunpack.c.h.b16 %v211
    %v789 = vunpack.c.l.b16 %v212
    %v790 = vunpack.c.h.b16 %v212
    %v791 = vunpack.c.l.b16 %v213
    %v792 = vunpack.c.h.b16 %v213
    %v793 = vunpack.c.l.b16 %v214
    %v794 = vunpack.c.h.b16 %v214
    %v795 = vunpack.c.l.b16 %v215
    %v796 = vunpack.c.h.b16 %v215
    %v797 = vunpack.c.l.b16 %v216
    %v798 = vunpack.c.h.b16 %v216
    %v799 = vunpack.c.l.b16 %v217
    %v800 = vunpack.c.h.b16 %v217
    %v801 = vunpack.c.l.b16 %v218
    %v802 = vunpack.c.h.b16 %v218
    %v803 = vunpack.c.l.b16 %v219
    %v804 = vunpack.c.h.b16 %v219
    %v805 = vunpack.c.l.b16 %v220
    %v806 = vunpack.c.h.b16 %v220
    %v807 = vunpack.c.l.b16 %v221
    %v808 = vunpack.c.h.b16 %v221
    %v809 = vunpack.c.l.b16 %v222
    %v810 = vunpack.c.h.b16 %v222
    %v811 = vunpack.c.l.b16 %v223
    %v812 = vunpack.c.h.b16 %v223
    %v813 = vunpack.c.l.b16 %v224
    %v814 = vunpack.c.h.b16 %v224
    %v815 = vunpack.c.l.b16 %v225
    %v816 = vunpack.c.h.b16 %v225
    %v817 = vunpack.c.l.b16 %v226
    %v818 = vunpack.c.h.b16 %v226
    %v819 = vunpack.c.l.b16 %v227
    %v820 = vunpack.c.h.b16 %v227
    %v821 = vunpack.c.l.b16 %v228
    %v822 = vunpack.c.h.b16 %v228
    %v823 = vunpack.c.l.b16 %v229
    %v824 = vunpack.c.h.b16 %v229
    %v825 = vunpack.c.l.b16 %v230
    %v826 = vunpack.c.h.b16 %v230
    %v827 = vunpack.c.l.b16 %v231
    %v828 = vunpack.c.h.b16 %v231
    %v829 = vunpack.c.l.b16 %v232
    %v830 = vunpack.c.h.b16 %v232
    %v831 = vunpack.c.l.b16 %v233
    %v832 = vunpack.c.h.b16 %v233
    %v833 = vunpack.c.l.b16 %v234
    %v834 = vunpack.c.h.b16 %v234
    %v835 = vunpack.c.l.b16 %v235
    %v836 = vunpack.c.h.b16 %v235
    %v837 = vunpack.c.l.b16 %v236
    %v838 = vunpack.c.h.b16 %v236
    %v839 = vunpack.c.l.b16 %v237
    %v840 = vunpack.c.h.b16 %v237
    %v841 = vunpack.c.l.b16 %v238
    %v842 = vunpack.c.h.b16 %v238
    %v843 = vunpack.c.l.b16 %v239
    %v844 = vunpack.c.h.b16 %v239
    %v845 = vunpack.c.l.b16 %v240
    %v846 = vunpack.c.h.b16 %v240
    %v847 = vunpack.c.l.b16 %v241
    %v848 = vunpack.c.h.b16 %v241
    %v849 = vunpack.c.l.b16 %v242
    %v850 = vunpack.c.h.b16 %v242
    %v851 = vunpack.c.l.b16 %v243
    %v852 = vunpack.c.h.b16 %v243
    %v853 = vunpack.c.l.b16 %v244
    %v854 = vunpack.c.h.b16 %v244
    %v855 = vunpack.c.l.b16 %v245
    %v856 = vunpack.c.h.b16 %v245
    %v857 = vunpack.c.l.b16 %v246
    %v858 = vunpack.c.h.b16 %v246
    %v859 = vunpack.c.l.b16 %v247
    %v860 = vunpack.c.h.b16 %v247
    %v861 = vunpack.c.l.b16 %v248
    %v862 = vunpack.c.h.b16 %v248
    %v863 = vunpack.c.l.b16 %v249
    %v864 = vunpack.c.h.b16 %v249
    %v865 = vunpack.c.l.b16 %v250
    %v866 = vunpack.c.h.b16 %v250
    %v867 = vunpack.c.l.b16 %v251
    %v868 = vunpack.c.h.b16 %v251
    %v869 = vunpack.c.l.b16 %v252
    %v870 = vunpack.c.h.b16 %v252
    %v871 = vunpack.c.l.b16 %v253
    %v872 = vunpack.c.h.b16 %v253
    %v873 = vunpack.c.l.b16 %v254
    %v874 = vunpack.c.h.b16 %v254
    %v875 = vunpack.c.l.b16 %v255
    %v876 = vunpack.c.h.b16 %v255
    %v877 = vunpack.c.l.b16 %v256
    %v878 = vunpack.c.h.b16 %v256
    %v879 = vunpack.c.l.b16 %v257
    %v880 = vunpack.c.h.b16 %v257
    %v881 = vunpack.c.l.b16 %v258
    %v882 = vunpack.c.h.b16 %v258
    %v883 = vunpack.c.l.b16 %v259
    %v884 = vunpack.c.h.b16 %v259
    %v885 = vunpack.c.l.b16 %v260
    %v886 = vunpack.c.h.b16 %v260
    %v887 = vunpack.c.l.b16 %v261
    %v888 = vunpack.c.h.b16 %v261
    %v889 = vunpack.c.l.b16 %v262
    %v890 = vunpack.c.h.b16 %v262
    %v891 = vunpack.c.l.b16 %v263
    %v892 = vunpack.c.h.b16 %v263
    %v893 = vunpack.c.l.b16 %v264
    %v894 = vunpack.c.h.b16 %v264
    %v895 = vunpack.c.l.b16 %v265
    %v896 = vunpack.c.h.b16 %v265
    %v897 = vunpack.c.l.b16 %v266
    %v898 = vunpack.c.h.b16 %v266
    %v899 = vunpack.c.l.b16 %v267
    %v900 = vunpack.c.h.b16 %v267
    %v901 = vunpack.c.l.b16 %v268
    %v902 = vunpack.c.h.b16 %v268
    %v903 = vunpack.c.l.b16 %v269
    %v904 = vunpack.c.h.b16 %v269
    %v905 = vunpack.c.l.b16 %v270
    %v906 = vunpack.c.h.b16 %v270
    %v907 = vunpack.c.l.b16 %v271
    %v908 = vunpack.c.h.b16 %v271
    %v909 = vunpack.c.l.b16 %v272
    %v910 = vunpack.c.h.b16 %v272
    %v911 = vunpack.c.l.b16 %v273
    %v912 = vunpack.c.h.b16 %v273
    %v913 = vunpack.c.l.b16 %v274
    %v914 = vunpack.c.h.b16 %v274
    %v915 = vunpack.c.l.b16 %v275
    %v916 = vunpack.c.h.b16 %v275
    %v917 = vunpack.c.l.b16 %v276
    %v918 = vunpack.c.h.b16 %v276
    %v919 = vunpack.c.l.b16 %v277
    %v920 = vunpack.c.h.b16 %v277
    %v921 = vunpack.c.l.b16 %v278
    %v922 = vunpack.c.h.b16 %v278
    %v923 = vunpack.c.l.b16 %v279
    %v924 = vunpack.c.h.b16 %v279
    %v925 = vunpack.c.l.b16 %v280
    %v926 = vunpack.c.h.b16 %v280
    %v927 = vunpack.c.l.b16 %v281
    %v928 = vunpack.c.h.b16 %v281
    %v929 = vunpack.c.l.b16 %v282
    %v930 = vunpack.c.h.b16 %v282
    %v931 = vunpack.c.l.b16 %v283
    %v932 = vunpack.c.h.b16 %v283
    %v933 = vunpack.c.l.b16 %v284
    %v934 = vunpack.c.h.b16 %v284
    %v935 = vunpack.c.l.b16 %v285
    %v936 = vunpack.c.h.b16 %v285
    %v937 = vunpack.c.l.b16 %v286
    %v938 = vunpack.c.h.b16 %v286
    %v939 = vunpack.c.l.b16 %v287
    %v940 = vunpack.c.h.b16 %v287
    %v941 = vunpack.c.l.b16 %v288
    %v942 = vunpack.c.h.b16 %v288
    %v943 = vunpack.c.l.b16 %v289
    %v944 = vunpack.c.h.b16 %v289
    %v945 = vunpack.c.l.b16 %v290
    %v946 = vunpack.c.h.b16 %v290
    %v947 = vunpack.c.l.b16 %v291
    %v948 = vunpack.c.h.b16 %v291
    %v949 = vunpack.c.l.b16 %v292
    %v950 = vunpack.c.h.b16 %v292
    %v951 = vunpack.c.l.b16 %v293
    %v952 = vunpack.c.h.b16 %v293
    %v953 = vunpack.c.l.b16 %v294
    %v954 = vunpack.c.h.b16 %v294
    %v955 = vunpack.c.l.b16 %v295
    %v956 = vunpack.c.h.b16 %v295
    %v957 = vunpack.c.l.b16 %v296
    %v958 = vunpack.c.h.b16 %v296
    %v959 = vunpack.c.l.b16 %v297
    %v960 = vunpack.c.h.b16 %v297
    %v961 = vunpack.c.l.b16 %v298
    %v962 = vunpack.c.h.b16 %v298
    %v963 = vunpack.c.l.b16 %v299
    %v964 = vunpack.c.h.b16 %v299
    %v965 = vunpack.c.l.b16 %v300
    %v966 = vunpack.c.h.b16 %v300
    %v967 = vunpack.c.l.b16 %v301
    %v968 = vunpack.c.h.b16 %v301
    %v969 = vunpack.c.l.b16 %v302
    %v970 = vunpack.c.h.b16 %v302
    %v971 = vunpack.c.l.b16 %v303
    %v972 = vunpack.c.h.b16 %v303
    %v973 = vunpack.c.l.b16 %v304
    %v974 = vunpack.c.h.b16 %v304
    %v975 = vunpack.c.l.b16 %v305
    %v976 = vunpack.c.h.b16 %v305
    %v977 = vunpack.c.l.b16 %v306
    %v978 = vunpack.c.h.b16 %v306
    %v979 = vunpack.c.l.b16 %v307
    %v980 = vunpack.c.h.b16 %v307
    %v981 = vunpack.c.l.b16 %v308
    %v982 = vunpack.c.h.b16 %v308
    %v983 = vunpack.c.l.b16 %v309
    %v984 = vunpack.c.h.b16 %v309
    %v985 = vunpack.c.l.b16 %v310
    %v986 = vunpack.c.h.b16 %v310
    %v987 = vunpack.c.l.b16 %v311
    %v988 = vunpack.c.h.b16 %v311
    %v989 = vunpack.c.l.b16 %v312
    %v990 = vunpack.c.h.b16 %v312
    %v991 = vunpack.c.l.b16 %v313
    %v992 = vunpack.c.h.b16 %v313
    %v993 = vunpack.c.l.b16 %v314
    %v994 = vunpack.c.h.b16 %v314
    %v995 = vunpack.c.l.b16 %v315
    %v996 = vunpack.c.h.b16 %v315
    %v997 = vunpack.c.l.b16 %v316
    %v998 = vunpack.c.h.b16 %v316
    %v999 = vunpack.c.l.b16 %v317
    %v1000 = vunpack.c.h.b16 %v317
    %v1001 = vunpack.c.l.b16 %v318
    %v1002 = vunpack.c.h.b16 %v318
    %v1003 = vunpack.c.l.b16 %v319
    %v1004 = vunpack.c.h.b16 %v319
    %v1005 = vunpack.c.l.b16 %v320
    %v1006 = vunpack.c.h.b16 %v320
    %v1007 = vunpack.c.l.b16 %v321
    %v1008 = vunpack.c.h.b16 %v321
    %v1009 = vunpack.c.l.b16 %v322
    %v1010 = vunpack.c.h.b16 %v322
    %v1011 = vunpack.c.l.b16 %v323
    %v1012 = vunpack.c.h.b16 %v323
    %v1013 = vunpack.c.l.b16 %v324
    %v1014 = vunpack.c.h.b16 %v324
    %v1015 = vunpack.c.l.b16 %v325
    %v1016 = vunpack.c.h.b16 %v325
    %v1017 = vunpack.c.l.b16 %v326
    %v1018 = vunpack.c.h.b16 %v326
    %v1019 = vunpack.c.l.b16 %v327
    %v1020 = vunpack.c.h.b16 %v327
    %v1021 = vunpack.c.l.b16 %v328
    %v1022 = vunpack.c.h.b16 %v328
    %v1023 = vunpack.c.l.b16 %v329
    %v1024 = vunpack.c.h.b16 %v329
    %v1025 = vunpack.c.l.b16 %v330
    %v1026 = vunpack.c.h.b16 %v330
    %v1027 = vunpack.c.l.b16 %v331
    %v1028 = vunpack.c.h.b16 %v331
    %v1029 = vunpack.c.l.b16 %v332
    %v1030 = vunpack.c.h.b16 %v332
    %v1031 = vunpack.c.l.b16 %v333
    %v1032 = vunpack.c.h.b16 %v333
    %v1033 = vunpack.c.l.b16 %v334
    %v1034 = vunpack.c.h.b16 %v334
    %v1035 = vunpack.c.l.b16 %v335
    %v1036 = vunpack.c.h.b16 %v335
    %v1037 = vunpack.c.l.b16 %v336
    %v1038 = vunpack.c.h.b16 %v336
    %v1039 = vunpack.c.l.b16 %v337
    %v1040 = vunpack.c.h.b16 %v337
    %v1041 = vunpack.c.l.b16 %v338
    %v1042 = vunpack.c.h.b16 %v338
    %v1043 = vunpack.c.l.b16 %v339
    %v1044 = vunpack.c.h.b16 %v339
    %v1045 = vunpack.c.l.b16 %v340
    %v1046 = vunpack.c.h.b16 %v340
    %v1047 = vunpack.c.l.b16 %v341
    %v1048 = vunpack.c.h.b16 %v341
    %v1049 = vunpack.c.l.b16 %v342
    %v1050 = vunpack.c.h.b16 %v342
    %v1051 = vunpack.c.l.b16 %v343
    %v1052 = vunpack.c.h.b16 %v343
    %v1053 = vunpack.c.l.b16 %v344
    %v1054 = vunpack.c.h.b16 %v344
    %v1055 = vunpack.c.l.b16 %v345
    %v1056 = vunpack.c.h.b16 %v345
    %v1057 = vunpack.c.l.b16 %v346
    %v1058 = vunpack.c.h.b16 %v346
    %v1059 = vunpack.c.l.b16 %v347
    %v1060 = vunpack.c.h.b16 %v347
    %v1061 = vunpack.c.l.b16 %v348
    %v1062 = vunpack.c.h.b16 %v348
    %v1063 = vunpack.c.l.b16 %v349
    %v1064 = vunpack.c.h.b16 %v349
    %v1065 = vunpack.c.l.b16 %v350
    %v1066 = vunpack.c.h.b16 %v350
    %v1067 = vunpack.c.l.b16 %v351
    %v1068 = vunpack.c.h.b16 %v351
    %v1069 = vunpack.c.l.b16 %v352
    %v1070 = vunpack.c.h.b16 %v352
    %v1071 = vunpack.c.l.b16 %v353
    %v1072 = vunpack.c.h.b16 %v353
    %v1073 = vunpack.c.l.b16 %v354
    %v1074 = vunpack.c.h.b16 %v354
    %v1075 = vunpack.c.l.b16 %v355
    %v1076 = vunpack.c.h.b16 %v355
    %v1077 = vunpack.c.l.b16 %v356
    %v1078 = vunpack.c.h.b16 %v356
    %v1079 = vunpack.c.l.b16 %v357
    %v1080 = vunpack.c.h.b16 %v357
    %v1081 = vunpack.c.l.b16 %v358
    %v1082 = vunpack.c.h.b16 %v358
    %v1083 = vunpack.c.l.b16 %v359
    %v1084 = vunpack.c.h.b16 %v359
    %v1085 = vunpack.c.l.b16 %v360
    %v1086 = vunpack.c.h.b16 %v360
    %v1087 = vunpack.c.l.b16 %v361
    %v1088 = vunpack.c.h.b16 %v361
    %v1089 = vunpack.c.l.b16 %v362
    %v1090 = vunpack.c.h.b16 %v362
    %v1091 = vunpack.c.l.b16 %v363
    %v1092 = vunpack.c.h.b16 %v363
    %v1093 = vunpack.c.l.b16 %v364
    %v1094 = vunpack.c.h.b16 %v364
    %v1095 = vpack.c.b16 %v651, %v647
    %v1096 = vpack.c.b16 %v652, %v648
    %v1097 = vpack.c.b16 %v653, %v649
    %v1098 = vpack.c.b16 %v654, %v650
    %v1099 = vpack.c.b16 %v659, %v655
    %v1100 = vpack.c.b16 %v660, %v656
    %v1101 = vpack.c.b16 %v661, %v657
    %v1102 = vpack.c.b16 %v662, %v658
    %v1103 = vpack.c.b16 %v667, %v663
    %v1104 = vpack.c.b16 %v668, %v664
    %v1105 = vpack.c.b16 %v669, %v665
    %v1106 = vpack.c.b16 %v670, %v666
    %v1107 = vpack.c.b16 %v675, %v671
    %v1108 = vpack.c.b16 %v676, %v672
    %v1109 = vpack.c.b16 %v677, %v673
    %v1110 = vpack.c.b16 %v678, %v674
    %v1111 = vpack.c.b16 %v683, %v679
    %v1112 = vpack.c.b16 %v684, %v680
    %v1113 = vpack.c.b16 %v685, %v681
    %v1114 = vpack.c.b16 %v686, %v682
    %v1115 = vpack.c.b16 %v691, %v687
    %v1116 = vpack.c.b16 %v692, %v688
    %v1117 = vpack.c.b16 %v693, %v689
    %v1118 = vpack.c.b16 %v694, %v690
    %v1119 = vpack.c.b16 %v699, %v695
    %v1120 = vpack.c.b16 %v700, %v696
    %v1121 = vpack.c.b16 %v701, %v697
    %v1122 = vpack.c.b16 %v702, %v698
    %v1123 = vpack.c.b16 %v707, %v703
    %v1124 = vpack.c.b16 %v708, %v704
    %v1125 = vpack.c.b16 %v709, %v705
    %v1126 = vpack.c.b16 %v710, %v706
    %v1127 = vpack.c.b16 %v715, %v711
    %v1128 = vpack.c.b16 %v716, %v712
    %v1129 = vpack.c.b16 %v717, %v713
    %v1130 = vpack.c.b16 %v718, %v714
    %v1131 = vpack.c.b16 %v723, %v719
    %v1132 = vpack.c.b16 %v724, %v720
    %v1133 = vpack.c.b16 %v725, %v721
    %v1134 = vpack.c.b16 %v726, %v722
    %v1135 = vpack.c.b16 %v731, %v727
    %v1136 = vpack.c.b16 %v732, %v728
    %v1137 = vpack.c.b16 %v733, %v729
    %v1138 = vpack.c.b16 %v734, %v730
    %v1139 = vpack.c.b16 %v739, %v735
    %v1140 = vpack.c.b16 %v740, %v736
    %v1141 = vpack.c.b16 %v741, %v737
    %v1142 = vpack.c.b16 %v742, %v738
    %v1143 = vpack.c.b16 %v747, %v743
    %v1144 = vpack.c.b16 %v748, %v744
    %v1145 = vpack.c.b16 %v749, %v745
    %v1146 = vpack.c.b16 %v750, %v746
    %v1147 = vpack.c.b16 %v755, %v751
    %v1148 = vpack.c.b16 %v756, %v752
    %v1149 = vpack.c.b16 %v757, %v753
    %v1150 = vpack.c.b16 %v758, %v754
    %v1151 = vpack.c.b16 %v763, %v759
    %v1152 = vpack.c.b16 %v764, %v760
    %v1153 = vpack.c.b16 %v765, %v761
    %v1154 = vpack.c.b16 %v766, %v762
    %v1155 = vpack.c.b16 %v771, %v767
    %v1156 = vpack.c.b16 %v772, %v768
    %v1157 = vpack.c.b16 %v773, %v769
    %v1158 = vpack.c.b16 %v774, %v770
    %v1159 = vpack.c.b16 %v779, %v775
    %v1160 = vpack.c.b16 %v780, %v776
    %v1161 = vpack.c.b16 %v781, %v777
    %v1162 = vpack.c.b16 %v782, %v778
    %v1163 = vpack.c.b16 %v787, %v783
    %v1164 = vpack.c.b16 %v788, %v784
    %v1165 = vpack.c.b16 %v789, %v785
    %v1166 = vpack.c.b16 %v790, %v786
    %v1167 = vpack.c.b16 %v795, %v791
    %v1168 = vpack.c.b16 %v796, %v792
    %v1169 = vpack.c.b16 %v797, %v793
    %v1170 = vpack.c.b16 %v798, %v794
    %v1171 = vpack.c.b16 %v803, %v799
    %v1172 = vpack.c.b16 %v804, %v800
    %v1173 = vpack.c.b16 %v805, %v801
    %v1174 = vpack.c.b16 %v806, %v802
    %v1175 = vpack.c.b16 %v811, %v807
    %v1176 = vpack.c.b16 %v812, %v808
    %v1177 = vpack.c.b16 %v813, %v809
    %v1178 = vpack.c.b16 %v814, %v810
    %v1179 = vpack.c.b16 %v819, %v815
    %v1180 = vpack.c.b16 %v820, %v816
    %v1181 = vpack.c.b16 %v821, %v817
    %v1182 = vpack.c.b16 %v822, %v818
    %v1183 = vpack.c.b16 %v827, %v823
    %v1184 = vpack.c.b16 %v828, %v824
    %v1185 = vpack.c.b16 %v829, %v825
    %v1186 = vpack.c.b16 %v830, %v826
    %v1187 = vpack.c.b16 %v835, %v831
    %v1188 = vpack.c.b16 %v836, %v832
    %v1189 = vpack.c.b16 %v837, %v833
    %v1190 = vpack.c.b16 %v838, %v834
    %v1191 = vpack.c.b16 %v843, %v839
    %v1192 = vpack.c.b16 %v844, %v840
    %v1193 = vpack.c.b16 %v845, %v841
    %v1194 = vpack.c.b16 %v846, %v842
    %v1195 = vpack.c.b16 %v851, %v847
    %v1196 = vpack.c.b16 %v852, %v848
    %v1197 = vpack.c.b16 %v853, %v849
    %v1198 = vpack.c.b16 %v854, %v850
    %v1199 = vpack.c.b16 %v859, %v855
    %v1200 = vpack.c.b16 %v860, %v856
    %v1201 = vpack.c.b16 %v861, %v857
    %v1202 = vpack.c.b16 %v862, %v858
    %v1203 = vpack.c.b16 %v867, %v863
    %v1204 = vpack.c.b16 %v868, %v864
    %v1205 = vpack.c.b16 %v869, %v865
    %v1206 = vpack.c.b16 %v870, %v866
    %v1207 = vpack.c.b16 %v875, %v871
    %v1208 = vpack.c.b16 %v876, %v872
    %v1209 = vpack.c.b16 %v877, %v873
    %v1210 = vpack.c.b16 %v878, %v874
    %v1211 = vpack.c.b16 %v883, %v879
    %v1212 = vpack.c.b16 %v884, %v880
    %v1213 = vpack.c.b16 %v885, %v881
    %v1214 = vpack.c.b16 %v886, %v882
    %v1215 = vpack.c.b16 %v891, %v887
    %v1216 = vpack.c.b16 %v892, %v888
    %v1217 = vpack.c.b16 %v893, %v889
    %v1218 = vpack.c.b16 %v894, %v890
    %v1219 = vpack.c.b16 %v899, %v895
    %v1220 = vpack.c.b16 %v900, %v896
    %v1221 = vpack.c.b16 %v901, %v897
    %v1222 = vpack.c.b16 %v902, %v898
    %v1223 = vpack.c.b16 %v907, %v903
    %v1224 = vpack.c.b16 %v908, %v904
    %v1225 = vpack.c.b16 %v909, %v905
    %v1226 = vpack.c.b16 %v910, %v906
    %v1227 = vpack.c.b16 %v915, %v911
    %v1228 = vpack.c.b16 %v916, %v912
    %v1229 = vpack.c.b16 %v917, %v913
    %v1230 = vpack.c.b16 %v918, %v914
    %v1231 = vpack.c.b16 %v923, %v919
    %v1232 = vpack.c.b16 %v924, %v920
    %v1233 = vpack.c.b16 %v925, %v921
    %v1234 = vpack.c.b16 %v926, %v922
    %v1235 = vpack.c.b16 %v931, %v927
    %v1236 = vpack.c.b16 %v932, %v928
    %v1237 = vpack.c.b16 %v933, %v929
    %v1238 = vpack.c.b16 %v934, %v930
    %v1239 = vpack.c.b16 %v939, %v935
    %v1240 = vpack.c.b16 %v940, %v936
    %v1241 = vpack.c.b16 %v941, %v937
    %v1242 = vpack.c.b16 %v942, %v938
    %v1243 = vpack.c.b16 %v947, %v943
    %v1244 = vpack.c.b16 %v948, %v944
    %v1245 = vpack.c.b16 %v949, %v945
    %v1246 = vpack.c.b16 %v950, %v946
    %v1247 = vpack.c.b16 %v955, %v951
    %v1248 = vpack.c.b16 %v956, %v952
    %v1249 = vpack.c.b16 %v957, %v953
    %v1250 = vpack.c.b16 %v958, %v954
    %v1251 = vpack.c.b16 %v963, %v959
    %v1252 = vpack.c.b16 %v964, %v960
    %v1253 = vpack.c.b16 %v965, %v961
    %v1254 = vpack.c.b16 %v966, %v962
    %v1255 = vpack.c.b16 %v971, %v967
    %v1256 = vpack.c.b16 %v972, %v968
    %v1257 = vpack.c.b16 %v973, %v969
    %v1258 = vpack.c.b16 %v974, %v970
    %v1259 = vpack.c.b16 %v979, %v975
    %v1260 = vpack.c.b16 %v980, %v976
    %v1261 = vpack.c.b16 %v981, %v977
    %v1262 = vpack.c.b16 %v982, %v978
    %v1263 = vpack.c.b16 %v987, %v983
    %v1264 = vpack.c.b16 %v988, %v984
    %v1265 = vpack.c.b16 %v989, %v985
    %v1266 = vpack.c.b16 %v990, %v986
    %v1267 = vpack.c.b16 %v995, %v991
    %v1268 = vpack.c.b16 %v996, %v992
    %v1269 = vpack.c.b16 %v997, %v993
    %v1270 = vpack.c.b16 %v998, %v994
    %v1271 = vpack.c.b16 %v1003, %v999
    %v1272 = vpack.c.b16 %v1004, %v1000
    %v1273 = vpack.c.b16 %v1005, %v1001
    %v1274 = vpack.c.b16 %v1006, %v1002
    %v1275 = vpack.c.b16 %v1011, %v1007
    %v1276 = vpack.c.b16 %v1012, %v1008
    %v1277 = vpack.c.b16 %v1013, %v1009
    %v1278 = vpack.c.b16 %v1014, %v1010
    %v1279 = vpack.c.b16 %v1019, %v1015
    %v1280 = vpack.c.b16 %v1020, %v1016
    %v1281 = vpack.c.b16 %v1021, %v1017
    %v1282 = vpack.c.b16 %v1022, %v1018
    %v1283 = vpack.c.b16 %v1027, %v1023
    %v1284 = vpack.c.b16 %v1028, %v1024
    %v1285 = vpack.c.b16 %v1029, %v1025
    %v1286 = vpack.c.b16 %v1030, %v1026
    %v1287 = vpack.c.b16 %v1035, %v1031
    %v1288 = vpack.c.b16 %v1036, %v1032
    %v1289 = vpack.c.b16 %v1037, %v1033
    %v1290 = vpack.c.b16 %v1038, %v1034
    %v1291 = vpack.c.b16 %v1043, %v1039
    %v1292 = vpack.c.b16 %v1044, %v1040
    %v1293 = vpack.c.b16 %v1045, %v1041
    %v1294 = vpack.c.b16 %v1046, %v1042
    %v1295 = vpack.c.b16 %v1051, %v1047
    %v1296 = vpack.c.b16 %v1052, %v1048
    %v1297 = vpack.c.b16 %v1053, %v1049
    %v1298 = vpack.c.b16 %v1054, %v1050
    %v1299 = vpack.c.b16 %v1059, %v1055
    %v1300 = vpack.c.b16 %v1060, %v1056
    %v1301 = vpack.c.b16 %v1061, %v1057
    %v1302 = vpack.c.b16 %v1062, %v1058
    %v1303 = vpack.c.b16 %v1067, %v1063
    %v1304 = vpack.c.b16 %v1068, %v1064
    %v1305 = vpack.c.b16 %v1069, %v1065
    %v1306 = vpack.c.b16 %v1070, %v1066
    %v1307 = vpack.c.b16 %v1075, %v1071
    %v1308 = vpack.c.b16 %v1076, %v1072
    %v1309 = vpack.c.b16 %v1077, %v1073
    %v1310 = vpack.c.b16 %v1078, %v1074
    %v1311 = vpack.c.b16 %v1083, %v1079
    %v1312 = vpack.c.b16 %v1084, %v1080
    %v1313 = vpack.c.b16 %v1085, %v1081
    %v1314 = vpack.c.b16 %v1086, %v1082
    %v1315 = vpack.c.b16 %v1091, %v1087
    %v1316 = vpack.c.b16 %v1092, %v1088
    %v1317 = vpack.c.b16 %v1093, %v1089
    %v1318 = vpack.c.b16 %v1094, %v1090
    %1543 = vmatprep.subr.bf16.mxu0 %v1124
    %1544 = vmatpush1.bf16.msra.mxu0 %v1123
    %1545 = vmatprep.subr.bf16.mxu0 %v1120
    %1546 = vmatpush1.bf16.msra.mxu0 %v1119
    %1547 = vmatprep.subr.bf16.mxu0 %v1116
    %1548 = vmatpush1.bf16.msra.mxu0 %v1115
    %1549 = vmatprep.subr.bf16.mxu0 %v1112
    %1550 = vmatpush1.bf16.msra.mxu0 %v1111
    %1551 = vmatprep.subr.bf16.mxu0 %v1108
    %1552 = vmatpush1.bf16.msra.mxu0 %v1107
    %1553 = vmatprep.subr.bf16.mxu0 %v1104
    %1554 = vmatpush1.bf16.msra.mxu0 %v1103
    %1555 = vmatprep.subr.bf16.mxu0 %v1100
    %1556 = vmatpush1.bf16.msra.mxu0 %v1099
    %1557 = vmatprep.subr.bf16.mxu0 %v1096
    %1558 = vmatpush1.bf16.msra.mxu0 %v1095
    %1559 = vmatprep.subr.bf16.mxu0 %v1156
    %1560 = vmatpush2.bf16.msra.mxu0 %v1155
    %1561 = vmatprep.subr.bf16.mxu0 %v1152
    %1562 = vmatpush2.bf16.msra.mxu0 %v1151
    %1563 = vmatprep.subr.bf16.mxu0 %v1148
    %1564 = vmatpush2.bf16.msra.mxu0 %v1147
    %1565 = vmatprep.subr.bf16.mxu0 %v1144
    %1566 = vmatpush2.bf16.msra.mxu0 %v1143
    %1567 = vmatprep.subr.bf16.mxu0 %v1140
    %1568 = vmatpush2.bf16.msra.mxu0 %v1139
    %1569 = vmatprep.subr.bf16.mxu0 %v1136
    %1570 = vmatpush2.bf16.msra.mxu0 %v1135
    %1571 = vmatprep.subr.bf16.mxu0 %v1132
    %1572 = vmatpush2.bf16.msra.mxu0 %v1131
    %1573 = vmatprep.subr.bf16.mxu0 %v1128
    %1574 = vmatpush2.bf16.msra.mxu0 %v1127
    %1575 = vmatprep.mubr.bf16.mxu0 %v410
    %1576 = vmatmul.mubr.bf16.gmra.mxu0 %v409
    %v1577 = vpop.f32.mrf.mxu0
    %v1578 = vadd.f32 %v370, %v1577
    %v1579 = vpop.f32.mrf.mxu0
    %v1580 = vadd.f32 %v374, %v1579
    %v1581 = vpop.f32.mrf.mxu0
    %v1582 = vadd.f32 %v370, %v1581
    %v1583 = vpop.f32.mrf.mxu0
    %v1584 = vadd.f32 %v374, %v1583
    %1585 = vdwg.mxu0
    %1586 = vmatprep.subr.bf16.mxu0 %v1188
    %1587 = vmatpush1.bf16.msra.mxu0 %v1187
    %1588 = vmatprep.subr.bf16.mxu0 %v1184
    %1589 = vmatpush1.bf16.msra.mxu0 %v1183
    %1590 = vmatprep.subr.bf16.mxu0 %v1180
    %1591 = vmatpush1.bf16.msra.mxu0 %v1179
    %1592 = vmatprep.subr.bf16.mxu0 %v1176
    %1593 = vmatpush1.bf16.msra.mxu0 %v1175
    %1594 = vmatprep.subr.bf16.mxu0 %v1172
    %1595 = vmatpush1.bf16.msra.mxu0 %v1171
    %1596 = vmatprep.subr.bf16.mxu0 %v1168
    %1597 = vmatpush1.bf16.msra.mxu0 %v1167
    %1598 = vmatprep.subr.bf16.mxu0 %v1164
    %1599 = vmatpush1.bf16.msra.mxu0 %v1163
    %1600 = vmatprep.subr.bf16.mxu0 %v1160
    %1601 = vmatpush1.bf16.msra.mxu0 %v1159
    %1602 = vmatprep.subr.bf16.mxu0 %v1220
    %1603 = vmatpush2.bf16.msra.mxu0 %v1219
    %1604 = vmatprep.subr.bf16.mxu0 %v1216
    %1605 = vmatpush2.bf16.msra.mxu0 %v1215
    %1606 = vmatprep.subr.bf16.mxu0 %v1212
    %1607 = vmatpush2.bf16.msra.mxu0 %v1211
    %1608 = vmatprep.subr.bf16.mxu0 %v1208
    %1609 = vmatpush2.bf16.msra.mxu0 %v1207
    %1610 = vmatprep.subr.bf16.mxu0 %v1204
    %1611 = vmatpush2.bf16.msra.mxu0 %v1203
    %1612 = vmatprep.subr.bf16.mxu0 %v1200
    %1613 = vmatpush2.bf16.msra.mxu0 %v1199
    %1614 = vmatprep.subr.bf16.mxu0 %v1196
    %1615 = vmatpush2.bf16.msra.mxu0 %v1195
    %1616 = vmatprep.subr.bf16.mxu0 %v1192
    %1617 = vmatpush2.bf16.msra.mxu0 %v1191
    %1618 = vmatprep.mubr.bf16.mxu0 %v412
    %1619 = vmatmul.mubr.bf16.gmra.mxu0 %v411
    %v1620 = vpop.f32.mrf.mxu0
    %v1621 = vadd.f32 %v1578, %v1620
    %v1622 = vpop.f32.mrf.mxu0
    %v1623 = vadd.f32 %v1580, %v1622
    %v1624 = vpop.f32.mrf.mxu0
    %v1625 = vadd.f32 %v1582, %v1624
    %v1626 = vpop.f32.mrf.mxu0
    %v1627 = vadd.f32 %v1584, %v1626
    %1628 = vdwg.mxu0
    %1629 = vmatprep.subr.bf16.mxu0 %v1252
    %1630 = vmatpush1.bf16.msra.mxu0 %v1251
    %1631 = vmatprep.subr.bf16.mxu0 %v1248
    %1632 = vmatpush1.bf16.msra.mxu0 %v1247
    %1633 = vmatprep.subr.bf16.mxu0 %v1244
    %1634 = vmatpush1.bf16.msra.mxu0 %v1243
    %1635 = vmatprep.subr.bf16.mxu0 %v1240
    %1636 = vmatpush1.bf16.msra.mxu0 %v1239
    %1637 = vmatprep.subr.bf16.mxu0 %v1236
    %1638 = vmatpush1.bf16.msra.mxu0 %v1235
    %1639 = vmatprep.subr.bf16.mxu0 %v1232
    %1640 = vmatpush1.bf16.msra.mxu0 %v1231
    %1641 = vmatprep.subr.bf16.mxu0 %v1228
    %1642 = vmatpush1.bf16.msra.mxu0 %v1227
    %1643 = vmatprep.subr.bf16.mxu0 %v1224
    %1644 = vmatpush1.bf16.msra.mxu0 %v1223
    %1645 = vmatprep.subr.bf16.mxu0 %v1284
    %1646 = vmatpush2.bf16.msra.mxu0 %v1283
    %1647 = vmatprep.subr.bf16.mxu0 %v1280
    %1648 = vmatpush2.bf16.msra.mxu0 %v1279
    %1649 = vmatprep.subr.bf16.mxu0 %v1276
    %1650 = vmatpush2.bf16.msra.mxu0 %v1275
    %1651 = vmatprep.subr.bf16.mxu0 %v1272
    %1652 = vmatpush2.bf16.msra.mxu0 %v1271
    %1653 = vmatprep.subr.bf16.mxu0 %v1268
    %1654 = vmatpush2.bf16.msra.mxu0 %v1267
    %1655 = vmatprep.subr.bf16.mxu0 %v1264
    %1656 = vmatpush2.bf16.msra.mxu0 %v1263
    %1657 = vmatprep.subr.bf16.mxu0 %v1260
    %1658 = vmatpush2.bf16.msra.mxu0 %v1259
    %1659 = vmatprep.subr.bf16.mxu0 %v1256
    %1660 = vmatpush2.bf16.msra.mxu0 %v1255
    %1661 = vmatprep.mubr.bf16.mxu0 %v414
    %1662 = vmatmul.mubr.bf16.gmra.mxu0 %v413
    %v1663 = vpop.f32.mrf.mxu0
    %v1664 = vadd.f32 %v1621, %v1663
    %v1665 = vpop.f32.mrf.mxu0
    %v1666 = vadd.f32 %v1623, %v1665
    %v1667 = vpop.f32.mrf.mxu0
    %v1668 = vadd.f32 %v1625, %v1667
    %v1669 = vpop.f32.mrf.mxu0
    %v1670 = vadd.f32 %v1627, %v1669
    %1671 = vdwg.mxu0
    %1672 = vmatprep.subr.bf16.mxu0 %v1316
    %1673 = vmatpush1.bf16.msra.mxu0 %v1315
    %1674 = vmatprep.subr.bf16.mxu0 %v1312
    %1675 = vmatpush1.bf16.msra.mxu0 %v1311
    %1676 = vmatprep.subr.bf16.mxu0 %v1308
    %1677 = vmatpush1.bf16.msra.mxu0 %v1307
    %1678 = vmatprep.subr.bf16.mxu0 %v1304
    %1679 = vmatpush1.bf16.msra.mxu0 %v1303
    %1680 = vmatprep.subr.bf16.mxu0 %v1300
    %1681 = vmatpush1.bf16.msra.mxu0 %v1299
    %1682 = vmatprep.subr.bf16.mxu0 %v1296
    %1683 = vmatpush1.bf16.msra.mxu0 %v1295
    %1684 = vmatprep.subr.bf16.mxu0 %v1292
    %1685 = vmatpush1.bf16.msra.mxu0 %v1291
    %1686 = vmatprep.subr.bf16.mxu0 %v1288
    %1687 = vmatpush1.bf16.msra.mxu0 %v1287
    %1688 = vmatprep.subr.bf16.mxu0 0
    %1689 = vmatpush2.bf16.msra.mxu0 0
    %1690 = vmatprep.subr.bf16.mxu0 0
    %1691 = vmatpush2.bf16.msra.mxu0 0
    %1692 = vmatprep.subr.bf16.mxu0 0
    %1693 = vmatpush2.bf16.msra.mxu0 0
    %1694 = vmatprep.subr.bf16.mxu0 0
    %1695 = vmatpush2.bf16.msra.mxu0 0
    %1696 = vmatprep.subr.bf16.mxu0 0
    %1697 = vmatpush2.bf16.msra.mxu0 0
    %1698 = vmatprep.subr.bf16.mxu0 0
    %1699 = vmatpush2.bf16.msra.mxu0 0
    %1700 = vmatprep.subr.bf16.mxu0 0
    %1701 = vmatpush2.bf16.msra.mxu0 0
    %1702 = vmatprep.subr.bf16.mxu0 0
    %1703 = vmatpush2.bf16.msra.mxu0 0
    %1704 = vmatprep.mubr.bf16.mxu0 0
    %1705 = vmatmul.mubr.bf16.gmra.mxu0 %v415
    %v1706 = vpop.f32.mrf.mxu0
    %v1707 = vadd.f32 %v1664, %v1706
    %v1708 = vpop.f32.mrf.mxu0
    %v1709 = vadd.f32 %v1666, %v1708
    %v1710 = vpop.f32.mrf.mxu0
    %v1711 = vadd.f32 %v1668, %v1710
    %v1712 = vpop.f32.mrf.mxu0
    %v1713 = vadd.f32 %v1670, %v1712
    %1714 = vdwg.mxu0
    %1715 = vmatprep.subr.bf16.mxu0 %v1126
    %1716 = vmatpush1.bf16.msra.mxu0 %v1125
    %1717 = vmatprep.subr.bf16.mxu0 %v1122
    %1718 = vmatpush1.bf16.msra.mxu0 %v1121
    %1719 = vmatprep.subr.bf16.mxu0 %v1118
    %1720 = vmatpush1.bf16.msra.mxu0 %v1117
    %1721 = vmatprep.subr.bf16.mxu0 %v1114
    %1722 = vmatpush1.bf16.msra.mxu0 %v1113
    %1723 = vmatprep.subr.bf16.mxu0 %v1110
    %1724 = vmatpush1.bf16.msra.mxu0 %v1109
    %1725 = vmatprep.subr.bf16.mxu0 %v1106
    %1726 = vmatpush1.bf16.msra.mxu0 %v1105
    %1727 = vmatprep.subr.bf16.mxu0 %v1102
    %1728 = vmatpush1.bf16.msra.mxu0 %v1101
    %1729 = vmatprep.subr.bf16.mxu0 %v1098
    %1730 = vmatpush1.bf16.msra.mxu0 %v1097
    %1731 = vmatprep.subr.bf16.mxu0 %v1158
    %1732 = vmatpush2.bf16.msra.mxu0 %v1157
    %1733 = vmatprep.subr.bf16.mxu0 %v1154
    %1734 = vmatpush2.bf16.msra.mxu0 %v1153
    %1735 = vmatprep.subr.bf16.mxu0 %v1150
    %1736 = vmatpush2.bf16.msra.mxu0 %v1149
    %1737 = vmatprep.subr.bf16.mxu0 %v1146
    %1738 = vmatpush2.bf16.msra.mxu0 %v1145
    %1739 = vmatprep.subr.bf16.mxu0 %v1142
    %1740 = vmatpush2.bf16.msra.mxu0 %v1141
    %1741 = vmatprep.subr.bf16.mxu0 %v1138
    %1742 = vmatpush2.bf16.msra.mxu0 %v1137
    %1743 = vmatprep.subr.bf16.mxu0 %v1134
    %1744 = vmatpush2.bf16.msra.mxu0 %v1133
    %1745 = vmatprep.subr.bf16.mxu0 %v1130
    %1746 = vmatpush2.bf16.msra.mxu0 %v1129
    %1747 = vmatprep.mubr.bf16.mxu0 %v410
    %1748 = vmatmul.mubr.bf16.gmra.mxu0 %v409
    %v1749 = vpop.f32.mrf.mxu0
    %v1750 = vadd.f32 %v378, %v1749
    %v1751 = vpop.f32.mrf.mxu0
    %v1752 = vadd.f32 %v382, %v1751
    %v1753 = vpop.f32.mrf.mxu0
    %v1754 = vadd.f32 %v378, %v1753
    %v1755 = vpop.f32.mrf.mxu0
    %v1756 = vadd.f32 %v382, %v1755
    %1757 = vdwg.mxu0
    %1758 = vmatprep.subr.bf16.mxu0 %v1190
    %1759 = vmatpush1.bf16.msra.mxu0 %v1189
    %1760 = vmatprep.subr.bf16.mxu0 %v1186
    %1761 = vmatpush1.bf16.msra.mxu0 %v1185
    %1762 = vmatprep.subr.bf16.mxu0 %v1182
    %1763 = vmatpush1.bf16.msra.mxu0 %v1181
    %1764 = vmatprep.subr.bf16.mxu0 %v1178
    %1765 = vmatpush1.bf16.msra.mxu0 %v1177
    %1766 = vmatprep.subr.bf16.mxu0 %v1174
    %1767 = vmatpush1.bf16.msra.mxu0 %v1173
    %1768 = vmatprep.subr.bf16.mxu0 %v1170
    %1769 = vmatpush1.bf16.msra.mxu0 %v1169
    %1770 = vmatprep.subr.bf16.mxu0 %v1166
    %1771 = vmatpush1.bf16.msra.mxu0 %v1165
    %1772 = vmatprep.subr.bf16.mxu0 %v1162
    %1773 = vmatpush1.bf16.msra.mxu0 %v1161
    %1774 = vmatprep.subr.bf16.mxu0 %v1222
    %1775 = vmatpush2.bf16.msra.mxu0 %v1221
    %1776 = vmatprep.subr.bf16.mxu0 %v1218
    %1777 = vmatpush2.bf16.msra.mxu0 %v1217
    %1778 = vmatprep.subr.bf16.mxu0 %v1214
    %1779 = vmatpush2.bf16.msra.mxu0 %v1213
    %1780 = vmatprep.subr.bf16.mxu0 %v1210
    %1781 = vmatpush2.bf16.msra.mxu0 %v1209
    %1782 = vmatprep.subr.bf16.mxu0 %v1206
    %1783 = vmatpush2.bf16.msra.mxu0 %v1205
    %1784 = vmatprep.subr.bf16.mxu0 %v1202
    %1785 = vmatpush2.bf16.msra.mxu0 %v1201
    %1786 = vmatprep.subr.bf16.mxu0 %v1198
    %1787 = vmatpush2.bf16.msra.mxu0 %v1197
    %1788 = vmatprep.subr.bf16.mxu0 %v1194
    %1789 = vmatpush2.bf16.msra.mxu0 %v1193
    %1790 = vmatprep.mubr.bf16.mxu0 %v412
    %1791 = vmatmul.mubr.bf16.gmra.mxu0 %v411
    %v1792 = vpop.f32.mrf.mxu0
    %v1793 = vadd.f32 %v1750, %v1792
    %v1794 = vpop.f32.mrf.mxu0
    %v1795 = vadd.f32 %v1752, %v1794
    %v1796 = vpop.f32.mrf.mxu0
    %v1797 = vadd.f32 %v1754, %v1796
    %v1798 = vpop.f32.mrf.mxu0
    %v1799 = vadd.f32 %v1756, %v1798
    %1800 = vdwg.mxu0
    %1801 = vmatprep.subr.bf16.mxu0 %v1254
    %1802 = vmatpush1.bf16.msra.mxu0 %v1253
    %1803 = vmatprep.subr.bf16.mxu0 %v1250
    %1804 = vmatpush1.bf16.msra.mxu0 %v1249
    %1805 = vmatprep.subr.bf16.mxu0 %v1246
    %1806 = vmatpush1.bf16.msra.mxu0 %v1245
    %1807 = vmatprep.subr.bf16.mxu0 %v1242
    %1808 = vmatpush1.bf16.msra.mxu0 %v1241
    %1809 = vmatprep.subr.bf16.mxu0 %v1238
    %1810 = vmatpush1.bf16.msra.mxu0 %v1237
    %1811 = vmatprep.subr.bf16.mxu0 %v1234
    %1812 = vmatpush1.bf16.msra.mxu0 %v1233
    %1813 = vmatprep.subr.bf16.mxu0 %v1230
    %1814 = vmatpush1.bf16.msra.mxu0 %v1229
    %1815 = vmatprep.subr.bf16.mxu0 %v1226
    %1816 = vmatpush1.bf16.msra.mxu0 %v1225
    %1817 = vmatprep.subr.bf16.mxu0 %v1286
    %1818 = vmatpush2.bf16.msra.mxu0 %v1285
    %1819 = vmatprep.subr.bf16.mxu0 %v1282
    %1820 = vmatpush2.bf16.msra.mxu0 %v1281
    %1821 = vmatprep.subr.bf16.mxu0 %v1278
    %1822 = vmatpush2.bf16.msra.mxu0 %v1277
    %1823 = vmatprep.subr.bf16.mxu0 %v1274
    %1824 = vmatpush2.bf16.msra.mxu0 %v1273
    %1825 = vmatprep.subr.bf16.mxu0 %v1270
    %1826 = vmatpush2.bf16.msra.mxu0 %v1269
    %1827 = vmatprep.subr.bf16.mxu0 %v1266
    %1828 = vmatpush2.bf16.msra.mxu0 %v1265
    %1829 = vmatprep.subr.bf16.mxu0 %v1262
    %1830 = vmatpush2.bf16.msra.mxu0 %v1261
    %1831 = vmatprep.subr.bf16.mxu0 %v1258
    %1832 = vmatpush2.bf16.msra.mxu0 %v1257
    %1833 = vmatprep.mubr.bf16.mxu0 %v414
    %1834 = vmatmul.mubr.bf16.gmra.mxu0 %v413
    %v1835 = vpop.f32.mrf.mxu0
    %v1836 = vadd.f32 %v1793, %v1835
    %v1837 = vpop.f32.mrf.mxu0
    %v1838 = vadd.f32 %v1795, %v1837
    %v1839 = vpop.f32.mrf.mxu0
    %v1840 = vadd.f32 %v1797, %v1839
    %v1841 = vpop.f32.mrf.mxu0
    %v1842 = vadd.f32 %v1799, %v1841
    %1843 = vdwg.mxu0
    %1844 = vmatprep.subr.bf16.mxu0 %v1318
    %1845 = vmatpush1.bf16.msra.mxu0 %v1317
    %1846 = vmatprep.subr.bf16.mxu0 %v1314
    %1847 = vmatpush1.bf16.msra.mxu0 %v1313
    %1848 = vmatprep.subr.bf16.mxu0 %v1310
    %1849 = vmatpush1.bf16.msra.mxu0 %v1309
    %1850 = vmatprep.subr.bf16.mxu0 %v1306
    %1851 = vmatpush1.bf16.msra.mxu0 %v1305
    %1852 = vmatprep.subr.bf16.mxu0 %v1302
    %1853 = vmatpush1.bf16.msra.mxu0 %v1301
    %1854 = vmatprep.subr.bf16.mxu0 %v1298
    %1855 = vmatpush1.bf16.msra.mxu0 %v1297
    %1856 = vmatprep.subr.bf16.mxu0 %v1294
    %1857 = vmatpush1.bf16.msra.mxu0 %v1293
    %1858 = vmatprep.subr.bf16.mxu0 %v1290
    %1859 = vmatpush1.bf16.msra.mxu0 %v1289
    %1860 = vmatprep.subr.bf16.mxu0 0
    %1861 = vmatpush2.bf16.msra.mxu0 0
    %1862 = vmatprep.subr.bf16.mxu0 0
    %1863 = vmatpush2.bf16.msra.mxu0 0
    %1864 = vmatprep.subr.bf16.mxu0 0
    %1865 = vmatpush2.bf16.msra.mxu0 0
    %1866 = vmatprep.subr.bf16.mxu0 0
    %1867 = vmatpush2.bf16.msra.mxu0 0
    %1868 = vmatprep.subr.bf16.mxu0 0
    %1869 = vmatpush2.bf16.msra.mxu0 0
    %1870 = vmatprep.subr.bf16.mxu0 0
    %1871 = vmatpush2.bf16.msra.mxu0 0
    %1872 = vmatprep.subr.bf16.mxu0 0
    %1873 = vmatpush2.bf16.msra.mxu0 0
    %1874 = vmatprep.subr.bf16.mxu0 0
    %1875 = vmatpush2.bf16.msra.mxu0 0
    %1876 = vmatprep.mubr.bf16.mxu0 0
    %1877 = vmatmul.mubr.bf16.gmra.mxu0 %v415
    %v1878 = vpop.f32.mrf.mxu0
    %v1879 = vadd.f32 %v1836, %v1878
    %v1880 = vpop.f32.mrf.mxu0
    %v1881 = vadd.f32 %v1838, %v1880
    %v1882 = vpop.f32.mrf.mxu0
    %v1883 = vadd.f32 %v1840, %v1882
    %v1884 = vpop.f32.mrf.mxu0
    %v1885 = vadd.f32 %v1842, %v1884
    %1886 = vdwg.mxu0
    %v1887 = vmax.f32 %v1707, 0.0
    %v1888 = vmax.f32 %v1709, 0.0
    %v1889 = vmax.f32 %v1879, 0.0
    %v1890 = vmax.f32 %v1881, 0.0
    %v1891 = vmax.f32 %v1711, 0.0
    %v1892 = vmax.f32 %v1713, 0.0
    %v1893 = vmax.f32 %v1883, 0.0
    %v1894 = vmax.f32 %v1885, 0.0
    %v1895 = vpack.c.bf16 %v1891, %v1887
    %v1896 = vpack.c.bf16 %v1892, %v1888
    %v1897 = vpack.c.bf16 %v1893, %v1889
    %v1898 = vpack.c.bf16 %v1894, %v1890
    %v1899 = vld [vmem:[#allocation8] sm:$0xf]
    %v1900 = vld [vmem:[#allocation8 + $0x4] sm:$0xf]
    %v1901 = vld [vmem:[#allocation8 + $0x8] sm:$0xf]
    %v1902 = vld [vmem:[#allocation8 + $0xc] sm:$0xf]
    %v1903 = vld [vmem:[#allocation8 + $0x10] sm:$0xf]
    %v1904 = vld [vmem:[#allocation8 + $0x14] sm:$0xf]
    %v1905 = vld [vmem:[#allocation8 + $0x18] sm:$0xf]
    %v1906 = vld [vmem:[#allocation8 + $0x1c] sm:$0xf]
    %v1907 = vld [vmem:[#allocation8 + $0x20] sm:$0xf]
    %v1908 = vld [vmem:[#allocation8 + $0x24] sm:$0xf]
    %v1909 = vld [vmem:[#allocation8 + $0x28] sm:$0xf]
    %v1910 = vld [vmem:[#allocation8 + $0x2c] sm:$0xf]
    %v1911 = vld [vmem:[#allocation8 + $0x30] sm:$0xf]
    %v1912 = vld [vmem:[#allocation8 + $0x34] sm:$0xf]
    %v1913 = vld [vmem:[#allocation8 + $0x38] sm:$0xf]
    %v1914 = vld [vmem:[#allocation8 + $0x3c] sm:$0xf]
    %v1915 = vld [vmem:[#allocation8 + $0x40] sm:$0xf]
    %v1916 = vld [vmem:[#allocation8 + $0x44] sm:$0xf]
    %v1917 = vld [vmem:[#allocation8 + $0x48] sm:$0xf]
    %v1918 = vld [vmem:[#allocation8 + $0x4c] sm:$0xf]
    %v1919 = vld [vmem:[#allocation8 + $0x50] sm:$0xf]
    %v1920 = vld [vmem:[#allocation8 + $0x54] sm:$0xf]
    %v1921 = vld [vmem:[#allocation8 + $0x58] sm:$0xf]
    %v1922 = vld [vmem:[#allocation8 + $0x5c] sm:$0xf]
    %v1923 = vld [vmem:[#allocation8 + $0x60] sm:$0xf]
    %v1924 = vld [vmem:[#allocation8 + $0x64] sm:$0xf]
    %v1925 = vld [vmem:[#allocation8 + $0x68] sm:$0xf]
    %v1926 = vld [vmem:[#allocation8 + $0x6c] sm:$0xf]
    %v1927 = vld [vmem:[#allocation8 + $0x70] sm:$0xf]
    %v1928 = vld [vmem:[#allocation8 + $0x74] sm:$0xf]
    %v1929 = vld [vmem:[#allocation8 + $0x78] sm:$0xf]
    %v1930 = vld [vmem:[#allocation8 + $0x7c] sm:$0xf]
    %v1931 = vld [vmem:[#allocation8 + $0x80] sm:$0xf]
    %v1932 = vld [vmem:[#allocation8 + $0x84] sm:$0xf]
    %v1933 = vld [vmem:[#allocation8 + $0x88] sm:$0xf]
    %v1934 = vld [vmem:[#allocation8 + $0x8c] sm:$0xf]
    %v1935 = vld [vmem:[#allocation8 + $0x90] sm:$0xf]
    %v1936 = vld [vmem:[#allocation8 + $0x94] sm:$0xf]
    %v1937 = vld [vmem:[#allocation8 + $0x98] sm:$0xf]
    %v1938 = vld [vmem:[#allocation8 + $0x9c] sm:$0xf]
    %v1939 = vld [vmem:[#allocation8 + $0xa0] sm:$0xf]
    %v1940 = vld [vmem:[#allocation8 + $0xa4] sm:$0xf]
    %v1941 = vld [vmem:[#allocation8 + $0xa8] sm:$0xf]
    %v1942 = vld [vmem:[#allocation8 + $0xac] sm:$0xf]
    %v1943 = vld [vmem:[#allocation8 + $0xb0] sm:$0xf]
    %v1944 = vld [vmem:[#allocation8 + $0xb4] sm:$0xf]
    %v1945 = vld [vmem:[#allocation8 + $0xb8] sm:$0xf]
    %v1946 = vld [vmem:[#allocation8 + $0xbc] sm:$0xf]
    %v1947 = vld [vmem:[#allocation8 + $0xc0] sm:$0xf]
    %v1948 = vld [vmem:[#allocation8 + $0xc4] sm:$0xf]
    %v1949 = vld [vmem:[#allocation8 + $0xc8] sm:$0xf]
    %v1950 = vld [vmem:[#allocation8 + $0xcc] sm:$0xf]
    %v1951 = vld [vmem:[#allocation8 + $0xd0] sm:$0xf]
    %v1952 = vld [vmem:[#allocation8 + $0xd4] sm:$0xf]
    %v1953 = vld [vmem:[#allocation8 + $0xd8] sm:$0xf]
    %v1954 = vld [vmem:[#allocation8 + $0xdc] sm:$0xf]
    %v1955 = vld [vmem:[#allocation8 + $0xe0] sm:$0xf]
    %v1956 = vld [vmem:[#allocation8 + $0xe4] sm:$0xf]
    %v1957 = vld [vmem:[#allocation8 + $0xe8] sm:$0xf]
    %v1958 = vld [vmem:[#allocation8 + $0xec] sm:$0xf]
    %v1959 = vld [vmem:[#allocation8 + $0xf0] sm:$0xf]
    %v1960 = vld [vmem:[#allocation8 + $0xf4] sm:$0xf]
    %v1961 = vld [vmem:[#allocation8 + $0xf8] sm:$0xf]
    %v1962 = vld [vmem:[#allocation8 + $0xfc] sm:$0xf]
    %v1963 = vld [vmem:[%s5] sm:$0x1]
    %v1965 = vlaneseq
    %v1966 = vshrl.u32 %v1965, 7
    %v1967 = vsub.s32 0, %v1966
    %v1968 = vrot.slane %v1963, %v1967
    %v2034 = vunpack.c.l.b16 %v1899
    %v2035 = vunpack.c.l.b16 %v1900
    %v2036 = vunpack.c.l.b16 %v1901
    %v2037 = vunpack.c.l.b16 %v1902
    %v2038 = vunpack.c.l.b16 %v1903
    %v2039 = vunpack.c.l.b16 %v1904
    %v2040 = vunpack.c.l.b16 %v1905
    %v2041 = vunpack.c.l.b16 %v1906
    %v2042 = vunpack.c.l.b16 %v1907
    %v2043 = vunpack.c.l.b16 %v1908
    %v2044 = vunpack.c.l.b16 %v1909
    %v2045 = vunpack.c.l.b16 %v1910
    %v2046 = vunpack.c.l.b16 %v1911
    %v2047 = vunpack.c.l.b16 %v1912
    %v2048 = vunpack.c.l.b16 %v1913
    %v2049 = vunpack.c.l.b16 %v1914
    %v2050 = vunpack.c.l.b16 %v1915
    %v2051 = vunpack.c.l.b16 %v1916
    %v2052 = vunpack.c.l.b16 %v1917
    %v2053 = vunpack.c.l.b16 %v1918
    %v2054 = vunpack.c.l.b16 %v1919
    %v2055 = vunpack.c.l.b16 %v1920
    %v2056 = vunpack.c.l.b16 %v1921
    %v2057 = vunpack.c.l.b16 %v1922
    %v2058 = vunpack.c.l.b16 %v1923
    %v2059 = vunpack.c.l.b16 %v1924
    %v2060 = vunpack.c.l.b16 %v1925
    %v2061 = vunpack.c.l.b16 %v1926
    %v2062 = vunpack.c.l.b16 %v1927
    %v2063 = vunpack.c.l.b16 %v1928
    %v2064 = vunpack.c.l.b16 %v1929
    %v2065 = vunpack.c.l.b16 %v1930
    %v2066 = vunpack.c.l.b16 %v1931
    %v2067 = vunpack.c.l.b16 %v1932
    %v2068 = vunpack.c.l.b16 %v1933
    %v2069 = vunpack.c.l.b16 %v1934
    %v2070 = vunpack.c.l.b16 %v1935
    %v2071 = vunpack.c.l.b16 %v1936
    %v2072 = vunpack.c.l.b16 %v1937
    %v2073 = vunpack.c.l.b16 %v1938
    %v2074 = vunpack.c.l.b16 %v1939
    %v2075 = vunpack.c.l.b16 %v1940
    %v2076 = vunpack.c.l.b16 %v1941
    %v2077 = vunpack.c.l.b16 %v1942
    %v2078 = vunpack.c.l.b16 %v1943
    %v2079 = vunpack.c.l.b16 %v1944
    %v2080 = vunpack.c.l.b16 %v1945
    %v2081 = vunpack.c.l.b16 %v1946
    %v2082 = vunpack.c.l.b16 %v1947
    %v2083 = vunpack.c.l.b16 %v1948
    %v2084 = vunpack.c.l.b16 %v1949
    %v2085 = vunpack.c.l.b16 %v1950
    %v2086 = vunpack.c.l.b16 %v1951
    %v2087 = vunpack.c.l.b16 %v1952
    %v2088 = vunpack.c.l.b16 %v1953
    %v2089 = vunpack.c.l.b16 %v1954
    %v2090 = vunpack.c.l.b16 %v1955
    %v2091 = vunpack.c.l.b16 %v1956
    %v2092 = vunpack.c.l.b16 %v1957
    %v2093 = vunpack.c.l.b16 %v1958
    %v2094 = vunpack.c.l.b16 %v1959
    %v2095 = vunpack.c.l.b16 %v1960
    %v2096 = vunpack.c.l.b16 %v1961
    %v2097 = vunpack.c.l.b16 %v1962
    %v2098 = vpack.c.b16 %v2035, %v2034
    %v2099 = vpack.c.b16 %v2037, %v2036
    %v2100 = vpack.c.b16 %v2039, %v2038
    %v2101 = vpack.c.b16 %v2041, %v2040
    %v2102 = vpack.c.b16 %v2043, %v2042
    %v2103 = vpack.c.b16 %v2045, %v2044
    %v2104 = vpack.c.b16 %v2047, %v2046
    %v2105 = vpack.c.b16 %v2049, %v2048
    %v2106 = vpack.c.b16 %v2051, %v2050
    %v2107 = vpack.c.b16 %v2053, %v2052
    %v2108 = vpack.c.b16 %v2055, %v2054
    %v2109 = vpack.c.b16 %v2057, %v2056
    %v2110 = vpack.c.b16 %v2059, %v2058
    %v2111 = vpack.c.b16 %v2061, %v2060
    %v2112 = vpack.c.b16 %v2063, %v2062
    %v2113 = vpack.c.b16 %v2065, %v2064
    %v2114 = vpack.c.b16 %v2067, %v2066
    %v2115 = vpack.c.b16 %v2069, %v2068
    %v2116 = vpack.c.b16 %v2071, %v2070
    %v2117 = vpack.c.b16 %v2073, %v2072
    %v2118 = vpack.c.b16 %v2075, %v2074
    %v2119 = vpack.c.b16 %v2077, %v2076
    %v2120 = vpack.c.b16 %v2079, %v2078
    %v2121 = vpack.c.b16 %v2081, %v2080
    %v2122 = vpack.c.b16 %v2083, %v2082
    %v2123 = vpack.c.b16 %v2085, %v2084
    %v2124 = vpack.c.b16 %v2087, %v2086
    %v2125 = vpack.c.b16 %v2089, %v2088
    %v2126 = vpack.c.b16 %v2091, %v2090
    %v2127 = vpack.c.b16 %v2093, %v2092
    %v2128 = vpack.c.b16 %v2095, %v2094
    %v2129 = vpack.c.b16 %v2097, %v2096
    %2162 = vmatprep.subr.bf16.mxu0 0
    %2163 = vmatpush1.bf16.msra.mxu0 %v2105
    %2164 = vmatprep.subr.bf16.mxu0 0
    %2165 = vmatpush1.bf16.msra.mxu0 %v2104
    %2166 = vmatprep.subr.bf16.mxu0 0
    %2167 = vmatpush1.bf16.msra.mxu0 %v2103
    %2168 = vmatprep.subr.bf16.mxu0 0
    %2169 = vmatpush1.bf16.msra.mxu0 %v2102
    %2170 = vmatprep.subr.bf16.mxu0 0
    %2171 = vmatpush1.bf16.msra.mxu0 %v2101
    %2172 = vmatprep.subr.bf16.mxu0 0
    %2173 = vmatpush1.bf16.msra.mxu0 %v2100
    %2174 = vmatprep.subr.bf16.mxu0 0
    %2175 = vmatpush1.bf16.msra.mxu0 %v2099
    %2176 = vmatprep.subr.bf16.mxu0 0
    %2177 = vmatpush1.bf16.msra.mxu0 %v2098
    %2178 = vmatprep.subr.bf16.mxu0 0
    %2179 = vmatpush2.bf16.msra.mxu0 %v2113
    %2180 = vmatprep.subr.bf16.mxu0 0
    %2181 = vmatpush2.bf16.msra.mxu0 %v2112
    %2182 = vmatprep.subr.bf16.mxu0 0
    %2183 = vmatpush2.bf16.msra.mxu0 %v2111
    %2184 = vmatprep.subr.bf16.mxu0 0
    %2185 = vmatpush2.bf16.msra.mxu0 %v2110
    %2186 = vmatprep.subr.bf16.mxu0 0
    %2187 = vmatpush2.bf16.msra.mxu0 %v2109
    %2188 = vmatprep.subr.bf16.mxu0 0
    %2189 = vmatpush2.bf16.msra.mxu0 %v2108
    %2190 = vmatprep.subr.bf16.mxu0 0
    %2191 = vmatpush2.bf16.msra.mxu0 %v2107
    %2192 = vmatprep.subr.bf16.mxu0 0
    %2193 = vmatpush2.bf16.msra.mxu0 %v2106
    %2194 = vmatprep.mubr.bf16.mxu0 %v1896
    %2195 = vmatmul.mubr.bf16.gmra.mxu0 %v1895
    %v2196 = vpop.f32.mrf.mxu0
    %v2197 = vadd.f32 %v1968, %v2196
    %v2198 = vpop.f32.mrf.mxu0
    %v2199 = vpop.f32.mrf.mxu0
    %v2200 = vadd.f32 %v1968, %v2199
    %v2201 = vpop.f32.mrf.mxu0
    %2202 = vdwg.mxu0
    %2203 = vmatprep.subr.bf16.mxu0 0
    %2204 = vmatpush1.bf16.msra.mxu0 %v2121
    %2205 = vmatprep.subr.bf16.mxu0 0
    %2206 = vmatpush1.bf16.msra.mxu0 %v2120
    %2207 = vmatprep.subr.bf16.mxu0 0
    %2208 = vmatpush1.bf16.msra.mxu0 %v2119
    %2209 = vmatprep.subr.bf16.mxu0 0
    %2210 = vmatpush1.bf16.msra.mxu0 %v2118
    %2211 = vmatprep.subr.bf16.mxu0 0
    %2212 = vmatpush1.bf16.msra.mxu0 %v2117
    %2213 = vmatprep.subr.bf16.mxu0 0
    %2214 = vmatpush1.bf16.msra.mxu0 %v2116
    %2215 = vmatprep.subr.bf16.mxu0 0
    %2216 = vmatpush1.bf16.msra.mxu0 %v2115
    %2217 = vmatprep.subr.bf16.mxu0 0
    %2218 = vmatpush1.bf16.msra.mxu0 %v2114
    %2219 = vmatprep.subr.bf16.mxu0 0
    %2220 = vmatpush2.bf16.msra.mxu0 %v2129
    %2221 = vmatprep.subr.bf16.mxu0 0
    %2222 = vmatpush2.bf16.msra.mxu0 %v2128
    %2223 = vmatprep.subr.bf16.mxu0 0
    %2224 = vmatpush2.bf16.msra.mxu0 %v2127
    %2225 = vmatprep.subr.bf16.mxu0 0
    %2226 = vmatpush2.bf16.msra.mxu0 %v2126
    %2227 = vmatprep.subr.bf16.mxu0 0
    %2228 = vmatpush2.bf16.msra.mxu0 %v2125
    %2229 = vmatprep.subr.bf16.mxu0 0
    %2230 = vmatpush2.bf16.msra.mxu0 %v2124
    %2231 = vmatprep.subr.bf16.mxu0 0
    %2232 = vmatpush2.bf16.msra.mxu0 %v2123
    %2233 = vmatprep.subr.bf16.mxu0 0
    %2234 = vmatpush2.bf16.msra.mxu0 %v2122
    %2235 = vmatprep.mubr.bf16.mxu0 %v1898
    %2236 = vmatmul.mubr.bf16.gmra.mxu0 %v1897
    %v2237 = vpop.f32.mrf.mxu0
    %v2238 = vadd.f32 %v2197, %v2237
    %v2239 = vpop.f32.mrf.mxu0
    %v2240 = vpop.f32.mrf.mxu0
    %v2241 = vadd.f32 %v2200, %v2240
    %v2242 = vpop.f32.mrf.mxu0
    %2243 = vdwg.mxu0
    %2244 = vst [vmem:[#allocation15] sm:$0xff] %v2238
    %2245 = vst [vmem:[#allocation15 + $0x8] sm:$0xff] %v2241
    %v2246 = vlaneseq
    %v2247 = vand.u32 %v2246, 127
    %v2248 = vmul.f32 %v2238, 0.5
    %v2249 = vmul.f32 %v2241, 0.5
    %v2250 = vmul.f32 %v2248, 1.442695
    %v2251 = vpow.pop %v2250
    %v2252 = vmul.f32 %v2249, 1.442695
    %v2253 = vpow.pop %v2252
    %v2254 = vld [vmem:[#allocation5] sm:$0xf]
    %v2255 = vld [vmem:[#allocation5 + $0x4] sm:$0xf]
    %v2256 = vunpack.c.l.bf16 %v2254
    %v2257 = vunpack.c.l.bf16 %v2255
    %v2258 = vmul.f32 %v2251, %v2256
    %v2259 = vmul.f32 %v2253, %v2257
    %vm2260 = vcmp.lt.s32.totalorder %v2247, 20
    %v2261 = vsel %vm2260, %v2238, %v2258
    %v2262 = vsel %vm2260, %v2241, %v2259
    %v2263 = vpack.c.bf16 %v2262, %v2261
    %v2264 = vld [vmem:[#allocation10] sm:$0xff]
    %v2265 = vld [vmem:[#allocation10 + $0x8] sm:$0xff]
    %v2266 = vld [vmem:[#allocation10 + $0x10] sm:$0xff]
    %v2267 = vld [vmem:[#allocation10 + $0x18] sm:$0xff]
    %v2268 = vld [vmem:[#allocation10 + $0x20] sm:$0xff]
    %v2269 = vld [vmem:[#allocation10 + $0x28] sm:$0xff]
    %v2270 = vld [vmem:[#allocation10 + $0x30] sm:$0xff]
    %v2271 = vld [vmem:[#allocation10 + $0x38] sm:$0xff]
    %v2272 = vld [vmem:[#allocation10 + $0x40] sm:$0xff]
    %v2273 = vld [vmem:[#allocation10 + $0x48] sm:$0xff]
    %v2274 = vld [vmem:[#allocation10 + $0x50] sm:$0xff]
    %v2275 = vld [vmem:[#allocation10 + $0x58] sm:$0xff]
    %v2276 = vld [vmem:[#allocation10 + $0x60] sm:$0xff]
    %v2277 = vld [vmem:[#allocation10 + $0x68] sm:$0xff]
    %v2278 = vld [vmem:[#allocation10 + $0x70] sm:$0xff]
    %v2279 = vld [vmem:[#allocation10 + $0x78] sm:$0xff]
    %v2280 = vld [vmem:[#allocation10 + $0x80] sm:$0xff]
    %v2281 = vld [vmem:[#allocation10 + $0x88] sm:$0xff]
    %v2282 = vld [vmem:[#allocation10 + $0x90] sm:$0xff]
    %v2283 = vld [vmem:[#allocation10 + $0x98] sm:$0xff]
    %v2284 = vld [vmem:[#allocation10 + $0xa0] sm:$0xff]
    %v2285 = vld [vmem:[#allocation10 + $0xa8] sm:$0xff]
    %v2286 = vld [vmem:[#allocation10 + $0xb0] sm:$0xff]
    %v2287 = vld [vmem:[#allocation10 + $0xb8] sm:$0xff]
    %v2288 = vld [vmem:[#allocation10 + $0xc0] sm:$0xff]
    %v2289 = vld [vmem:[#allocation10 + $0xc8] sm:$0xff]
    %v2290 = vld [vmem:[#allocation10 + $0xd0] sm:$0xff]
    %v2291 = vld [vmem:[#allocation10 + $0xd8] sm:$0xff]
    %v2292 = vld [vmem:[#allocation10 + $0xe0] sm:$0xff]
    %v2293 = vld [vmem:[#allocation10 + $0xe8] sm:$0xff]
    %v2294 = vld [vmem:[#allocation10 + $0xf0] sm:$0xff]
    %v2295 = vld [vmem:[#allocation10 + $0xf8] sm:$0xff]
    %v2296 = vld [vmem:[#allocation11] sm:$0xf]
    %v2298 = vlaneseq
    %v2299 = vshrl.u32 %v2298, 7
    %v2300 = vsub.s32 0, %v2299
    %v2301 = vrot.slane %v2296, %v2300
    %v2302 = vlaneseq
    %v2303 = vshrl.u32 %v2302, 7
    %v2304 = vsub.s32 1, %v2303
    %v2305 = vrot.slane %v2296, %v2304
    %v2306 = vlaneseq
    %v2307 = vshrl.u32 %v2306, 7
    %v2308 = vsub.s32 2, %v2307
    %v2309 = vrot.slane %v2296, %v2308
    %v2310 = vlaneseq
    %v2311 = vshrl.u32 %v2310, 7
    %v2312 = vsub.s32 3, %v2311
    %v2313 = vrot.slane %v2296, %v2312
    %v2350 = vunpack.c.l.b16 %v2264
    %v2351 = vunpack.c.h.b16 %v2264
    %v2352 = vunpack.c.l.b16 %v2265
    %v2353 = vunpack.c.h.b16 %v2265
    %v2354 = vunpack.c.l.b16 %v2266
    %v2355 = vunpack.c.h.b16 %v2266
    %v2356 = vunpack.c.l.b16 %v2267
    %v2357 = vunpack.c.h.b16 %v2267
    %v2358 = vunpack.c.l.b16 %v2268
    %v2359 = vunpack.c.h.b16 %v2268
    %v2360 = vunpack.c.l.b16 %v2269
    %v2361 = vunpack.c.h.b16 %v2269
    %v2362 = vunpack.c.l.b16 %v2270
    %v2363 = vunpack.c.h.b16 %v2270
    %v2364 = vunpack.c.l.b16 %v2271
    %v2365 = vunpack.c.h.b16 %v2271
    %v2366 = vunpack.c.l.b16 %v2272
    %v2367 = vunpack.c.h.b16 %v2272
    %v2368 = vunpack.c.l.b16 %v2273
    %v2369 = vunpack.c.h.b16 %v2273
    %v2370 = vunpack.c.l.b16 %v2274
    %v2371 = vunpack.c.h.b16 %v2274
    %v2372 = vunpack.c.l.b16 %v2275
    %v2373 = vunpack.c.h.b16 %v2275
    %v2374 = vunpack.c.l.b16 %v2276
    %v2375 = vunpack.c.h.b16 %v2276
    %v2376 = vunpack.c.l.b16 %v2277
    %v2377 = vunpack.c.h.b16 %v2277
    %v2378 = vunpack.c.l.b16 %v2278
    %v2379 = vunpack.c.h.b16 %v2278
    %v2380 = vunpack.c.l.b16 %v2279
    %v2381 = vunpack.c.h.b16 %v2279
    %v2382 = vunpack.c.l.b16 %v2280
    %v2383 = vunpack.c.h.b16 %v2280
    %v2384 = vunpack.c.l.b16 %v2281
    %v2385 = vunpack.c.h.b16 %v2281
    %v2386 = vunpack.c.l.b16 %v2282
    %v2387 = vunpack.c.h.b16 %v2282
    %v2388 = vunpack.c.l.b16 %v2283
    %v2389 = vunpack.c.h.b16 %v2283
    %v2390 = vunpack.c.l.b16 %v2284
    %v2391 = vunpack.c.h.b16 %v2284
    %v2392 = vunpack.c.l.b16 %v2285
    %v2393 = vunpack.c.h.b16 %v2285
    %v2394 = vunpack.c.l.b16 %v2286
    %v2395 = vunpack.c.h.b16 %v2286
    %v2396 = vunpack.c.l.b16 %v2287
    %v2397 = vunpack.c.h.b16 %v2287
    %v2398 = vunpack.c.l.b16 %v2288
    %v2399 = vunpack.c.h.b16 %v2288
    %v2400 = vunpack.c.l.b16 %v2289
    %v2401 = vunpack.c.h.b16 %v2289
    %v2402 = vunpack.c.l.b16 %v2290
    %v2403 = vunpack.c.h.b16 %v2290
    %v2404 = vunpack.c.l.b16 %v2291
    %v2405 = vunpack.c.h.b16 %v2291
    %v2406 = vunpack.c.l.b16 %v2292
    %v2407 = vunpack.c.h.b16 %v2292
    %v2408 = vunpack.c.l.b16 %v2293
    %v2409 = vunpack.c.h.b16 %v2293
    %v2410 = vunpack.c.l.b16 %v2294
    %v2411 = vunpack.c.h.b16 %v2294
    %v2412 = vunpack.c.l.b16 %v2295
    %v2413 = vunpack.c.h.b16 %v2295
    %v2414 = vpack.c.b16 %v2354, %v2350
    %v2415 = vpack.c.b16 %v2355, %v2351
    %v2416 = vpack.c.b16 %v2356, %v2352
    %v2417 = vpack.c.b16 %v2357, %v2353
    %v2418 = vpack.c.b16 %v2362, %v2358
    %v2419 = vpack.c.b16 %v2363, %v2359
    %v2420 = vpack.c.b16 %v2364, %v2360
    %v2421 = vpack.c.b16 %v2365, %v2361
    %v2422 = vpack.c.b16 %v2370, %v2366
    %v2423 = vpack.c.b16 %v2371, %v2367
    %v2424 = vpack.c.b16 %v2372, %v2368
    %v2425 = vpack.c.b16 %v2373, %v2369
    %v2426 = vpack.c.b16 %v2378, %v2374
    %v2427 = vpack.c.b16 %v2379, %v2375
    %v2428 = vpack.c.b16 %v2380, %v2376
    %v2429 = vpack.c.b16 %v2381, %v2377
    %v2430 = vpack.c.b16 %v2386, %v2382
    %v2431 = vpack.c.b16 %v2387, %v2383
    %v2432 = vpack.c.b16 %v2388, %v2384
    %v2433 = vpack.c.b16 %v2389, %v2385
    %v2434 = vpack.c.b16 %v2394, %v2390
    %v2435 = vpack.c.b16 %v2395, %v2391
    %v2436 = vpack.c.b16 %v2396, %v2392
    %v2437 = vpack.c.b16 %v2397, %v2393
    %v2438 = vpack.c.b16 %v2402, %v2398
    %v2439 = vpack.c.b16 %v2403, %v2399
    %v2440 = vpack.c.b16 %v2404, %v2400
    %v2441 = vpack.c.b16 %v2405, %v2401
    %v2442 = vpack.c.b16 %v2410, %v2406
    %v2443 = vpack.c.b16 %v2411, %v2407
    %v2444 = vpack.c.b16 %v2412, %v2408
    %v2445 = vpack.c.b16 %v2413, %v2409
    %2478 = vmatprep.subr.bf16.mxu0 %v2443
    %2479 = vmatpush1.bf16.msra.mxu0 %v2442
    %2480 = vmatprep.subr.bf16.mxu0 %v2439
    %2481 = vmatpush1.bf16.msra.mxu0 %v2438
    %2482 = vmatprep.subr.bf16.mxu0 %v2435
    %2483 = vmatpush1.bf16.msra.mxu0 %v2434
    %2484 = vmatprep.subr.bf16.mxu0 %v2431
    %2485 = vmatpush1.bf16.msra.mxu0 %v2430
    %2486 = vmatprep.subr.bf16.mxu0 %v2427
    %2487 = vmatpush1.bf16.msra.mxu0 %v2426
    %2488 = vmatprep.subr.bf16.mxu0 %v2423
    %2489 = vmatpush1.bf16.msra.mxu0 %v2422
    %2490 = vmatprep.subr.bf16.mxu0 %v2419
    %2491 = vmatpush1.bf16.msra.mxu0 %v2418
    %2492 = vmatprep.subr.bf16.mxu0 %v2415
    %2493 = vmatpush1.bf16.msra.mxu0 %v2414
    %2494 = vmatprep.subr.bf16.mxu0 0
    %2495 = vmatpush2.bf16.msra.mxu0 0
    %2496 = vmatprep.subr.bf16.mxu0 0
    %2497 = vmatpush2.bf16.msra.mxu0 0
    %2498 = vmatprep.subr.bf16.mxu0 0
    %2499 = vmatpush2.bf16.msra.mxu0 0
    %2500 = vmatprep.subr.bf16.mxu0 0
    %2501 = vmatpush2.bf16.msra.mxu0 0
    %2502 = vmatprep.subr.bf16.mxu0 0
    %2503 = vmatpush2.bf16.msra.mxu0 0
    %2504 = vmatprep.subr.bf16.mxu0 0
    %2505 = vmatpush2.bf16.msra.mxu0 0
    %2506 = vmatprep.subr.bf16.mxu0 0
    %2507 = vmatpush2.bf16.msra.mxu0 0
    %2508 = vmatprep.subr.bf16.mxu0 0
    %2509 = vmatpush2.bf16.msra.mxu0 0
    %2510 = vmatprep.mubr.bf16.mxu0 0
    %2511 = vmatmul.mubr.bf16.gmra.mxu0 %v2263
    %v2512 = vpop.f32.mrf.mxu0
    %v2513 = vadd.f32 %v2301, %v2512
    %v2514 = vpop.f32.mrf.mxu0
    %v2515 = vadd.f32 %v2305, %v2514
    %v2516 = vpop.f32.mrf.mxu0
    %v2517 = vadd.f32 %v2301, %v2516
    %v2518 = vpop.f32.mrf.mxu0
    %v2519 = vadd.f32 %v2305, %v2518
    %2520 = vdwg.mxu0
    %2521 = vmatprep.subr.bf16.mxu0 %v2445
    %2522 = vmatpush1.bf16.msra.mxu0 %v2444
    %2523 = vmatprep.subr.bf16.mxu0 %v2441
    %2524 = vmatpush1.bf16.msra.mxu0 %v2440
    %2525 = vmatprep.subr.bf16.mxu0 %v2437
    %2526 = vmatpush1.bf16.msra.mxu0 %v2436
    %2527 = vmatprep.subr.bf16.mxu0 %v2433
    %2528 = vmatpush1.bf16.msra.mxu0 %v2432
    %2529 = vmatprep.subr.bf16.mxu0 %v2429
    %2530 = vmatpush1.bf16.msra.mxu0 %v2428
    %2531 = vmatprep.subr.bf16.mxu0 %v2425
    %2532 = vmatpush1.bf16.msra.mxu0 %v2424
    %2533 = vmatprep.subr.bf16.mxu0 %v2421
    %2534 = vmatpush1.bf16.msra.mxu0 %v2420
    %2535 = vmatprep.subr.bf16.mxu0 %v2417
    %2536 = vmatpush1.bf16.msra.mxu0 %v2416
    %2537 = vmatprep.subr.bf16.mxu0 0
    %2538 = vmatpush2.bf16.msra.mxu0 0
    %2539 = vmatprep.subr.bf16.mxu0 0
    %2540 = vmatpush2.bf16.msra.mxu0 0
    %2541 = vmatprep.subr.bf16.mxu0 0
    %2542 = vmatpush2.bf16.msra.mxu0 0
    %2543 = vmatprep.subr.bf16.mxu0 0
    %2544 = vmatpush2.bf16.msra.mxu0 0
    %2545 = vmatprep.subr.bf16.mxu0 0
    %2546 = vmatpush2.bf16.msra.mxu0 0
    %2547 = vmatprep.subr.bf16.mxu0 0
    %2548 = vmatpush2.bf16.msra.mxu0 0
    %2549 = vmatprep.subr.bf16.mxu0 0
    %2550 = vmatpush2.bf16.msra.mxu0 0
    %2551 = vmatprep.subr.bf16.mxu0 0
    %2552 = vmatpush2.bf16.msra.mxu0 0
    %2553 = vmatprep.mubr.bf16.mxu0 0
    %2554 = vmatmul.mubr.bf16.gmra.mxu0 %v2263
    %v2555 = vpop.f32.mrf.mxu0
    %v2556 = vadd.f32 %v2309, %v2555
    %v2557 = vpop.f32.mrf.mxu0
    %v2558 = vadd.f32 %v2313, %v2557
    %v2559 = vpop.f32.mrf.mxu0
    %v2560 = vadd.f32 %v2309, %v2559
    %v2561 = vpop.f32.mrf.mxu0
    %v2562 = vadd.f32 %v2313, %v2561
    %2563 = vdwg.mxu0
    %v2564 = vmax.f32 %v2513, 0.0
    %v2565 = vmax.f32 %v2515, 0.0
    %v2566 = vmax.f32 %v2556, 0.0
    %v2567 = vmax.f32 %v2558, 0.0
    %v2568 = vmax.f32 %v2517, 0.0
    %v2569 = vmax.f32 %v2519, 0.0
    %v2570 = vmax.f32 %v2560, 0.0
    %v2571 = vmax.f32 %v2562, 0.0
    %v2572 = vpack.c.bf16 %v2568, %v2564
    %v2573 = vpack.c.bf16 %v2569, %v2565
    %v2574 = vpack.c.bf16 %v2570, %v2566
    %v2575 = vpack.c.bf16 %v2571, %v2567
    %v2576 = vld [vmem:[#allocation13] sm:$0xff]
    %v2577 = vld [vmem:[#allocation13 + $0x8] sm:$0xff]
    %v2578 = vld [vmem:[#allocation13 + $0x10] sm:$0xff]
    %v2579 = vld [vmem:[#allocation13 + $0x18] sm:$0xf]
    %v2580 = vld [vmem:[#allocation13 + $0x1c] sm:$0xff]
    %v2581 = vld [vmem:[#allocation13 + $0x24] sm:$0xff]
    %v2582 = vld [vmem:[#allocation13 + $0x2c] sm:$0xff]
    %v2583 = vld [vmem:[#allocation13 + $0x34] sm:$0xf]
    %v2584 = vld [vmem:[#allocation13 + $0x38] sm:$0xff]
    %v2585 = vld [vmem:[#allocation13 + $0x40] sm:$0xff]
    %v2586 = vld [vmem:[#allocation13 + $0x48] sm:$0xff]
    %v2587 = vld [vmem:[#allocation13 + $0x50] sm:$0xf]
    %v2588 = vld [vmem:[#allocation13 + $0x54] sm:$0xff]
    %v2589 = vld [vmem:[#allocation13 + $0x5c] sm:$0xff]
    %v2590 = vld [vmem:[#allocation13 + $0x64] sm:$0xff]
    %v2591 = vld [vmem:[#allocation13 + $0x6c] sm:$0xf]
    %v2592 = vld [vmem:[#allocation13 + $0x70] sm:$0xff]
    %v2593 = vld [vmem:[#allocation13 + $0x78] sm:$0xff]
    %v2594 = vld [vmem:[#allocation13 + $0x80] sm:$0xff]
    %v2595 = vld [vmem:[#allocation13 + $0x88] sm:$0xf]
    %v2596 = vld [vmem:[#allocation13 + $0x8c] sm:$0xff]
    %v2597 = vld [vmem:[#allocation13 + $0x94] sm:$0xff]
    %v2598 = vld [vmem:[#allocation13 + $0x9c] sm:$0xff]
    %v2599 = vld [vmem:[#allocation13 + $0xa4] sm:$0xf]
    %v2600 = vld [vmem:[#allocation13 + $0xa8] sm:$0xff]
    %v2601 = vld [vmem:[#allocation13 + $0xb0] sm:$0xff]
    %v2602 = vld [vmem:[#allocation13 + $0xb8] sm:$0xff]
    %v2603 = vld [vmem:[#allocation13 + $0xc0] sm:$0xf]
    %v2604 = vld [vmem:[#allocation13 + $0xc4] sm:$0xff]
    %v2605 = vld [vmem:[#allocation13 + $0xcc] sm:$0xff]
    %v2606 = vld [vmem:[#allocation13 + $0xd4] sm:$0xff]
    %v2607 = vld [vmem:[#allocation13 + $0xdc] sm:$0xf]
    %v2608 = vld [vmem:[#allocation13 + $0xe0] sm:$0xff]
    %v2609 = vld [vmem:[#allocation13 + $0xe8] sm:$0xff]
    %v2610 = vld [vmem:[#allocation13 + $0xf0] sm:$0xff]
    %v2611 = vld [vmem:[#allocation13 + $0xf8] sm:$0xf]
    %v2612 = vld [vmem:[#allocation13 + $0xfc] sm:$0xff]
    %v2613 = vld [vmem:[#allocation13 + $0x104] sm:$0xff]
    %v2614 = vld [vmem:[#allocation13 + $0x10c] sm:$0xff]
    %v2615 = vld [vmem:[#allocation13 + $0x114] sm:$0xf]
    %v2616 = vld [vmem:[#allocation13 + $0x118] sm:$0xff]
    %v2617 = vld [vmem:[#allocation13 + $0x120] sm:$0xff]
    %v2618 = vld [vmem:[#allocation13 + $0x128] sm:$0xff]
    %v2619 = vld [vmem:[#allocation13 + $0x130] sm:$0xf]
    %v2620 = vld [vmem:[#allocation13 + $0x134] sm:$0xff]
    %v2621 = vld [vmem:[#allocation13 + $0x13c] sm:$0xff]
    %v2622 = vld [vmem:[#allocation13 + $0x144] sm:$0xff]
    %v2623 = vld [vmem:[#allocation13 + $0x14c] sm:$0xf]
    %v2624 = vld [vmem:[#allocation13 + $0x150] sm:$0xff]
    %v2625 = vld [vmem:[#allocation13 + $0x158] sm:$0xff]
    %v2626 = vld [vmem:[#allocation13 + $0x160] sm:$0xff]
    %v2627 = vld [vmem:[#allocation13 + $0x168] sm:$0xf]
    %v2628 = vld [vmem:[#allocation13 + $0x16c] sm:$0xff]
    %v2629 = vld [vmem:[#allocation13 + $0x174] sm:$0xff]
    %v2630 = vld [vmem:[#allocation13 + $0x17c] sm:$0xff]
    %v2631 = vld [vmem:[#allocation13 + $0x184] sm:$0xf]
    %v2632 = vld [vmem:[#allocation13 + $0x188] sm:$0xff]
    %v2633 = vld [vmem:[#allocation13 + $0x190] sm:$0xff]
    %v2634 = vld [vmem:[#allocation13 + $0x198] sm:$0xff]
    %v2635 = vld [vmem:[#allocation13 + $0x1a0] sm:$0xf]
    %v2636 = vld [vmem:[#allocation13 + $0x1a4] sm:$0xff]
    %v2637 = vld [vmem:[#allocation13 + $0x1ac] sm:$0xff]
    %v2638 = vld [vmem:[#allocation13 + $0x1b4] sm:$0xff]
    %v2639 = vld [vmem:[#allocation13 + $0x1bc] sm:$0xf]
    %v2640 = vld [vmem:[#allocation13 + $0x1c0] sm:$0xff]
    %v2641 = vld [vmem:[#allocation13 + $0x1c8] sm:$0xff]
    %v2642 = vld [vmem:[#allocation13 + $0x1d0] sm:$0xff]
    %v2643 = vld [vmem:[#allocation13 + $0x1d8] sm:$0xf]
    %v2644 = vld [vmem:[#allocation13 + $0x1dc] sm:$0xff]
    %v2645 = vld [vmem:[#allocation13 + $0x1e4] sm:$0xff]
    %v2646 = vld [vmem:[#allocation13 + $0x1ec] sm:$0xff]
    %v2647 = vld [vmem:[#allocation13 + $0x1f4] sm:$0xf]
    %v2648 = vld [vmem:[#allocation13 + $0x1f8] sm:$0xff]
    %v2649 = vld [vmem:[#allocation13 + $0x200] sm:$0xff]
    %v2650 = vld [vmem:[#allocation13 + $0x208] sm:$0xff]
    %v2651 = vld [vmem:[#allocation13 + $0x210] sm:$0xf]
    %v2652 = vld [vmem:[#allocation13 + $0x214] sm:$0xff]
    %v2653 = vld [vmem:[#allocation13 + $0x21c] sm:$0xff]
    %v2654 = vld [vmem:[#allocation13 + $0x224] sm:$0xff]
    %v2655 = vld [vmem:[#allocation13 + $0x22c] sm:$0xf]
    %v2656 = vld [vmem:[#allocation13 + $0x230] sm:$0xff]
    %v2657 = vld [vmem:[#allocation13 + $0x238] sm:$0xff]
    %v2658 = vld [vmem:[#allocation13 + $0x240] sm:$0xff]
    %v2659 = vld [vmem:[#allocation13 + $0x248] sm:$0xf]
    %v2660 = vld [vmem:[#allocation13 + $0x24c] sm:$0xff]
    %v2661 = vld [vmem:[#allocation13 + $0x254] sm:$0xff]
    %v2662 = vld [vmem:[#allocation13 + $0x25c] sm:$0xff]
    %v2663 = vld [vmem:[#allocation13 + $0x264] sm:$0xf]
    %v2664 = vld [vmem:[#allocation13 + $0x268] sm:$0xff]
    %v2665 = vld [vmem:[#allocation13 + $0x270] sm:$0xff]
    %v2666 = vld [vmem:[#allocation13 + $0x278] sm:$0xff]
    %v2667 = vld [vmem:[#allocation13 + $0x280] sm:$0xf]
    %v2668 = vld [vmem:[#allocation13 + $0x284] sm:$0xff]
    %v2669 = vld [vmem:[#allocation13 + $0x28c] sm:$0xff]
    %v2670 = vld [vmem:[#allocation13 + $0x294] sm:$0xff]
    %v2671 = vld [vmem:[#allocation13 + $0x29c] sm:$0xf]
    %v2672 = vld [vmem:[#allocation13 + $0x2a0] sm:$0xff]
    %v2673 = vld [vmem:[#allocation13 + $0x2a8] sm:$0xff]
    %v2674 = vld [vmem:[#allocation13 + $0x2b0] sm:$0xff]
    %v2675 = vld [vmem:[#allocation13 + $0x2b8] sm:$0xf]
    %v2676 = vld [vmem:[#allocation13 + $0x2bc] sm:$0xff]
    %v2677 = vld [vmem:[#allocation13 + $0x2c4] sm:$0xff]
    %v2678 = vld [vmem:[#allocation13 + $0x2cc] sm:$0xff]
    %v2679 = vld [vmem:[#allocation13 + $0x2d4] sm:$0xf]
    %v2680 = vld [vmem:[#allocation13 + $0x2d8] sm:$0xff]
    %v2681 = vld [vmem:[#allocation13 + $0x2e0] sm:$0xff]
    %v2682 = vld [vmem:[#allocation13 + $0x2e8] sm:$0xff]
    %v2683 = vld [vmem:[#allocation13 + $0x2f0] sm:$0xf]
    %v2684 = vld [vmem:[#allocation13 + $0x2f4] sm:$0xff]
    %v2685 = vld [vmem:[#allocation13 + $0x2fc] sm:$0xff]
    %v2686 = vld [vmem:[#allocation13 + $0x304] sm:$0xff]
    %v2687 = vld [vmem:[#allocation13 + $0x30c] sm:$0xf]
    %v2688 = vld [vmem:[#allocation13 + $0x310] sm:$0xff]
    %v2689 = vld [vmem:[#allocation13 + $0x318] sm:$0xff]
    %v2690 = vld [vmem:[#allocation13 + $0x320] sm:$0xff]
    %v2691 = vld [vmem:[#allocation13 + $0x328] sm:$0xf]
    %v2692 = vld [vmem:[#allocation13 + $0x32c] sm:$0xff]
    %v2693 = vld [vmem:[#allocation13 + $0x334] sm:$0xff]
    %v2694 = vld [vmem:[#allocation13 + $0x33c] sm:$0xff]
    %v2695 = vld [vmem:[#allocation13 + $0x344] sm:$0xf]
    %v2696 = vld [vmem:[#allocation13 + $0x348] sm:$0xff]
    %v2697 = vld [vmem:[#allocation13 + $0x350] sm:$0xff]
    %v2698 = vld [vmem:[#allocation13 + $0x358] sm:$0xff]
    %v2699 = vld [vmem:[#allocation13 + $0x360] sm:$0xf]
    %v2700 = vld [vmem:[#allocation13 + $0x364] sm:$0xff]
    %v2701 = vld [vmem:[#allocation13 + $0x36c] sm:$0xff]
    %v2702 = vld [vmem:[#allocation13 + $0x374] sm:$0xff]
    %v2703 = vld [vmem:[#allocation13 + $0x37c] sm:$0xf]
    %v2704 = vld [vmem:[#allocation13 + $0x380] sm:$0xff]
    %v2705 = vld [vmem:[#allocation13 + $0x388] sm:$0xff]
    %v2706 = vld [vmem:[#allocation13 + $0x390] sm:$0xff]
    %v2707 = vld [vmem:[#allocation13 + $0x398] sm:$0xf]
    %v2708 = vld [vmem:[#allocation13 + $0x39c] sm:$0xff]
    %v2709 = vld [vmem:[#allocation13 + $0x3a4] sm:$0xff]
    %v2710 = vld [vmem:[#allocation13 + $0x3ac] sm:$0xff]
    %v2711 = vld [vmem:[#allocation13 + $0x3b4] sm:$0xf]
    %v2712 = vld [vmem:[#allocation13 + $0x3b8] sm:$0xff]
    %v2713 = vld [vmem:[#allocation13 + $0x3c0] sm:$0xff]
    %v2714 = vld [vmem:[#allocation13 + $0x3c8] sm:$0xff]
    %v2715 = vld [vmem:[#allocation13 + $0x3d0] sm:$0xf]
    %v2716 = vld [vmem:[#allocation13 + $0x3d4] sm:$0xff]
    %v2717 = vld [vmem:[#allocation13 + $0x3dc] sm:$0xff]
    %v2718 = vld [vmem:[#allocation13 + $0x3e4] sm:$0xff]
    %v2719 = vld [vmem:[#allocation13 + $0x3ec] sm:$0xf]
    %v2720 = vld [vmem:[#allocation13 + $0x3f0] sm:$0xff]
    %v2721 = vld [vmem:[#allocation13 + $0x3f8] sm:$0xff]
    %v2722 = vld [vmem:[#allocation13 + $0x400] sm:$0xff]
    %v2723 = vld [vmem:[#allocation13 + $0x408] sm:$0xf]
    %v2724 = vld [vmem:[#allocation13 + $0x40c] sm:$0xff]
    %v2725 = vld [vmem:[#allocation13 + $0x414] sm:$0xff]
    %v2726 = vld [vmem:[#allocation13 + $0x41c] sm:$0xff]
    %v2727 = vld [vmem:[#allocation13 + $0x424] sm:$0xf]
    %v2728 = vld [vmem:[#allocation13 + $0x428] sm:$0xff]
    %v2729 = vld [vmem:[#allocation13 + $0x430] sm:$0xff]
    %v2730 = vld [vmem:[#allocation13 + $0x438] sm:$0xff]
    %v2731 = vld [vmem:[#allocation13 + $0x440] sm:$0xf]
    %v2732 = vld [vmem:[#allocation13 + $0x444] sm:$0xff]
    %v2733 = vld [vmem:[#allocation13 + $0x44c] sm:$0xff]
    %v2734 = vld [vmem:[#allocation13 + $0x454] sm:$0xff]
    %v2735 = vld [vmem:[#allocation13 + $0x45c] sm:$0xf]
    %v2736 = vld [vmem:[#allocation13 + $0x460] sm:$0xff]
    %v2737 = vld [vmem:[#allocation13 + $0x468] sm:$0xff]
    %v2738 = vld [vmem:[#allocation13 + $0x470] sm:$0xff]
    %v2739 = vld [vmem:[#allocation13 + $0x478] sm:$0xf]
    %v2740 = vld [vmem:[#allocation13 + $0x47c] sm:$0xff]
    %v2741 = vld [vmem:[#allocation13 + $0x484] sm:$0xff]
    %v2742 = vld [vmem:[#allocation13 + $0x48c] sm:$0xff]
    %v2743 = vld [vmem:[#allocation13 + $0x494] sm:$0xf]
    %v2744 = vld [vmem:[#allocation13 + $0x498] sm:$0xff]
    %v2745 = vld [vmem:[#allocation13 + $0x4a0] sm:$0xff]
    %v2746 = vld [vmem:[#allocation13 + $0x4a8] sm:$0xff]
    %v2747 = vld [vmem:[#allocation13 + $0x4b0] sm:$0xf]
    %v2748 = vld [vmem:[#allocation13 + $0x4b4] sm:$0xff]
    %v2749 = vld [vmem:[#allocation13 + $0x4bc] sm:$0xff]
    %v2750 = vld [vmem:[#allocation13 + $0x4c4] sm:$0xff]
    %v2751 = vld [vmem:[#allocation13 + $0x4cc] sm:$0xf]
    %v2752 = vld [vmem:[#allocation13 + $0x4d0] sm:$0xff]
    %v2753 = vld [vmem:[#allocation13 + $0x4d8] sm:$0xff]
    %v2754 = vld [vmem:[#allocation13 + $0x4e0] sm:$0xff]
    %v2755 = vld [vmem:[#allocation13 + $0x4e8] sm:$0xf]
    %v2756 = vld [vmem:[#allocation13 + $0x4ec] sm:$0xff]
    %v2757 = vld [vmem:[#allocation13 + $0x4f4] sm:$0xff]
    %v2758 = vld [vmem:[#allocation13 + $0x4fc] sm:$0xff]
    %v2759 = vld [vmem:[#allocation13 + $0x504] sm:$0xf]
    %v2760 = vld [vmem:[#allocation13 + $0x508] sm:$0xff]
    %v2761 = vld [vmem:[#allocation13 + $0x510] sm:$0xff]
    %v2762 = vld [vmem:[#allocation13 + $0x518] sm:$0xff]
    %v2763 = vld [vmem:[#allocation13 + $0x520] sm:$0xf]
    %v2764 = vld [vmem:[#allocation13 + $0x524] sm:$0xff]
    %v2765 = vld [vmem:[#allocation13 + $0x52c] sm:$0xff]
    %v2766 = vld [vmem:[#allocation13 + $0x534] sm:$0xff]
    %v2767 = vld [vmem:[#allocation13 + $0x53c] sm:$0xf]
    %v2768 = vld [vmem:[#allocation13 + $0x540] sm:$0xff]
    %v2769 = vld [vmem:[#allocation13 + $0x548] sm:$0xff]
    %v2770 = vld [vmem:[#allocation13 + $0x550] sm:$0xff]
    %v2771 = vld [vmem:[#allocation13 + $0x558] sm:$0xf]
    %v2772 = vld [vmem:[#allocation13 + $0x55c] sm:$0xff]
    %v2773 = vld [vmem:[#allocation13 + $0x564] sm:$0xff]
    %v2774 = vld [vmem:[#allocation13 + $0x56c] sm:$0xff]
    %v2775 = vld [vmem:[#allocation13 + $0x574] sm:$0xf]
    %v2776 = vld [vmem:[#allocation13 + $0x578] sm:$0xff]
    %v2777 = vld [vmem:[#allocation13 + $0x580] sm:$0xff]
    %v2778 = vld [vmem:[#allocation13 + $0x588] sm:$0xff]
    %v2779 = vld [vmem:[#allocation13 + $0x590] sm:$0xf]
    %v2780 = vld [vmem:[#allocation13 + $0x594] sm:$0xff]
    %v2781 = vld [vmem:[#allocation13 + $0x59c] sm:$0xff]
    %v2782 = vld [vmem:[#allocation13 + $0x5a4] sm:$0xff]
    %v2783 = vld [vmem:[#allocation13 + $0x5ac] sm:$0xf]
    %v2784 = vld [vmem:[#allocation13 + $0x5b0] sm:$0xff]
    %v2785 = vld [vmem:[#allocation13 + $0x5b8] sm:$0xff]
    %v2786 = vld [vmem:[#allocation13 + $0x5c0] sm:$0xff]
    %v2787 = vld [vmem:[#allocation13 + $0x5c8] sm:$0xf]
    %v2788 = vld [vmem:[#allocation13 + $0x5cc] sm:$0xff]
    %v2789 = vld [vmem:[#allocation13 + $0x5d4] sm:$0xff]
    %v2790 = vld [vmem:[#allocation13 + $0x5dc] sm:$0xff]
    %v2791 = vld [vmem:[#allocation13 + $0x5e4] sm:$0xf]
    %v2792 = vld [vmem:[#allocation13 + $0x5e8] sm:$0xff]
    %v2793 = vld [vmem:[#allocation13 + $0x5f0] sm:$0xff]
    %v2794 = vld [vmem:[#allocation13 + $0x5f8] sm:$0xff]
    %v2795 = vld [vmem:[#allocation13 + $0x600] sm:$0xf]
    %v2796 = vld [vmem:[#allocation13 + $0x604] sm:$0xff]
    %v2797 = vld [vmem:[#allocation13 + $0x60c] sm:$0xff]
    %v2798 = vld [vmem:[#allocation13 + $0x614] sm:$0xff]
    %v2799 = vld [vmem:[#allocation13 + $0x61c] sm:$0xf]
    %v2800 = vld [vmem:[#allocation13 + $0x620] sm:$0xff]
    %v2801 = vld [vmem:[#allocation13 + $0x628] sm:$0xff]
    %v2802 = vld [vmem:[#allocation13 + $0x630] sm:$0xff]
    %v2803 = vld [vmem:[#allocation13 + $0x638] sm:$0xf]
    %v2804 = vld [vmem:[#allocation13 + $0x63c] sm:$0xff]
    %v2805 = vld [vmem:[#allocation13 + $0x644] sm:$0xff]
    %v2806 = vld [vmem:[#allocation13 + $0x64c] sm:$0xff]
    %v2807 = vld [vmem:[#allocation13 + $0x654] sm:$0xf]
    %v2808 = vld [vmem:[#allocation13 + $0x658] sm:$0xff]
    %v2809 = vld [vmem:[#allocation13 + $0x660] sm:$0xff]
    %v2810 = vld [vmem:[#allocation13 + $0x668] sm:$0xff]
    %v2811 = vld [vmem:[#allocation13 + $0x670] sm:$0xf]
    %v2812 = vld [vmem:[#allocation13 + $0x674] sm:$0xff]
    %v2813 = vld [vmem:[#allocation13 + $0x67c] sm:$0xff]
    %v2814 = vld [vmem:[#allocation13 + $0x684] sm:$0xff]
    %v2815 = vld [vmem:[#allocation13 + $0x68c] sm:$0xf]
    %v2816 = vld [vmem:[#allocation13 + $0x690] sm:$0xff]
    %v2817 = vld [vmem:[#allocation13 + $0x698] sm:$0xff]
    %v2818 = vld [vmem:[#allocation13 + $0x6a0] sm:$0xff]
    %v2819 = vld [vmem:[#allocation13 + $0x6a8] sm:$0xf]
    %v2820 = vld [vmem:[#allocation13 + $0x6ac] sm:$0xff]
    %v2821 = vld [vmem:[#allocation13 + $0x6b4] sm:$0xff]
    %v2822 = vld [vmem:[#allocation13 + $0x6bc] sm:$0xff]
    %v2823 = vld [vmem:[#allocation13 + $0x6c4] sm:$0xf]
    %v2824 = vld [vmem:[#allocation13 + $0x6c8] sm:$0xff]
    %v2825 = vld [vmem:[#allocation13 + $0x6d0] sm:$0xff]
    %v2826 = vld [vmem:[#allocation13 + $0x6d8] sm:$0xff]
    %v2827 = vld [vmem:[#allocation13 + $0x6e0] sm:$0xf]
    %v2828 = vld [vmem:[#allocation13 + $0x6e4] sm:$0xff]
    %v2829 = vld [vmem:[#allocation13 + $0x6ec] sm:$0xff]
    %v2830 = vld [vmem:[#allocation13 + $0x6f4] sm:$0xff]
    %v2831 = vld [vmem:[#allocation13 + $0x6fc] sm:$0xf]
    %v2832 = vld [vmem:[%s9] sm:$0xff]
    %v2834 = vlaneseq
    %v2835 = vshrl.u32 %v2834, 7
    %v2836 = vsub.s32 0, %v2835
    %v2837 = vrot.slane %v2832, %v2836
    %v2838 = vlaneseq
    %v2839 = vshrl.u32 %v2838, 7
    %v2840 = vsub.s32 1, %v2839
    %v2841 = vrot.slane %v2832, %v2840
    %v2842 = vlaneseq
    %v2843 = vshrl.u32 %v2842, 7
    %v2844 = vsub.s32 2, %v2843
    %v2845 = vrot.slane %v2832, %v2844
    %v2846 = vlaneseq
    %v2847 = vshrl.u32 %v2846, 7
    %v2848 = vsub.s32 3, %v2847
    %v2849 = vrot.slane %v2832, %v2848
    %v2850 = vlaneseq
    %v2851 = vshrl.u32 %v2850, 7
    %v2852 = vsub.s32 4, %v2851
    %v2853 = vrot.slane %v2832, %v2852
    %v2854 = vlaneseq
    %v2855 = vshrl.u32 %v2854, 7
    %v2856 = vsub.s32 5, %v2855
    %v2857 = vrot.slane %v2832, %v2856
    %v2858 = vlaneseq
    %v2859 = vshrl.u32 %v2858, 7
    %v2860 = vsub.s32 6, %v2859
    %v2861 = vrot.slane %v2832, %v2860
    %v3125 = vunpack.c.l.b16 %v2576
    %v3126 = vunpack.c.h.b16 %v2576
    %v3127 = vunpack.c.l.b16 %v2577
    %v3128 = vunpack.c.h.b16 %v2577
    %v3129 = vunpack.c.l.b16 %v2578
    %v3130 = vunpack.c.h.b16 %v2578
    %v3131 = vunpack.c.l.b16 %v2579
    %v3132 = vunpack.c.l.b16 %v2580
    %v3133 = vunpack.c.h.b16 %v2580
    %v3134 = vunpack.c.l.b16 %v2581
    %v3135 = vunpack.c.h.b16 %v2581
    %v3136 = vunpack.c.l.b16 %v2582
    %v3137 = vunpack.c.h.b16 %v2582
    %v3138 = vunpack.c.l.b16 %v2583
    %v3139 = vunpack.c.l.b16 %v2584
    %v3140 = vunpack.c.h.b16 %v2584
    %v3141 = vunpack.c.l.b16 %v2585
    %v3142 = vunpack.c.h.b16 %v2585
    %v3143 = vunpack.c.l.b16 %v2586
    %v3144 = vunpack.c.h.b16 %v2586
    %v3145 = vunpack.c.l.b16 %v2587
    %v3146 = vunpack.c.l.b16 %v2588
    %v3147 = vunpack.c.h.b16 %v2588
    %v3148 = vunpack.c.l.b16 %v2589
    %v3149 = vunpack.c.h.b16 %v2589
    %v3150 = vunpack.c.l.b16 %v2590
    %v3151 = vunpack.c.h.b16 %v2590
    %v3152 = vunpack.c.l.b16 %v2591
    %v3153 = vunpack.c.l.b16 %v2592
    %v3154 = vunpack.c.h.b16 %v2592
    %v3155 = vunpack.c.l.b16 %v2593
    %v3156 = vunpack.c.h.b16 %v2593
    %v3157 = vunpack.c.l.b16 %v2594
    %v3158 = vunpack.c.h.b16 %v2594
    %v3159 = vunpack.c.l.b16 %v2595
    %v3160 = vunpack.c.l.b16 %v2596
    %v3161 = vunpack.c.h.b16 %v2596
    %v3162 = vunpack.c.l.b16 %v2597
    %v3163 = vunpack.c.h.b16 %v2597
    %v3164 = vunpack.c.l.b16 %v2598
    %v3165 = vunpack.c.h.b16 %v2598
    %v3166 = vunpack.c.l.b16 %v2599
    %v3167 = vunpack.c.l.b16 %v2600
    %v3168 = vunpack.c.h.b16 %v2600
    %v3169 = vunpack.c.l.b16 %v2601
    %v3170 = vunpack.c.h.b16 %v2601
    %v3171 = vunpack.c.l.b16 %v2602
    %v3172 = vunpack.c.h.b16 %v2602
    %v3173 = vunpack.c.l.b16 %v2603
    %v3174 = vunpack.c.l.b16 %v2604
    %v3175 = vunpack.c.h.b16 %v2604
    %v3176 = vunpack.c.l.b16 %v2605
    %v3177 = vunpack.c.h.b16 %v2605
    %v3178 = vunpack.c.l.b16 %v2606
    %v3179 = vunpack.c.h.b16 %v2606
    %v3180 = vunpack.c.l.b16 %v2607
    %v3181 = vunpack.c.l.b16 %v2608
    %v3182 = vunpack.c.h.b16 %v2608
    %v3183 = vunpack.c.l.b16 %v2609
    %v3184 = vunpack.c.h.b16 %v2609
    %v3185 = vunpack.c.l.b16 %v2610
    %v3186 = vunpack.c.h.b16 %v2610
    %v3187 = vunpack.c.l.b16 %v2611
    %v3188 = vunpack.c.l.b16 %v2612
    %v3189 = vunpack.c.h.b16 %v2612
    %v3190 = vunpack.c.l.b16 %v2613
    %v3191 = vunpack.c.h.b16 %v2613
    %v3192 = vunpack.c.l.b16 %v2614
    %v3193 = vunpack.c.h.b16 %v2614
    %v3194 = vunpack.c.l.b16 %v2615
    %v3195 = vunpack.c.l.b16 %v2616
    %v3196 = vunpack.c.h.b16 %v2616
    %v3197 = vunpack.c.l.b16 %v2617
    %v3198 = vunpack.c.h.b16 %v2617
    %v3199 = vunpack.c.l.b16 %v2618
    %v3200 = vunpack.c.h.b16 %v2618
    %v3201 = vunpack.c.l.b16 %v2619
    %v3202 = vunpack.c.l.b16 %v2620
    %v3203 = vunpack.c.h.b16 %v2620
    %v3204 = vunpack.c.l.b16 %v2621
    %v3205 = vunpack.c.h.b16 %v2621
    %v3206 = vunpack.c.l.b16 %v2622
    %v3207 = vunpack.c.h.b16 %v2622
    %v3208 = vunpack.c.l.b16 %v2623
    %v3209 = vunpack.c.l.b16 %v2624
    %v3210 = vunpack.c.h.b16 %v2624
    %v3211 = vunpack.c.l.b16 %v2625
    %v3212 = vunpack.c.h.b16 %v2625
    %v3213 = vunpack.c.l.b16 %v2626
    %v3214 = vunpack.c.h.b16 %v2626
    %v3215 = vunpack.c.l.b16 %v2627
    %v3216 = vunpack.c.l.b16 %v2628
    %v3217 = vunpack.c.h.b16 %v2628
    %v3218 = vunpack.c.l.b16 %v2629
    %v3219 = vunpack.c.h.b16 %v2629
    %v3220 = vunpack.c.l.b16 %v2630
    %v3221 = vunpack.c.h.b16 %v2630
    %v3222 = vunpack.c.l.b16 %v2631
    %v3223 = vunpack.c.l.b16 %v2632
    %v3224 = vunpack.c.h.b16 %v2632
    %v3225 = vunpack.c.l.b16 %v2633
    %v3226 = vunpack.c.h.b16 %v2633
    %v3227 = vunpack.c.l.b16 %v2634
    %v3228 = vunpack.c.h.b16 %v2634
    %v3229 = vunpack.c.l.b16 %v2635
    %v3230 = vunpack.c.l.b16 %v2636
    %v3231 = vunpack.c.h.b16 %v2636
    %v3232 = vunpack.c.l.b16 %v2637
    %v3233 = vunpack.c.h.b16 %v2637
    %v3234 = vunpack.c.l.b16 %v2638
    %v3235 = vunpack.c.h.b16 %v2638
    %v3236 = vunpack.c.l.b16 %v2639
    %v3237 = vunpack.c.l.b16 %v2640
    %v3238 = vunpack.c.h.b16 %v2640
    %v3239 = vunpack.c.l.b16 %v2641
    %v3240 = vunpack.c.h.b16 %v2641
    %v3241 = vunpack.c.l.b16 %v2642
    %v3242 = vunpack.c.h.b16 %v2642
    %v3243 = vunpack.c.l.b16 %v2643
    %v3244 = vunpack.c.l.b16 %v2644
    %v3245 = vunpack.c.h.b16 %v2644
    %v3246 = vunpack.c.l.b16 %v2645
    %v3247 = vunpack.c.h.b16 %v2645
    %v3248 = vunpack.c.l.b16 %v2646
    %v3249 = vunpack.c.h.b16 %v2646
    %v3250 = vunpack.c.l.b16 %v2647
    %v3251 = vunpack.c.l.b16 %v2648
    %v3252 = vunpack.c.h.b16 %v2648
    %v3253 = vunpack.c.l.b16 %v2649
    %v3254 = vunpack.c.h.b16 %v2649
    %v3255 = vunpack.c.l.b16 %v2650
    %v3256 = vunpack.c.h.b16 %v2650
    %v3257 = vunpack.c.l.b16 %v2651
    %v3258 = vunpack.c.l.b16 %v2652
    %v3259 = vunpack.c.h.b16 %v2652
    %v3260 = vunpack.c.l.b16 %v2653
    %v3261 = vunpack.c.h.b16 %v2653
    %v3262 = vunpack.c.l.b16 %v2654
    %v3263 = vunpack.c.h.b16 %v2654
    %v3264 = vunpack.c.l.b16 %v2655
    %v3265 = vunpack.c.l.b16 %v2656
    %v3266 = vunpack.c.h.b16 %v2656
    %v3267 = vunpack.c.l.b16 %v2657
    %v3268 = vunpack.c.h.b16 %v2657
    %v3269 = vunpack.c.l.b16 %v2658
    %v3270 = vunpack.c.h.b16 %v2658
    %v3271 = vunpack.c.l.b16 %v2659
    %v3272 = vunpack.c.l.b16 %v2660
    %v3273 = vunpack.c.h.b16 %v2660
    %v3274 = vunpack.c.l.b16 %v2661
    %v3275 = vunpack.c.h.b16 %v2661
    %v3276 = vunpack.c.l.b16 %v2662
    %v3277 = vunpack.c.h.b16 %v2662
    %v3278 = vunpack.c.l.b16 %v2663
    %v3279 = vunpack.c.l.b16 %v2664
    %v3280 = vunpack.c.h.b16 %v2664
    %v3281 = vunpack.c.l.b16 %v2665
    %v3282 = vunpack.c.h.b16 %v2665
    %v3283 = vunpack.c.l.b16 %v2666
    %v3284 = vunpack.c.h.b16 %v2666
    %v3285 = vunpack.c.l.b16 %v2667
    %v3286 = vunpack.c.l.b16 %v2668
    %v3287 = vunpack.c.h.b16 %v2668
    %v3288 = vunpack.c.l.b16 %v2669
    %v3289 = vunpack.c.h.b16 %v2669
    %v3290 = vunpack.c.l.b16 %v2670
    %v3291 = vunpack.c.h.b16 %v2670
    %v3292 = vunpack.c.l.b16 %v2671
    %v3293 = vunpack.c.l.b16 %v2672
    %v3294 = vunpack.c.h.b16 %v2672
    %v3295 = vunpack.c.l.b16 %v2673
    %v3296 = vunpack.c.h.b16 %v2673
    %v3297 = vunpack.c.l.b16 %v2674
    %v3298 = vunpack.c.h.b16 %v2674
    %v3299 = vunpack.c.l.b16 %v2675
    %v3300 = vunpack.c.l.b16 %v2676
    %v3301 = vunpack.c.h.b16 %v2676
    %v3302 = vunpack.c.l.b16 %v2677
    %v3303 = vunpack.c.h.b16 %v2677
    %v3304 = vunpack.c.l.b16 %v2678
    %v3305 = vunpack.c.h.b16 %v2678
    %v3306 = vunpack.c.l.b16 %v2679
    %v3307 = vunpack.c.l.b16 %v2680
    %v3308 = vunpack.c.h.b16 %v2680
    %v3309 = vunpack.c.l.b16 %v2681
    %v3310 = vunpack.c.h.b16 %v2681
    %v3311 = vunpack.c.l.b16 %v2682
    %v3312 = vunpack.c.h.b16 %v2682
    %v3313 = vunpack.c.l.b16 %v2683
    %v3314 = vunpack.c.l.b16 %v2684
    %v3315 = vunpack.c.h.b16 %v2684
    %v3316 = vunpack.c.l.b16 %v2685
    %v3317 = vunpack.c.h.b16 %v2685
    %v3318 = vunpack.c.l.b16 %v2686
    %v3319 = vunpack.c.h.b16 %v2686
    %v3320 = vunpack.c.l.b16 %v2687
    %v3321 = vunpack.c.l.b16 %v2688
    %v3322 = vunpack.c.h.b16 %v2688
    %v3323 = vunpack.c.l.b16 %v2689
    %v3324 = vunpack.c.h.b16 %v2689
    %v3325 = vunpack.c.l.b16 %v2690
    %v3326 = vunpack.c.h.b16 %v2690
    %v3327 = vunpack.c.l.b16 %v2691
    %v3328 = vunpack.c.l.b16 %v2692
    %v3329 = vunpack.c.h.b16 %v2692
    %v3330 = vunpack.c.l.b16 %v2693
    %v3331 = vunpack.c.h.b16 %v2693
    %v3332 = vunpack.c.l.b16 %v2694
    %v3333 = vunpack.c.h.b16 %v2694
    %v3334 = vunpack.c.l.b16 %v2695
    %v3335 = vunpack.c.l.b16 %v2696
    %v3336 = vunpack.c.h.b16 %v2696
    %v3337 = vunpack.c.l.b16 %v2697
    %v3338 = vunpack.c.h.b16 %v2697
    %v3339 = vunpack.c.l.b16 %v2698
    %v3340 = vunpack.c.h.b16 %v2698
    %v3341 = vunpack.c.l.b16 %v2699
    %v3342 = vunpack.c.l.b16 %v2700
    %v3343 = vunpack.c.h.b16 %v2700
    %v3344 = vunpack.c.l.b16 %v2701
    %v3345 = vunpack.c.h.b16 %v2701
    %v3346 = vunpack.c.l.b16 %v2702
    %v3347 = vunpack.c.h.b16 %v2702
    %v3348 = vunpack.c.l.b16 %v2703
    %v3349 = vunpack.c.l.b16 %v2704
    %v3350 = vunpack.c.h.b16 %v2704
    %v3351 = vunpack.c.l.b16 %v2705
    %v3352 = vunpack.c.h.b16 %v2705
    %v3353 = vunpack.c.l.b16 %v2706
    %v3354 = vunpack.c.h.b16 %v2706
    %v3355 = vunpack.c.l.b16 %v2707
    %v3356 = vunpack.c.l.b16 %v2708
    %v3357 = vunpack.c.h.b16 %v2708
    %v3358 = vunpack.c.l.b16 %v2709
    %v3359 = vunpack.c.h.b16 %v2709
    %v3360 = vunpack.c.l.b16 %v2710
    %v3361 = vunpack.c.h.b16 %v2710
    %v3362 = vunpack.c.l.b16 %v2711
    %v3363 = vunpack.c.l.b16 %v2712
    %v3364 = vunpack.c.h.b16 %v2712
    %v3365 = vunpack.c.l.b16 %v2713
    %v3366 = vunpack.c.h.b16 %v2713
    %v3367 = vunpack.c.l.b16 %v2714
    %v3368 = vunpack.c.h.b16 %v2714
    %v3369 = vunpack.c.l.b16 %v2715
    %v3370 = vunpack.c.l.b16 %v2716
    %v3371 = vunpack.c.h.b16 %v2716
    %v3372 = vunpack.c.l.b16 %v2717
    %v3373 = vunpack.c.h.b16 %v2717
    %v3374 = vunpack.c.l.b16 %v2718
    %v3375 = vunpack.c.h.b16 %v2718
    %v3376 = vunpack.c.l.b16 %v2719
    %v3377 = vunpack.c.l.b16 %v2720
    %v3378 = vunpack.c.h.b16 %v2720
    %v3379 = vunpack.c.l.b16 %v2721
    %v3380 = vunpack.c.h.b16 %v2721
    %v3381 = vunpack.c.l.b16 %v2722
    %v3382 = vunpack.c.h.b16 %v2722
    %v3383 = vunpack.c.l.b16 %v2723
    %v3384 = vunpack.c.l.b16 %v2724
    %v3385 = vunpack.c.h.b16 %v2724
    %v3386 = vunpack.c.l.b16 %v2725
    %v3387 = vunpack.c.h.b16 %v2725
    %v3388 = vunpack.c.l.b16 %v2726
    %v3389 = vunpack.c.h.b16 %v2726
    %v3390 = vunpack.c.l.b16 %v2727
    %v3391 = vunpack.c.l.b16 %v2728
    %v3392 = vunpack.c.h.b16 %v2728
    %v3393 = vunpack.c.l.b16 %v2729
    %v3394 = vunpack.c.h.b16 %v2729
    %v3395 = vunpack.c.l.b16 %v2730
    %v3396 = vunpack.c.h.b16 %v2730
    %v3397 = vunpack.c.l.b16 %v2731
    %v3398 = vunpack.c.l.b16 %v2732
    %v3399 = vunpack.c.h.b16 %v2732
    %v3400 = vunpack.c.l.b16 %v2733
    %v3401 = vunpack.c.h.b16 %v2733
    %v3402 = vunpack.c.l.b16 %v2734
    %v3403 = vunpack.c.h.b16 %v2734
    %v3404 = vunpack.c.l.b16 %v2735
    %v3405 = vunpack.c.l.b16 %v2736
    %v3406 = vunpack.c.h.b16 %v2736
    %v3407 = vunpack.c.l.b16 %v2737
    %v3408 = vunpack.c.h.b16 %v2737
    %v3409 = vunpack.c.l.b16 %v2738
    %v3410 = vunpack.c.h.b16 %v2738
    %v3411 = vunpack.c.l.b16 %v2739
    %v3412 = vunpack.c.l.b16 %v2740
    %v3413 = vunpack.c.h.b16 %v2740
    %v3414 = vunpack.c.l.b16 %v2741
    %v3415 = vunpack.c.h.b16 %v2741
    %v3416 = vunpack.c.l.b16 %v2742
    %v3417 = vunpack.c.h.b16 %v2742
    %v3418 = vunpack.c.l.b16 %v2743
    %v3419 = vunpack.c.l.b16 %v2744
    %v3420 = vunpack.c.h.b16 %v2744
    %v3421 = vunpack.c.l.b16 %v2745
    %v3422 = vunpack.c.h.b16 %v2745
    %v3423 = vunpack.c.l.b16 %v2746
    %v3424 = vunpack.c.h.b16 %v2746
    %v3425 = vunpack.c.l.b16 %v2747
    %v3426 = vunpack.c.l.b16 %v2748
    %v3427 = vunpack.c.h.b16 %v2748
    %v3428 = vunpack.c.l.b16 %v2749
    %v3429 = vunpack.c.h.b16 %v2749
    %v3430 = vunpack.c.l.b16 %v2750
    %v3431 = vunpack.c.h.b16 %v2750
    %v3432 = vunpack.c.l.b16 %v2751
    %v3433 = vunpack.c.l.b16 %v2752
    %v3434 = vunpack.c.h.b16 %v2752
    %v3435 = vunpack.c.l.b16 %v2753
    %v3436 = vunpack.c.h.b16 %v2753
    %v3437 = vunpack.c.l.b16 %v2754
    %v3438 = vunpack.c.h.b16 %v2754
    %v3439 = vunpack.c.l.b16 %v2755
    %v3440 = vunpack.c.l.b16 %v2756
    %v3441 = vunpack.c.h.b16 %v2756
    %v3442 = vunpack.c.l.b16 %v2757
    %v3443 = vunpack.c.h.b16 %v2757
    %v3444 = vunpack.c.l.b16 %v2758
    %v3445 = vunpack.c.h.b16 %v2758
    %v3446 = vunpack.c.l.b16 %v2759
    %v3447 = vunpack.c.l.b16 %v2760
    %v3448 = vunpack.c.h.b16 %v2760
    %v3449 = vunpack.c.l.b16 %v2761
    %v3450 = vunpack.c.h.b16 %v2761
    %v3451 = vunpack.c.l.b16 %v2762
    %v3452 = vunpack.c.h.b16 %v2762
    %v3453 = vunpack.c.l.b16 %v2763
    %v3454 = vunpack.c.l.b16 %v2764
    %v3455 = vunpack.c.h.b16 %v2764
    %v3456 = vunpack.c.l.b16 %v2765
    %v3457 = vunpack.c.h.b16 %v2765
    %v3458 = vunpack.c.l.b16 %v2766
    %v3459 = vunpack.c.h.b16 %v2766
    %v3460 = vunpack.c.l.b16 %v2767
    %v3461 = vunpack.c.l.b16 %v2768
    %v3462 = vunpack.c.h.b16 %v2768
    %v3463 = vunpack.c.l.b16 %v2769
    %v3464 = vunpack.c.h.b16 %v2769
    %v3465 = vunpack.c.l.b16 %v2770
    %v3466 = vunpack.c.h.b16 %v2770
    %v3467 = vunpack.c.l.b16 %v2771
    %v3468 = vunpack.c.l.b16 %v2772
    %v3469 = vunpack.c.h.b16 %v2772
    %v3470 = vunpack.c.l.b16 %v2773
    %v3471 = vunpack.c.h.b16 %v2773
    %v3472 = vunpack.c.l.b16 %v2774
    %v3473 = vunpack.c.h.b16 %v2774
    %v3474 = vunpack.c.l.b16 %v2775
    %v3475 = vunpack.c.l.b16 %v2776
    %v3476 = vunpack.c.h.b16 %v2776
    %v3477 = vunpack.c.l.b16 %v2777
    %v3478 = vunpack.c.h.b16 %v2777
    %v3479 = vunpack.c.l.b16 %v2778
    %v3480 = vunpack.c.h.b16 %v2778
    %v3481 = vunpack.c.l.b16 %v2779
    %v3482 = vunpack.c.l.b16 %v2780
    %v3483 = vunpack.c.h.b16 %v2780
    %v3484 = vunpack.c.l.b16 %v2781
    %v3485 = vunpack.c.h.b16 %v2781
    %v3486 = vunpack.c.l.b16 %v2782
    %v3487 = vunpack.c.h.b16 %v2782
    %v3488 = vunpack.c.l.b16 %v2783
    %v3489 = vunpack.c.l.b16 %v2784
    %v3490 = vunpack.c.h.b16 %v2784
    %v3491 = vunpack.c.l.b16 %v2785
    %v3492 = vunpack.c.h.b16 %v2785
    %v3493 = vunpack.c.l.b16 %v2786
    %v3494 = vunpack.c.h.b16 %v2786
    %v3495 = vunpack.c.l.b16 %v2787
    %v3496 = vunpack.c.l.b16 %v2788
    %v3497 = vunpack.c.h.b16 %v2788
    %v3498 = vunpack.c.l.b16 %v2789
    %v3499 = vunpack.c.h.b16 %v2789
    %v3500 = vunpack.c.l.b16 %v2790
    %v3501 = vunpack.c.h.b16 %v2790
    %v3502 = vunpack.c.l.b16 %v2791
    %v3503 = vunpack.c.l.b16 %v2792
    %v3504 = vunpack.c.h.b16 %v2792
    %v3505 = vunpack.c.l.b16 %v2793
    %v3506 = vunpack.c.h.b16 %v2793
    %v3507 = vunpack.c.l.b16 %v2794
    %v3508 = vunpack.c.h.b16 %v2794
    %v3509 = vunpack.c.l.b16 %v2795
    %v3510 = vunpack.c.l.b16 %v2796
    %v3511 = vunpack.c.h.b16 %v2796
    %v3512 = vunpack.c.l.b16 %v2797
    %v3513 = vunpack.c.h.b16 %v2797
    %v3514 = vunpack.c.l.b16 %v2798
    %v3515 = vunpack.c.h.b16 %v2798
    %v3516 = vunpack.c.l.b16 %v2799
    %v3517 = vunpack.c.l.b16 %v2800
    %v3518 = vunpack.c.h.b16 %v2800
    %v3519 = vunpack.c.l.b16 %v2801
    %v3520 = vunpack.c.h.b16 %v2801
    %v3521 = vunpack.c.l.b16 %v2802
    %v3522 = vunpack.c.h.b16 %v2802
    %v3523 = vunpack.c.l.b16 %v2803
    %v3524 = vunpack.c.l.b16 %v2804
    %v3525 = vunpack.c.h.b16 %v2804
    %v3526 = vunpack.c.l.b16 %v2805
    %v3527 = vunpack.c.h.b16 %v2805
    %v3528 = vunpack.c.l.b16 %v2806
    %v3529 = vunpack.c.h.b16 %v2806
    %v3530 = vunpack.c.l.b16 %v2807
    %v3531 = vunpack.c.l.b16 %v2808
    %v3532 = vunpack.c.h.b16 %v2808
    %v3533 = vunpack.c.l.b16 %v2809
    %v3534 = vunpack.c.h.b16 %v2809
    %v3535 = vunpack.c.l.b16 %v2810
    %v3536 = vunpack.c.h.b16 %v2810
    %v3537 = vunpack.c.l.b16 %v2811
    %v3538 = vunpack.c.l.b16 %v2812
    %v3539 = vunpack.c.h.b16 %v2812
    %v3540 = vunpack.c.l.b16 %v2813
    %v3541 = vunpack.c.h.b16 %v2813
    %v3542 = vunpack.c.l.b16 %v2814
    %v3543 = vunpack.c.h.b16 %v2814
    %v3544 = vunpack.c.l.b16 %v2815
    %v3545 = vunpack.c.l.b16 %v2816
    %v3546 = vunpack.c.h.b16 %v2816
    %v3547 = vunpack.c.l.b16 %v2817
    %v3548 = vunpack.c.h.b16 %v2817
    %v3549 = vunpack.c.l.b16 %v2818
    %v3550 = vunpack.c.h.b16 %v2818
    %v3551 = vunpack.c.l.b16 %v2819
    %v3552 = vunpack.c.l.b16 %v2820
    %v3553 = vunpack.c.h.b16 %v2820
    %v3554 = vunpack.c.l.b16 %v2821
    %v3555 = vunpack.c.h.b16 %v2821
    %v3556 = vunpack.c.l.b16 %v2822
    %v3557 = vunpack.c.h.b16 %v2822
    %v3558 = vunpack.c.l.b16 %v2823
    %v3559 = vunpack.c.l.b16 %v2824
    %v3560 = vunpack.c.h.b16 %v2824
    %v3561 = vunpack.c.l.b16 %v2825
    %v3562 = vunpack.c.h.b16 %v2825
    %v3563 = vunpack.c.l.b16 %v2826
    %v3564 = vunpack.c.h.b16 %v2826
    %v3565 = vunpack.c.l.b16 %v2827
    %v3566 = vunpack.c.l.b16 %v2828
    %v3567 = vunpack.c.h.b16 %v2828
    %v3568 = vunpack.c.l.b16 %v2829
    %v3569 = vunpack.c.h.b16 %v2829
    %v3570 = vunpack.c.l.b16 %v2830
    %v3571 = vunpack.c.h.b16 %v2830
    %v3572 = vunpack.c.l.b16 %v2831
    %v3573 = vpack.c.b16 %v3132, %v3125
    %v3574 = vpack.c.b16 %v3133, %v3126
    %v3575 = vpack.c.b16 %v3134, %v3127
    %v3576 = vpack.c.b16 %v3135, %v3128
    %v3577 = vpack.c.b16 %v3136, %v3129
    %v3578 = vpack.c.b16 %v3137, %v3130
    %v3579 = vpack.c.b16 %v3138, %v3131
    %v3580 = vpack.c.b16 %v3146, %v3139
    %v3581 = vpack.c.b16 %v3147, %v3140
    %v3582 = vpack.c.b16 %v3148, %v3141
    %v3583 = vpack.c.b16 %v3149, %v3142
    %v3584 = vpack.c.b16 %v3150, %v3143
    %v3585 = vpack.c.b16 %v3151, %v3144
    %v3586 = vpack.c.b16 %v3152, %v3145
    %v3587 = vpack.c.b16 %v3160, %v3153
    %v3588 = vpack.c.b16 %v3161, %v3154
    %v3589 = vpack.c.b16 %v3162, %v3155
    %v3590 = vpack.c.b16 %v3163, %v3156
    %v3591 = vpack.c.b16 %v3164, %v3157
    %v3592 = vpack.c.b16 %v3165, %v3158
    %v3593 = vpack.c.b16 %v3166, %v3159
    %v3594 = vpack.c.b16 %v3174, %v3167
    %v3595 = vpack.c.b16 %v3175, %v3168
    %v3596 = vpack.c.b16 %v3176, %v3169
    %v3597 = vpack.c.b16 %v3177, %v3170
    %v3598 = vpack.c.b16 %v3178, %v3171
    %v3599 = vpack.c.b16 %v3179, %v3172
    %v3600 = vpack.c.b16 %v3180, %v3173
    %v3601 = vpack.c.b16 %v3188, %v3181
    %v3602 = vpack.c.b16 %v3189, %v3182
    %v3603 = vpack.c.b16 %v3190, %v3183
    %v3604 = vpack.c.b16 %v3191, %v3184
    %v3605 = vpack.c.b16 %v3192, %v3185
    %v3606 = vpack.c.b16 %v3193, %v3186
    %v3607 = vpack.c.b16 %v3194, %v3187
    %v3608 = vpack.c.b16 %v3202, %v3195
    %v3609 = vpack.c.b16 %v3203, %v3196
    %v3610 = vpack.c.b16 %v3204, %v3197
    %v3611 = vpack.c.b16 %v3205, %v3198
    %v3612 = vpack.c.b16 %v3206, %v3199
    %v3613 = vpack.c.b16 %v3207, %v3200
    %v3614 = vpack.c.b16 %v3208, %v3201
    %v3615 = vpack.c.b16 %v3216, %v3209
    %v3616 = vpack.c.b16 %v3217, %v3210
    %v3617 = vpack.c.b16 %v3218, %v3211
    %v3618 = vpack.c.b16 %v3219, %v3212
    %v3619 = vpack.c.b16 %v3220, %v3213
    %v3620 = vpack.c.b16 %v3221, %v3214
    %v3621 = vpack.c.b16 %v3222, %v3215
    %v3622 = vpack.c.b16 %v3230, %v3223
    %v3623 = vpack.c.b16 %v3231, %v3224
    %v3624 = vpack.c.b16 %v3232, %v3225
    %v3625 = vpack.c.b16 %v3233, %v3226
    %v3626 = vpack.c.b16 %v3234, %v3227
    %v3627 = vpack.c.b16 %v3235, %v3228
    %v3628 = vpack.c.b16 %v3236, %v3229
    %v3629 = vpack.c.b16 %v3244, %v3237
    %v3630 = vpack.c.b16 %v3245, %v3238
    %v3631 = vpack.c.b16 %v3246, %v3239
    %v3632 = vpack.c.b16 %v3247, %v3240
    %v3633 = vpack.c.b16 %v3248, %v3241
    %v3634 = vpack.c.b16 %v3249, %v3242
    %v3635 = vpack.c.b16 %v3250, %v3243
    %v3636 = vpack.c.b16 %v3258, %v3251
    %v3637 = vpack.c.b16 %v3259, %v3252
    %v3638 = vpack.c.b16 %v3260, %v3253
    %v3639 = vpack.c.b16 %v3261, %v3254
    %v3640 = vpack.c.b16 %v3262, %v3255
    %v3641 = vpack.c.b16 %v3263, %v3256
    %v3642 = vpack.c.b16 %v3264, %v3257
    %v3643 = vpack.c.b16 %v3272, %v3265
    %v3644 = vpack.c.b16 %v3273, %v3266
    %v3645 = vpack.c.b16 %v3274, %v3267
    %v3646 = vpack.c.b16 %v3275, %v3268
    %v3647 = vpack.c.b16 %v3276, %v3269
    %v3648 = vpack.c.b16 %v3277, %v3270
    %v3649 = vpack.c.b16 %v3278, %v3271
    %v3650 = vpack.c.b16 %v3286, %v3279
    %v3651 = vpack.c.b16 %v3287, %v3280
    %v3652 = vpack.c.b16 %v3288, %v3281
    %v3653 = vpack.c.b16 %v3289, %v3282
    %v3654 = vpack.c.b16 %v3290, %v3283
    %v3655 = vpack.c.b16 %v3291, %v3284
    %v3656 = vpack.c.b16 %v3292, %v3285
    %v3657 = vpack.c.b16 %v3300, %v3293
    %v3658 = vpack.c.b16 %v3301, %v3294
    %v3659 = vpack.c.b16 %v3302, %v3295
    %v3660 = vpack.c.b16 %v3303, %v3296
    %v3661 = vpack.c.b16 %v3304, %v3297
    %v3662 = vpack.c.b16 %v3305, %v3298
    %v3663 = vpack.c.b16 %v3306, %v3299
    %v3664 = vpack.c.b16 %v3314, %v3307
    %v3665 = vpack.c.b16 %v3315, %v3308
    %v3666 = vpack.c.b16 %v3316, %v3309
    %v3667 = vpack.c.b16 %v3317, %v3310
    %v3668 = vpack.c.b16 %v3318, %v3311
    %v3669 = vpack.c.b16 %v3319, %v3312
    %v3670 = vpack.c.b16 %v3320, %v3313
    %v3671 = vpack.c.b16 %v3328, %v3321
    %v3672 = vpack.c.b16 %v3329, %v3322
    %v3673 = vpack.c.b16 %v3330, %v3323
    %v3674 = vpack.c.b16 %v3331, %v3324
    %v3675 = vpack.c.b16 %v3332, %v3325
    %v3676 = vpack.c.b16 %v3333, %v3326
    %v3677 = vpack.c.b16 %v3334, %v3327
    %v3678 = vpack.c.b16 %v3342, %v3335
    %v3679 = vpack.c.b16 %v3343, %v3336
    %v3680 = vpack.c.b16 %v3344, %v3337
    %v3681 = vpack.c.b16 %v3345, %v3338
    %v3682 = vpack.c.b16 %v3346, %v3339
    %v3683 = vpack.c.b16 %v3347, %v3340
    %v3684 = vpack.c.b16 %v3348, %v3341
    %v3685 = vpack.c.b16 %v3356, %v3349
    %v3686 = vpack.c.b16 %v3357, %v3350
    %v3687 = vpack.c.b16 %v3358, %v3351
    %v3688 = vpack.c.b16 %v3359, %v3352
    %v3689 = vpack.c.b16 %v3360, %v3353
    %v3690 = vpack.c.b16 %v3361, %v3354
    %v3691 = vpack.c.b16 %v3362, %v3355
    %v3692 = vpack.c.b16 %v3370, %v3363
    %v3693 = vpack.c.b16 %v3371, %v3364
    %v3694 = vpack.c.b16 %v3372, %v3365
    %v3695 = vpack.c.b16 %v3373, %v3366
    %v3696 = vpack.c.b16 %v3374, %v3367
    %v3697 = vpack.c.b16 %v3375, %v3368
    %v3698 = vpack.c.b16 %v3376, %v3369
    %v3699 = vpack.c.b16 %v3384, %v3377
    %v3700 = vpack.c.b16 %v3385, %v3378
    %v3701 = vpack.c.b16 %v3386, %v3379
    %v3702 = vpack.c.b16 %v3387, %v3380
    %v3703 = vpack.c.b16 %v3388, %v3381
    %v3704 = vpack.c.b16 %v3389, %v3382
    %v3705 = vpack.c.b16 %v3390, %v3383
    %v3706 = vpack.c.b16 %v3398, %v3391
    %v3707 = vpack.c.b16 %v3399, %v3392
    %v3708 = vpack.c.b16 %v3400, %v3393
    %v3709 = vpack.c.b16 %v3401, %v3394
    %v3710 = vpack.c.b16 %v3402, %v3395
    %v3711 = vpack.c.b16 %v3403, %v3396
    %v3712 = vpack.c.b16 %v3404, %v3397
    %v3713 = vpack.c.b16 %v3412, %v3405
    %v3714 = vpack.c.b16 %v3413, %v3406
    %v3715 = vpack.c.b16 %v3414, %v3407
    %v3716 = vpack.c.b16 %v3415, %v3408
    %v3717 = vpack.c.b16 %v3416, %v3409
    %v3718 = vpack.c.b16 %v3417, %v3410
    %v3719 = vpack.c.b16 %v3418, %v3411
    %v3720 = vpack.c.b16 %v3426, %v3419
    %v3721 = vpack.c.b16 %v3427, %v3420
    %v3722 = vpack.c.b16 %v3428, %v3421
    %v3723 = vpack.c.b16 %v3429, %v3422
    %v3724 = vpack.c.b16 %v3430, %v3423
    %v3725 = vpack.c.b16 %v3431, %v3424
    %v3726 = vpack.c.b16 %v3432, %v3425
    %v3727 = vpack.c.b16 %v3440, %v3433
    %v3728 = vpack.c.b16 %v3441, %v3434
    %v3729 = vpack.c.b16 %v3442, %v3435
    %v3730 = vpack.c.b16 %v3443, %v3436
    %v3731 = vpack.c.b16 %v3444, %v3437
    %v3732 = vpack.c.b16 %v3445, %v3438
    %v3733 = vpack.c.b16 %v3446, %v3439
    %v3734 = vpack.c.b16 %v3454, %v3447
    %v3735 = vpack.c.b16 %v3455, %v3448
    %v3736 = vpack.c.b16 %v3456, %v3449
    %v3737 = vpack.c.b16 %v3457, %v3450
    %v3738 = vpack.c.b16 %v3458, %v3451
    %v3739 = vpack.c.b16 %v3459, %v3452
    %v3740 = vpack.c.b16 %v3460, %v3453
    %v3741 = vpack.c.b16 %v3468, %v3461
    %v3742 = vpack.c.b16 %v3469, %v3462
    %v3743 = vpack.c.b16 %v3470, %v3463
    %v3744 = vpack.c.b16 %v3471, %v3464
    %v3745 = vpack.c.b16 %v3472, %v3465
    %v3746 = vpack.c.b16 %v3473, %v3466
    %v3747 = vpack.c.b16 %v3474, %v3467
    %v3748 = vpack.c.b16 %v3482, %v3475
    %v3749 = vpack.c.b16 %v3483, %v3476
    %v3750 = vpack.c.b16 %v3484, %v3477
    %v3751 = vpack.c.b16 %v3485, %v3478
    %v3752 = vpack.c.b16 %v3486, %v3479
    %v3753 = vpack.c.b16 %v3487, %v3480
    %v3754 = vpack.c.b16 %v3488, %v3481
    %v3755 = vpack.c.b16 %v3496, %v3489
    %v3756 = vpack.c.b16 %v3497, %v3490
    %v3757 = vpack.c.b16 %v3498, %v3491
    %v3758 = vpack.c.b16 %v3499, %v3492
    %v3759 = vpack.c.b16 %v3500, %v3493
    %v3760 = vpack.c.b16 %v3501, %v3494
    %v3761 = vpack.c.b16 %v3502, %v3495
    %v3762 = vpack.c.b16 %v3510, %v3503
    %v3763 = vpack.c.b16 %v3511, %v3504
    %v3764 = vpack.c.b16 %v3512, %v3505
    %v3765 = vpack.c.b16 %v3513, %v3506
    %v3766 = vpack.c.b16 %v3514, %v3507
    %v3767 = vpack.c.b16 %v3515, %v3508
    %v3768 = vpack.c.b16 %v3516, %v3509
    %v3769 = vpack.c.b16 %v3524, %v3517
    %v3770 = vpack.c.b16 %v3525, %v3518
    %v3771 = vpack.c.b16 %v3526, %v3519
    %v3772 = vpack.c.b16 %v3527, %v3520
    %v3773 = vpack.c.b16 %v3528, %v3521
    %v3774 = vpack.c.b16 %v3529, %v3522
    %v3775 = vpack.c.b16 %v3530, %v3523
    %v3776 = vpack.c.b16 %v3538, %v3531
    %v3777 = vpack.c.b16 %v3539, %v3532
    %v3778 = vpack.c.b16 %v3540, %v3533
    %v3779 = vpack.c.b16 %v3541, %v3534
    %v3780 = vpack.c.b16 %v3542, %v3535
    %v3781 = vpack.c.b16 %v3543, %v3536
    %v3782 = vpack.c.b16 %v3544, %v3537
    %v3783 = vpack.c.b16 %v3552, %v3545
    %v3784 = vpack.c.b16 %v3553, %v3546
    %v3785 = vpack.c.b16 %v3554, %v3547
    %v3786 = vpack.c.b16 %v3555, %v3548
    %v3787 = vpack.c.b16 %v3556, %v3549
    %v3788 = vpack.c.b16 %v3557, %v3550
    %v3789 = vpack.c.b16 %v3558, %v3551
    %v3790 = vpack.c.b16 %v3566, %v3559
    %v3791 = vpack.c.b16 %v3567, %v3560
    %v3792 = vpack.c.b16 %v3568, %v3561
    %v3793 = vpack.c.b16 %v3569, %v3562
    %v3794 = vpack.c.b16 %v3570, %v3563
    %v3795 = vpack.c.b16 %v3571, %v3564
    %v3796 = vpack.c.b16 %v3572, %v3565
    %4021 = vmatprep.subr.bf16.mxu0 %v3623
    %4022 = vmatpush1.bf16.msra.mxu0 %v3622
    %4023 = vmatprep.subr.bf16.mxu0 %v3616
    %4024 = vmatpush1.bf16.msra.mxu0 %v3615
    %4025 = vmatprep.subr.bf16.mxu0 %v3609
    %4026 = vmatpush1.bf16.msra.mxu0 %v3608
    %4027 = vmatprep.subr.bf16.mxu0 %v3602
    %4028 = vmatpush1.bf16.msra.mxu0 %v3601
    %4029 = vmatprep.subr.bf16.mxu0 %v3595
    %4030 = vmatpush1.bf16.msra.mxu0 %v3594
    %4031 = vmatprep.subr.bf16.mxu0 %v3588
    %4032 = vmatpush1.bf16.msra.mxu0 %v3587
    %4033 = vmatprep.subr.bf16.mxu0 %v3581
    %4034 = vmatpush1.bf16.msra.mxu0 %v3580
    %4035 = vmatprep.subr.bf16.mxu0 %v3574
    %4036 = vmatpush1.bf16.msra.mxu0 %v3573
    %4037 = vmatprep.subr.bf16.mxu0 %v3679
    %4038 = vmatpush2.bf16.msra.mxu0 %v3678
    %4039 = vmatprep.subr.bf16.mxu0 %v3672
    %4040 = vmatpush2.bf16.msra.mxu0 %v3671
    %4041 = vmatprep.subr.bf16.mxu0 %v3665
    %4042 = vmatpush2.bf16.msra.mxu0 %v3664
    %4043 = vmatprep.subr.bf16.mxu0 %v3658
    %4044 = vmatpush2.bf16.msra.mxu0 %v3657
    %4045 = vmatprep.subr.bf16.mxu0 %v3651
    %4046 = vmatpush2.bf16.msra.mxu0 %v3650
    %4047 = vmatprep.subr.bf16.mxu0 %v3644
    %4048 = vmatpush2.bf16.msra.mxu0 %v3643
    %4049 = vmatprep.subr.bf16.mxu0 %v3637
    %4050 = vmatpush2.bf16.msra.mxu0 %v3636
    %4051 = vmatprep.subr.bf16.mxu0 %v3630
    %4052 = vmatpush2.bf16.msra.mxu0 %v3629
    %4053 = vmatprep.mubr.bf16.mxu0 %v2573
    %4054 = vmatmul.mubr.bf16.gmra.mxu0 %v2572
    %v4055 = vpop.f32.mrf.mxu0
    %v4056 = vadd.f32 %v2837, %v4055
    %v4057 = vpop.f32.mrf.mxu0
    %v4058 = vadd.f32 %v2841, %v4057
    %v4059 = vpop.f32.mrf.mxu0
    %v4060 = vadd.f32 %v2837, %v4059
    %v4061 = vpop.f32.mrf.mxu0
    %v4062 = vadd.f32 %v2841, %v4061
    %4063 = vdwg.mxu0
    %4064 = vmatprep.subr.bf16.mxu0 %v3735
    %4065 = vmatpush1.bf16.msra.mxu0 %v3734
    %4066 = vmatprep.subr.bf16.mxu0 %v3728
    %4067 = vmatpush1.bf16.msra.mxu0 %v3727
    %4068 = vmatprep.subr.bf16.mxu0 %v3721
    %4069 = vmatpush1.bf16.msra.mxu0 %v3720
    %4070 = vmatprep.subr.bf16.mxu0 %v3714
    %4071 = vmatpush1.bf16.msra.mxu0 %v3713
    %4072 = vmatprep.subr.bf16.mxu0 %v3707
    %4073 = vmatpush1.bf16.msra.mxu0 %v3706
    %4074 = vmatprep.subr.bf16.mxu0 %v3700
    %4075 = vmatpush1.bf16.msra.mxu0 %v3699
    %4076 = vmatprep.subr.bf16.mxu0 %v3693
    %4077 = vmatpush1.bf16.msra.mxu0 %v3692
    %4078 = vmatprep.subr.bf16.mxu0 %v3686
    %4079 = vmatpush1.bf16.msra.mxu0 %v3685
    %4080 = vmatprep.subr.bf16.mxu0 %v3791
    %4081 = vmatpush2.bf16.msra.mxu0 %v3790
    %4082 = vmatprep.subr.bf16.mxu0 %v3784
    %4083 = vmatpush2.bf16.msra.mxu0 %v3783
    %4084 = vmatprep.subr.bf16.mxu0 %v3777
    %4085 = vmatpush2.bf16.msra.mxu0 %v3776
    %4086 = vmatprep.subr.bf16.mxu0 %v3770
    %4087 = vmatpush2.bf16.msra.mxu0 %v3769
    %4088 = vmatprep.subr.bf16.mxu0 %v3763
    %4089 = vmatpush2.bf16.msra.mxu0 %v3762
    %4090 = vmatprep.subr.bf16.mxu0 %v3756
    %4091 = vmatpush2.bf16.msra.mxu0 %v3755
    %4092 = vmatprep.subr.bf16.mxu0 %v3749
    %4093 = vmatpush2.bf16.msra.mxu0 %v3748
    %4094 = vmatprep.subr.bf16.mxu0 %v3742
    %4095 = vmatpush2.bf16.msra.mxu0 %v3741
    %4096 = vmatprep.mubr.bf16.mxu0 %v2575
    %4097 = vmatmul.mubr.bf16.gmra.mxu0 %v2574
    %v4098 = vpop.f32.mrf.mxu0
    %v4099 = vadd.f32 %v4056, %v4098
    %v4100 = vpop.f32.mrf.mxu0
    %v4101 = vadd.f32 %v4058, %v4100
    %v4102 = vpop.f32.mrf.mxu0
    %v4103 = vadd.f32 %v4060, %v4102
    %v4104 = vpop.f32.mrf.mxu0
    %v4105 = vadd.f32 %v4062, %v4104
    %4106 = vdwg.mxu0
    %4107 = vmatprep.subr.bf16.mxu0 %v3625
    %4108 = vmatpush1.bf16.msra.mxu0 %v3624
    %4109 = vmatprep.subr.bf16.mxu0 %v3618
    %4110 = vmatpush1.bf16.msra.mxu0 %v3617
    %4111 = vmatprep.subr.bf16.mxu0 %v3611
    %4112 = vmatpush1.bf16.msra.mxu0 %v3610
    %4113 = vmatprep.subr.bf16.mxu0 %v3604
    %4114 = vmatpush1.bf16.msra.mxu0 %v3603
    %4115 = vmatprep.subr.bf16.mxu0 %v3597
    %4116 = vmatpush1.bf16.msra.mxu0 %v3596
    %4117 = vmatprep.subr.bf16.mxu0 %v3590
    %4118 = vmatpush1.bf16.msra.mxu0 %v3589
    %4119 = vmatprep.subr.bf16.mxu0 %v3583
    %4120 = vmatpush1.bf16.msra.mxu0 %v3582
    %4121 = vmatprep.subr.bf16.mxu0 %v3576
    %4122 = vmatpush1.bf16.msra.mxu0 %v3575
    %4123 = vmatprep.subr.bf16.mxu0 %v3681
    %4124 = vmatpush2.bf16.msra.mxu0 %v3680
    %4125 = vmatprep.subr.bf16.mxu0 %v3674
    %4126 = vmatpush2.bf16.msra.mxu0 %v3673
    %4127 = vmatprep.subr.bf16.mxu0 %v3667
    %4128 = vmatpush2.bf16.msra.mxu0 %v3666
    %4129 = vmatprep.subr.bf16.mxu0 %v3660
    %4130 = vmatpush2.bf16.msra.mxu0 %v3659
    %4131 = vmatprep.subr.bf16.mxu0 %v3653
    %4132 = vmatpush2.bf16.msra.mxu0 %v3652
    %4133 = vmatprep.subr.bf16.mxu0 %v3646
    %4134 = vmatpush2.bf16.msra.mxu0 %v3645
    %4135 = vmatprep.subr.bf16.mxu0 %v3639
    %4136 = vmatpush2.bf16.msra.mxu0 %v3638
    %4137 = vmatprep.subr.bf16.mxu0 %v3632
    %4138 = vmatpush2.bf16.msra.mxu0 %v3631
    %4139 = vmatprep.mubr.bf16.mxu0 %v2573
    %4140 = vmatmul.mubr.bf16.gmra.mxu0 %v2572
    %v4141 = vpop.f32.mrf.mxu0
    %v4142 = vadd.f32 %v2845, %v4141
    %v4143 = vpop.f32.mrf.mxu0
    %v4144 = vadd.f32 %v2849, %v4143
    %v4145 = vpop.f32.mrf.mxu0
    %v4146 = vadd.f32 %v2845, %v4145
    %v4147 = vpop.f32.mrf.mxu0
    %v4148 = vadd.f32 %v2849, %v4147
    %4149 = vdwg.mxu0
    %4150 = vmatprep.subr.bf16.mxu0 %v3737
    %4151 = vmatpush1.bf16.msra.mxu0 %v3736
    %4152 = vmatprep.subr.bf16.mxu0 %v3730
    %4153 = vmatpush1.bf16.msra.mxu0 %v3729
    %4154 = vmatprep.subr.bf16.mxu0 %v3723
    %4155 = vmatpush1.bf16.msra.mxu0 %v3722
    %4156 = vmatprep.subr.bf16.mxu0 %v3716
    %4157 = vmatpush1.bf16.msra.mxu0 %v3715
    %4158 = vmatprep.subr.bf16.mxu0 %v3709
    %4159 = vmatpush1.bf16.msra.mxu0 %v3708
    %4160 = vmatprep.subr.bf16.mxu0 %v3702
    %4161 = vmatpush1.bf16.msra.mxu0 %v3701
    %4162 = vmatprep.subr.bf16.mxu0 %v3695
    %4163 = vmatpush1.bf16.msra.mxu0 %v3694
    %4164 = vmatprep.subr.bf16.mxu0 %v3688
    %4165 = vmatpush1.bf16.msra.mxu0 %v3687
    %4166 = vmatprep.subr.bf16.mxu0 %v3793
    %4167 = vmatpush2.bf16.msra.mxu0 %v3792
    %4168 = vmatprep.subr.bf16.mxu0 %v3786
    %4169 = vmatpush2.bf16.msra.mxu0 %v3785
    %4170 = vmatprep.subr.bf16.mxu0 %v3779
    %4171 = vmatpush2.bf16.msra.mxu0 %v3778
    %4172 = vmatprep.subr.bf16.mxu0 %v3772
    %4173 = vmatpush2.bf16.msra.mxu0 %v3771
    %4174 = vmatprep.subr.bf16.mxu0 %v3765
    %4175 = vmatpush2.bf16.msra.mxu0 %v3764
    %4176 = vmatprep.subr.bf16.mxu0 %v3758
    %4177 = vmatpush2.bf16.msra.mxu0 %v3757
    %4178 = vmatprep.subr.bf16.mxu0 %v3751
    %4179 = vmatpush2.bf16.msra.mxu0 %v3750
    %4180 = vmatprep.subr.bf16.mxu0 %v3744
    %4181 = vmatpush2.bf16.msra.mxu0 %v3743
    %4182 = vmatprep.mubr.bf16.mxu0 %v2575
    %4183 = vmatmul.mubr.bf16.gmra.mxu0 %v2574
    %v4184 = vpop.f32.mrf.mxu0
    %v4185 = vadd.f32 %v4142, %v4184
    %v4186 = vpop.f32.mrf.mxu0
    %v4187 = vadd.f32 %v4144, %v4186
    %v4188 = vpop.f32.mrf.mxu0
    %v4189 = vadd.f32 %v4146, %v4188
    %v4190 = vpop.f32.mrf.mxu0
    %v4191 = vadd.f32 %v4148, %v4190
    %4192 = vdwg.mxu0
    %4193 = vmatprep.subr.bf16.mxu0 %v3627
    %4194 = vmatpush1.bf16.msra.mxu0 %v3626
    %4195 = vmatprep.subr.bf16.mxu0 %v3620
    %4196 = vmatpush1.bf16.msra.mxu0 %v3619
    %4197 = vmatprep.subr.bf16.mxu0 %v3613
    %4198 = vmatpush1.bf16.msra.mxu0 %v3612
    %4199 = vmatprep.subr.bf16.mxu0 %v3606
    %4200 = vmatpush1.bf16.msra.mxu0 %v3605
    %4201 = vmatprep.subr.bf16.mxu0 %v3599
    %4202 = vmatpush1.bf16.msra.mxu0 %v3598
    %4203 = vmatprep.subr.bf16.mxu0 %v3592
    %4204 = vmatpush1.bf16.msra.mxu0 %v3591
    %4205 = vmatprep.subr.bf16.mxu0 %v3585
    %4206 = vmatpush1.bf16.msra.mxu0 %v3584
    %4207 = vmatprep.subr.bf16.mxu0 %v3578
    %4208 = vmatpush1.bf16.msra.mxu0 %v3577
    %4209 = vmatprep.subr.bf16.mxu0 %v3683
    %4210 = vmatpush2.bf16.msra.mxu0 %v3682
    %4211 = vmatprep.subr.bf16.mxu0 %v3676
    %4212 = vmatpush2.bf16.msra.mxu0 %v3675
    %4213 = vmatprep.subr.bf16.mxu0 %v3669
    %4214 = vmatpush2.bf16.msra.mxu0 %v3668
    %4215 = vmatprep.subr.bf16.mxu0 %v3662
    %4216 = vmatpush2.bf16.msra.mxu0 %v3661
    %4217 = vmatprep.subr.bf16.mxu0 %v3655
    %4218 = vmatpush2.bf16.msra.mxu0 %v3654
    %4219 = vmatprep.subr.bf16.mxu0 %v3648
    %4220 = vmatpush2.bf16.msra.mxu0 %v3647
    %4221 = vmatprep.subr.bf16.mxu0 %v3641
    %4222 = vmatpush2.bf16.msra.mxu0 %v3640
    %4223 = vmatprep.subr.bf16.mxu0 %v3634
    %4224 = vmatpush2.bf16.msra.mxu0 %v3633
    %4225 = vmatprep.mubr.bf16.mxu0 %v2573
    %4226 = vmatmul.mubr.bf16.gmra.mxu0 %v2572
    %v4227 = vpop.f32.mrf.mxu0
    %v4228 = vadd.f32 %v2853, %v4227
    %v4229 = vpop.f32.mrf.mxu0
    %v4230 = vadd.f32 %v2857, %v4229
    %v4231 = vpop.f32.mrf.mxu0
    %v4232 = vadd.f32 %v2853, %v4231
    %v4233 = vpop.f32.mrf.mxu0
    %v4234 = vadd.f32 %v2857, %v4233
    %4235 = vdwg.mxu0
    %4236 = vmatprep.subr.bf16.mxu0 %v3739
    %4237 = vmatpush1.bf16.msra.mxu0 %v3738
    %4238 = vmatprep.subr.bf16.mxu0 %v3732
    %4239 = vmatpush1.bf16.msra.mxu0 %v3731
    %4240 = vmatprep.subr.bf16.mxu0 %v3725
    %4241 = vmatpush1.bf16.msra.mxu0 %v3724
    %4242 = vmatprep.subr.bf16.mxu0 %v3718
    %4243 = vmatpush1.bf16.msra.mxu0 %v3717
    %4244 = vmatprep.subr.bf16.mxu0 %v3711
    %4245 = vmatpush1.bf16.msra.mxu0 %v3710
    %4246 = vmatprep.subr.bf16.mxu0 %v3704
    %4247 = vmatpush1.bf16.msra.mxu0 %v3703
    %4248 = vmatprep.subr.bf16.mxu0 %v3697
    %4249 = vmatpush1.bf16.msra.mxu0 %v3696
    %4250 = vmatprep.subr.bf16.mxu0 %v3690
    %4251 = vmatpush1.bf16.msra.mxu0 %v3689
    %4252 = vmatprep.subr.bf16.mxu0 %v3795
    %4253 = vmatpush2.bf16.msra.mxu0 %v3794
    %4254 = vmatprep.subr.bf16.mxu0 %v3788
    %4255 = vmatpush2.bf16.msra.mxu0 %v3787
    %4256 = vmatprep.subr.bf16.mxu0 %v3781
    %4257 = vmatpush2.bf16.msra.mxu0 %v3780
    %4258 = vmatprep.subr.bf16.mxu0 %v3774
    %4259 = vmatpush2.bf16.msra.mxu0 %v3773
    %4260 = vmatprep.subr.bf16.mxu0 %v3767
    %4261 = vmatpush2.bf16.msra.mxu0 %v3766
    %4262 = vmatprep.subr.bf16.mxu0 %v3760
    %4263 = vmatpush2.bf16.msra.mxu0 %v3759
    %4264 = vmatprep.subr.bf16.mxu0 %v3753
    %4265 = vmatpush2.bf16.msra.mxu0 %v3752
    %4266 = vmatprep.subr.bf16.mxu0 %v3746
    %4267 = vmatpush2.bf16.msra.mxu0 %v3745
    %4268 = vmatprep.mubr.bf16.mxu0 %v2575
    %4269 = vmatmul.mubr.bf16.gmra.mxu0 %v2574
    %v4270 = vpop.f32.mrf.mxu0
    %v4271 = vadd.f32 %v4228, %v4270
    %v4272 = vpop.f32.mrf.mxu0
    %v4273 = vadd.f32 %v4230, %v4272
    %v4274 = vpop.f32.mrf.mxu0
    %v4275 = vadd.f32 %v4232, %v4274
    %v4276 = vpop.f32.mrf.mxu0
    %v4277 = vadd.f32 %v4234, %v4276
    %4278 = vdwg.mxu0
    %4279 = vmatprep.subr.bf16.mxu0 0
    %4280 = vmatpush1.bf16.msra.mxu0 %v3628
    %4281 = vmatprep.subr.bf16.mxu0 0
    %4282 = vmatpush1.bf16.msra.mxu0 %v3621
    %4283 = vmatprep.subr.bf16.mxu0 0
    %4284 = vmatpush1.bf16.msra.mxu0 %v3614
    %4285 = vmatprep.subr.bf16.mxu0 0
    %4286 = vmatpush1.bf16.msra.mxu0 %v3607
    %4287 = vmatprep.subr.bf16.mxu0 0
    %4288 = vmatpush1.bf16.msra.mxu0 %v3600
    %4289 = vmatprep.subr.bf16.mxu0 0
    %4290 = vmatpush1.bf16.msra.mxu0 %v3593
    %4291 = vmatprep.subr.bf16.mxu0 0
    %4292 = vmatpush1.bf16.msra.mxu0 %v3586
    %4293 = vmatprep.subr.bf16.mxu0 0
    %4294 = vmatpush1.bf16.msra.mxu0 %v3579
    %4295 = vmatprep.subr.bf16.mxu0 0
    %4296 = vmatpush2.bf16.msra.mxu0 %v3684
    %4297 = vmatprep.subr.bf16.mxu0 0
    %4298 = vmatpush2.bf16.msra.mxu0 %v3677
    %4299 = vmatprep.subr.bf16.mxu0 0
    %4300 = vmatpush2.bf16.msra.mxu0 %v3670
    %4301 = vmatprep.subr.bf16.mxu0 0
    %4302 = vmatpush2.bf16.msra.mxu0 %v3663
    %4303 = vmatprep.subr.bf16.mxu0 0
    %4304 = vmatpush2.bf16.msra.mxu0 %v3656
    %4305 = vmatprep.subr.bf16.mxu0 0
    %4306 = vmatpush2.bf16.msra.mxu0 %v3649
    %4307 = vmatprep.subr.bf16.mxu0 0
    %4308 = vmatpush2.bf16.msra.mxu0 %v3642
    %4309 = vmatprep.subr.bf16.mxu0 0
    %4310 = vmatpush2.bf16.msra.mxu0 %v3635
    %4311 = vmatprep.mubr.bf16.mxu0 %v2573
    %4312 = vmatmul.mubr.bf16.gmra.mxu0 %v2572
    %v4313 = vpop.f32.mrf.mxu0
    %v4314 = vadd.f32 %v2861, %v4313
    %v4315 = vpop.f32.mrf.mxu0
    %v4316 = vpop.f32.mrf.mxu0
    %v4317 = vadd.f32 %v2861, %v4316
    %v4318 = vpop.f32.mrf.mxu0
    %4319 = vdwg.mxu0
    %4320 = vmatprep.subr.bf16.mxu0 0
    %4321 = vmatpush1.bf16.msra.mxu0 %v3740
    %4322 = vmatprep.subr.bf16.mxu0 0
    %4323 = vmatpush1.bf16.msra.mxu0 %v3733
    %4324 = vmatprep.subr.bf16.mxu0 0
    %4325 = vmatpush1.bf16.msra.mxu0 %v3726
    %4326 = vmatprep.subr.bf16.mxu0 0
    %4327 = vmatpush1.bf16.msra.mxu0 %v3719
    %4328 = vmatprep.subr.bf16.mxu0 0
    %4329 = vmatpush1.bf16.msra.mxu0 %v3712
    %4330 = vmatprep.subr.bf16.mxu0 0
    %4331 = vmatpush1.bf16.msra.mxu0 %v3705
    %4332 = vmatprep.subr.bf16.mxu0 0
    %4333 = vmatpush1.bf16.msra.mxu0 %v3698
    %4334 = vmatprep.subr.bf16.mxu0 0
    %4335 = vmatpush1.bf16.msra.mxu0 %v3691
    %4336 = vmatprep.subr.bf16.mxu0 0
    %4337 = vmatpush2.bf16.msra.mxu0 %v3796
    %4338 = vmatprep.subr.bf16.mxu0 0
    %4339 = vmatpush2.bf16.msra.mxu0 %v3789
    %4340 = vmatprep.subr.bf16.mxu0 0
    %4341 = vmatpush2.bf16.msra.mxu0 %v3782
    %4342 = vmatprep.subr.bf16.mxu0 0
    %4343 = vmatpush2.bf16.msra.mxu0 %v3775
    %4344 = vmatprep.subr.bf16.mxu0 0
    %4345 = vmatpush2.bf16.msra.mxu0 %v3768
    %4346 = vmatprep.subr.bf16.mxu0 0
    %4347 = vmatpush2.bf16.msra.mxu0 %v3761
    %4348 = vmatprep.subr.bf16.mxu0 0
    %4349 = vmatpush2.bf16.msra.mxu0 %v3754
    %4350 = vmatprep.subr.bf16.mxu0 0
    %4351 = vmatpush2.bf16.msra.mxu0 %v3747
    %4352 = vmatprep.mubr.bf16.mxu0 %v2575
    %4353 = vmatmul.mubr.bf16.gmra.mxu0 %v2574
    %v4354 = vpop.f32.mrf.mxu0
    %v4355 = vadd.f32 %v4314, %v4354
    %v4356 = vpop.f32.mrf.mxu0
    %v4357 = vpop.f32.mrf.mxu0
    %v4358 = vadd.f32 %v4317, %v4357
    %v4359 = vpop.f32.mrf.mxu0
    %4360 = vdwg.mxu0
    %v4361 = vxor.u32 %v4099, 2147483648
    %v4362 = vxor.u32 %v4101, 2147483648
    %v4363 = vxor.u32 %v4185, 2147483648
    %v4364 = vxor.u32 %v4187, 2147483648
    %v4365 = vxor.u32 %v4271, 2147483648
    %v4366 = vxor.u32 %v4273, 2147483648
    %v4367 = vxor.u32 %v4355, 2147483648
    %v4368 = vxor.u32 %v4103, 2147483648
    %v4369 = vxor.u32 %v4105, 2147483648
    %v4370 = vxor.u32 %v4189, 2147483648
    %v4371 = vxor.u32 %v4191, 2147483648
    %v4372 = vxor.u32 %v4275, 2147483648
    %v4373 = vxor.u32 %v4277, 2147483648
    %v4374 = vxor.u32 %v4358, 2147483648
    %v4375 = vmul.f32 %v4361, 1.442695
    %v4376 = vpow.pop %v4375
    %v4377 = vmul.f32 %v4362, 1.442695
    %v4378 = vpow.pop %v4377
    %v4379 = vmul.f32 %v4363, 1.442695
    %v4380 = vpow.pop %v4379
    %v4381 = vmul.f32 %v4364, 1.442695
    %v4382 = vpow.pop %v4381
    %v4383 = vmul.f32 %v4365, 1.442695
    %v4384 = vpow.pop %v4383
    %v4385 = vmul.f32 %v4366, 1.442695
    %v4386 = vpow.pop %v4385
    %v4387 = vmul.f32 %v4367, 1.442695
    %v4388 = vpow.pop %v4387
    %v4389 = vmul.f32 %v4368, 1.442695
    %v4390 = vpow.pop %v4389
    %v4391 = vmul.f32 %v4369, 1.442695
    %v4392 = vpow.pop %v4391
    %v4393 = vmul.f32 %v4370, 1.442695
    %v4394 = vpow.pop %v4393
    %v4395 = vmul.f32 %v4371, 1.442695
    %v4396 = vpow.pop %v4395
    %v4397 = vmul.f32 %v4372, 1.442695
    %v4398 = vpow.pop %v4397
    %v4399 = vmul.f32 %v4373, 1.442695
    %v4400 = vpow.pop %v4399
    %v4401 = vmul.f32 %v4374, 1.442695
    %v4402 = vpow.pop %v4401
    %v4403 = vadd.f32 %v4376, 1.0
    %v4404 = vadd.f32 %v4378, 1.0
    %v4405 = vadd.f32 %v4380, 1.0
    %v4406 = vadd.f32 %v4382, 1.0
    %v4407 = vadd.f32 %v4384, 1.0
    %v4408 = vadd.f32 %v4386, 1.0
    %v4409 = vadd.f32 %v4388, 1.0
    %v4410 = vadd.f32 %v4390, 1.0
    %v4411 = vadd.f32 %v4392, 1.0
    %v4412 = vadd.f32 %v4394, 1.0
    %v4413 = vadd.f32 %v4396, 1.0
    %v4414 = vadd.f32 %v4398, 1.0
    %v4415 = vadd.f32 %v4400, 1.0
    %v4416 = vadd.f32 %v4402, 1.0
    %v4417 = vrcp.pop %v4403
    %v4418 = vmul.f32 1.0, %v4417
    %v4419 = vrcp.pop %v4404
    %v4420 = vmul.f32 1.0, %v4419
    %v4421 = vrcp.pop %v4405
    %v4422 = vmul.f32 1.0, %v4421
    %v4423 = vrcp.pop %v4406
    %v4424 = vmul.f32 1.0, %v4423
    %v4425 = vrcp.pop %v4407
    %v4426 = vmul.f32 1.0, %v4425
    %v4427 = vrcp.pop %v4408
    %v4428 = vmul.f32 1.0, %v4427
    %v4429 = vrcp.pop %v4409
    %v4430 = vmul.f32 1.0, %v4429
    %v4431 = vrcp.pop %v4410
    %v4432 = vmul.f32 1.0, %v4431
    %v4433 = vrcp.pop %v4411
    %v4434 = vmul.f32 1.0, %v4433
    %v4435 = vrcp.pop %v4412
    %v4436 = vmul.f32 1.0, %v4435
    %v4437 = vrcp.pop %v4413
    %v4438 = vmul.f32 1.0, %v4437
    %v4439 = vrcp.pop %v4414
    %v4440 = vmul.f32 1.0, %v4439
    %v4441 = vrcp.pop %v4415
    %v4442 = vmul.f32 1.0, %v4441
    %v4443 = vrcp.pop %v4416
    %v4444 = vmul.f32 1.0, %v4443
    %v4445 = vpack.c.bf16 %v4432, %v4418
    %v4446 = vpack.c.bf16 %v4434, %v4420
    %v4447 = vpack.c.bf16 %v4436, %v4422
    %v4448 = vpack.c.bf16 %v4438, %v4424
    %v4449 = vpack.c.bf16 %v4440, %v4426
    %v4450 = vpack.c.bf16 %v4442, %v4428
    %v4451 = vpack.c.bf16 %v4444, %v4430
    %v4459 = vunpack.c.l.b16 %v4445
    %v4460 = vunpack.c.l.b16 %v4446
    %v4461 = vunpack.c.l.b16 %v4447
    %v4462 = vunpack.c.l.b16 %v4448
    %v4463 = vunpack.c.l.b16 %v4449
    %v4464 = vunpack.c.l.b16 %v4450
    %v4465 = vunpack.c.l.b16 %v4451
    %v4466 = vunpack.c.h.b16 %v4445
    %v4467 = vunpack.c.h.b16 %v4446
    %v4468 = vunpack.c.h.b16 %v4447
    %v4469 = vunpack.c.h.b16 %v4448
    %v4470 = vunpack.c.h.b16 %v4449
    %v4471 = vunpack.c.h.b16 %v4450
    %v4472 = vunpack.c.h.b16 %v4451
    %v4473 = vpack.c.b16 %v4460, %v4459
    %v4474 = vpack.c.b16 %v4462, %v4461
    %v4475 = vpack.c.b16 %v4464, %v4463
    %v4476 = vpack.c.b16 %v4465, %v4465
    %v4477 = vpack.c.b16 %v4467, %v4466
    %v4478 = vpack.c.b16 %v4469, %v4468
    %v4479 = vpack.c.b16 %v4471, %v4470
    %v4480 = vpack.c.b16 %v4472, %v4472
    %4489 = vst [vmem:[#allocation14] sm:$0xff] %v4473
    %4490 = vst [vmem:[#allocation14 + $0x8] sm:$0xff] %v4474
    %4491 = vst [vmem:[#allocation14 + $0x10] sm:$0xff] %v4475
    %4492 = vst [vmem:[#allocation14 + $0x18] sm:$0xf] %v4476
    %4493 = vst [vmem:[#allocation14 + $0x1c] sm:$0xff] %v4477
    %4494 = vst [vmem:[#allocation14 + $0x24] sm:$0xff] %v4478
    %4495 = vst [vmem:[#allocation14 + $0x2c] sm:$0xff] %v4479
    %4496 = vst [vmem:[#allocation14 + $0x34] sm:$0xf] %v4480
    // Predicated region
    $region70: #{tpu_custom_call.1} parent=1 // pred_check
      _
    $region71: #{tpu_custom_call.1} parent=1 // pred_check_branch
      %4498 = sbr.rel (0) target = $region73
    $region72: #{tpu_custom_call.1} parent=1 // pred_region
      %s4500 = ssub.s32 896, 896
      %4501 = vsyncadd [#allocation4], %s4500
      %s4502 = sshll.u32 [#allocation14], 4
      %s4503 = int_to_ptr.vmem [resolvable:$true] %s4502
      %4508 = dma.vmem_to_hbm [thread:$0]  %s4503, 896, %s10, [#allocation4], 448, 448, 28
    $region73: #{tpu_custom_call.1} parent=1 // pred_fallthru
      _
    // Predicated region
    $region74: #{tpu_custom_call.1} parent=1 // pred_check
      _
    $region75: #{tpu_custom_call.1} parent=1 // pred_check_branch
      %4510 = sbr.rel (0) target = $region77
    $region76: #{tpu_custom_call.1} parent=1 // pred_region
      %s4512 = ssub.s32 256, 256
      %4513 = vsyncadd [#allocation16], %s4512
      %s4514 = sshll.u32 [#allocation15], 4
      %s4515 = int_to_ptr.vmem [resolvable:$true] %s4514
      %4520 = dma.vmem_to_hbm [thread:$0]  %s4515, 256, %s11, [#allocation16], 128, 128, 8
    $region77: #{tpu_custom_call.1} parent=1 // pred_fallthru
      _
    // Predicated region
    $region78: #{tpu_custom_call.1} parent=1 // pred_check
      _
    $region79: #{tpu_custom_call.1} parent=1 // pred_check_branch
      %4522 = sbr.rel (0) target = $region81
    $region80: #{tpu_custom_call.1} parent=1 // pred_region
      %4523 = dma.done [#allocation4], 896
    $region81: #{tpu_custom_call.1} parent=1 // pred_fallthru
      _
    // Predicated region
    $region82: #{tpu_custom_call.1} parent=1 // pred_check
      _
    $region83: #{tpu_custom_call.1} parent=1 // pred_check_branch
      %4525 = sbr.rel (0) target = $region85
    $region84: #{tpu_custom_call.1} parent=1 // pred_region
      %4526 = dma.done [#allocation16], 256
    $region85: #{tpu_custom_call.1} parent=1 // pred_fallthru
      _
    %4527 = vsyncpa [#allocation3], 1
    %4528 = vsyncpa [#allocation6], 1
    %4529 = vsyncpa [#allocation9], 1
    %4530 = vsyncpa [#allocation12], 1
    %4531 = vsyncpa [#allocation4], 1
    %4532 = vsyncpa [#allocation16], 1

</llo_original>
